<compile_context>
chip_gen: v7x
topology: tpu7x:2x2x1
jax: 0.10.0
libtpu: 0.0.40
codegen_flags: <defaults>
</compile_context>

<pallas_src>
import functools

import jax
import jax.numpy as jnp
from jax import lax
from jax.experimental import pallas as pl
from jax.experimental.pallas import tpu as pltpu

LANE = 128  # channel blocks padded to one vreg width


# ----------------------------------------------------------------------------
# helpers
# ----------------------------------------------------------------------------
def _round_up(x, m):
    return (x + m - 1) // m * m


def _conv_out(size, k, s):
    return (size - k) // s + 1


def conv_out_hw(h, w):
    h, w = _conv_out(h, 8, 4), _conv_out(w, 8, 4)
    h, w = _conv_out(h, 4, 2), _conv_out(w, 4, 2)
    h, w = _conv_out(h, 3, 1), _conv_out(w, 3, 1)
    return h, w


def _extract_patches(x_nhwc, k, s):
    """[B, H, W, C] -> [B, OH*OW, K*K*C] with (i, j, c) patch ordering."""
    B, H, W, C = x_nhwc.shape
    oh, ow = _conv_out(H, k, s), _conv_out(W, k, s)
    cols = []
    for i in range(k):
        for j in range(k):
            cols.append(x_nhwc[:, i:i + s * (oh - 1) + 1:s,
                               j:j + s * (ow - 1) + 1:s, :])
    col = jnp.concatenate(cols, axis=-1)                 # [B, OH, OW, K*K*C]
    return col.reshape(B, oh * ow, k * k * C), oh, ow


# ----------------------------------------------------------------------------
# fused forward kernel (one grid step == one block of Bt samples)
# ----------------------------------------------------------------------------
def _dqn_fused_kernel(col1_ref, w1_ref, b1_ref, w2_ref, b2_ref, w3_ref, b3_ref,
                      fw1_ref, fb1_ref, fw2_ref, fb2_ref, out_ref,
                      a1_ref, im2_ref, a2_ref, im3_ref, flat_ref, *, dims):
    (bt, ow1, oh2, ow2, oh3, ow3) = dims
    k2, s2, k3 = 4, 2, 3
    r3 = oh3 * ow3
    f32, bf16 = jnp.float32, jnp.bfloat16

    def sample_body(s, carry):
        # ---- conv1: one GEMM on pre-extracted input patches -----------------
        a1 = jnp.dot(col1_ref[s], w1_ref[...], preferred_element_type=f32)
        a1_ref[...] = jnp.maximum(a1 + b1_ref[...], 0.0)      # [R1, 128] f32

        # ---- conv2: in-VMEM im2col (per output row), then one GEMM ---------
        for oh in range(oh2):
            pieces = []
            for i in range(k2):
                base = (s2 * oh + i) * ow1
                for j in range(k2):
                    # stride-2 sublane read, lane-aligned 128-wide piece
                    pieces.append(a1_ref[pl.ds(base + j, ow2, s2), :])
            im2_ref[oh * ow2:(oh + 1) * ow2, :] = jnp.concatenate(
                pieces, axis=-1)                               # [OW2, 16*128]
        a2 = jnp.dot(im2_ref[...].astype(bf16), w2_ref[...],
                     preferred_element_type=f32)
        a2_ref[...] = jnp.maximum(a2 + b2_ref[...], 0.0)       # [R2, 128] f32

        # ---- conv3: in-VMEM im2col (contiguous reads), then one GEMM -------
        for oh in range(oh3):
            pieces = []
            for i in range(k3):
                base = (oh + i) * ow2
                for j in range(k3):
                    pieces.append(a2_ref[pl.ds(base + j, ow3), :])
            im3_ref[oh * ow3:(oh + 1) * ow3, :] = jnp.concatenate(
                pieces, axis=-1)                               # [OW3, 9*128]
        c3 = jnp.dot(im3_ref[...].astype(bf16), w3_ref[...],
                     preferred_element_type=f32)
        c3 = jnp.maximum(c3 + b3_ref[...], 0.0)                # [R3, 128] f32

        # ---- flatten into one lane-dense row for the batched fc1 -----------
        flat_row = jnp.concatenate(
            [c3[p:p + 1, :] for p in range(r3)], axis=-1)      # [1, R3*128]
        flat_ref[pl.ds(s, 1), :] = flat_row
        return carry

    lax.fori_loop(0, bt, sample_body, 0)

    # ---- fc1 / fc2: batched over the whole block (M = Bt) -------------------
    hid = jnp.dot(flat_ref[...].astype(bf16), fw1_ref[...],
                  preferred_element_type=f32) + fb1_ref[...]
    hid = jnp.maximum(hid, 0.0).astype(bf16)                   # [Bt, 512]
    out = jnp.dot(hid, fw2_ref[...], preferred_element_type=f32) + fb2_ref[...]
    out_ref[...] = out.astype(out_ref.dtype)                   # [Bt, 128]


# ----------------------------------------------------------------------------
# parameter init (PyTorch-equivalent init, converted to kernel-ready layouts)
# ----------------------------------------------------------------------------
def init_params(key, n_in, n_out):
    """Returns (kernel_params, torch_params)."""
    c, h, w = n_in
    oh3, ow3 = conv_out_hw(h, w)
    p3 = oh3 * ow3
    conv_out_size = 64 * p3

    keys = jax.random.split(key, 8)

    def uniform(k, shape, bound):
        return jax.random.uniform(k, shape, jnp.float32, -bound, bound)

    def conv_init(kw_, kb_, cout, cin, ksz):
        fan_in = cin * ksz * ksz
        bound = 1.0 / float(fan_in) ** 0.5               # PyTorch Conv2d default
        return (uniform(kw_, (cout, cin, ksz, ksz), bound),
                uniform(kb_, (cout,), bound))

    def linear_init(kw_, fan_in, fan_out):
        bound = (6.0 / float(fan_in + fan_out)) ** 0.5   # xavier_uniform_
        w_ = uniform(kw_, (fan_out, fan_in), bound)      # PyTorch [out, in]
        b_ = jnp.full((fan_out,), 0.01, jnp.float32)     # bias.data.fill_(0.01)
        return w_, b_

    w1, b1 = conv_init(keys[0], keys[1], 32, c, 8)
    w2, b2 = conv_init(keys[2], keys[3], 64, 32, 4)
    w3, b3 = conv_init(keys[4], keys[5], 64, 64, 3)
    fw1, fb1 = linear_init(keys[6], conv_out_size, 512)
    fw2, fb2 = linear_init(keys[7], 512, n_out)

    torch_params = dict(w1=w1, b1=b1, w2=w2, b2=b2, w3=w3, b3=b3,
                        fw1=fw1, fb1=fb1, fw2=fw2, fb2=fb2)

    bf16 = jnp.bfloat16
    n_out_pad = _round_up(n_out, LANE)

    def conv_taps_padded(wc, cin_pad, cout_pad):
        # [Cout, Cin, K, K] -> [K*K*cin_pad, cout_pad] with (i, j, c) row order
        cout, cin, kh, kw_ = wc.shape
        taps = wc.transpose(2, 3, 1, 0)                  # [kh, kw, cin, cout]
        padded = jnp.zeros((kh, kw_, cin_pad, cout_pad), jnp.float32)
        padded = padded.at[:, :, :cin, :cout].set(taps)
        return padded.reshape(kh * kw_ * cin_pad, cout_pad)

    def pad_bias(b, width):
        return jnp.zeros((1, width), jnp.float32).at[0, :b.shape[0]].set(b)

    # conv1 consumed as one GEMM on raw-channel patches (K = 64*c, no K pad);
    # output channels padded to 128 so downstream pieces stay lane-aligned.
    w1m = jnp.zeros((64 * c, LANE), jnp.float32).at[:, :32].set(
        w1.transpose(2, 3, 1, 0).reshape(64 * c, 32))

    # fc1 weight regrouped by conv3 spatial position p (128-padded channel
    # blocks), absorbing PyTorch's NCHW flatten order: row p*128 + ch maps to
    # fw1 column ch*p3 + p.
    fw1_pos = fw1.reshape(512, 64, p3).transpose(2, 1, 0)       # [p3, 64, 512]
    fw1r = jnp.zeros((p3, LANE, 512), jnp.float32).at[:, :64, :].set(fw1_pos)
    fw1r = fw1r.reshape(p3 * LANE, 512)

    fw2r = jnp.zeros((512, n_out_pad), jnp.float32).at[:, :n_out].set(fw2.T)
    fb2p = jnp.zeros((1, n_out_pad), jnp.float32).at[0, :n_out].set(fb2)

    kernel_params = dict(
        w1m=w1m.astype(bf16),
        b1=pad_bias(b1, LANE),
        w2m=conv_taps_padded(w2, LANE, LANE).astype(bf16),
        b2=pad_bias(b2, LANE),
        w3m=conv_taps_padded(w3, LANE, LANE).astype(bf16),
        b3=pad_bias(b3, LANE),
        fw1r=fw1r.astype(bf16),
        fb1=fb1.reshape(1, -1),
        fw2r=fw2r.astype(bf16),
        fb2=fb2p,
    )
    return kernel_params, torch_params


# ----------------------------------------------------------------------------
# block-size selection from a conservative VMEM estimate
# ----------------------------------------------------------------------------
def _choose_bt(B, col_bytes_per_sample, weight_bytes, out_pad_bytes_per_sample,
               flat_cols, scratch_bytes, budget=40 * 2**20):
    cands = []
    if B <= 128:
        cands.append(B)                       # single block (full-dim spec)
    cands += [c for c in (128, 64, 32, 16, 8) if c < B]
    if not cands:
        cands = [B]
    est = 0
    for bt in cands:
        est = (2 * (bt * col_bytes_per_sample + bt * out_pad_bytes_per_sample
                    + weight_bytes)
               + bt * flat_cols * 4 + scratch_bytes)
        if est <= budget:
            return bt, est
    return cands[-1], est


# ----------------------------------------------------------------------------
# fused forward
# ----------------------------------------------------------------------------
@functools.partial(jax.jit, static_argnames=("n_out",))
def dqn_forward(params, x, *, n_out):
    """x: [B, C, H, W] (NCHW, like the PyTorch module). Returns [B, n_out] f32."""
    x = x.astype(jnp.float32)                            # x.type(FloatTensor)
    B = x.shape[0]

    # conv1 patch extraction on the raw input only (cheap XLA slicing).
    x_nhwc = jnp.transpose(x, (0, 2, 3, 1)).astype(jnp.bfloat16)
    col1, oh1, ow1 = _extract_patches(x_nhwc, 8, 4)

    oh2, ow2 = _conv_out(oh1, 4, 2), _conv_out(ow1, 4, 2)
    oh3, ow3 = _conv_out(oh2, 3, 1), _conv_out(ow2, 3, 1)
    r1, k1 = oh1 * ow1, col1.shape[-1]
    r2, r3 = oh2 * ow2, oh3 * ow3
    flat_cols = r3 * LANE
    n_out_pad = params["fw2r"].shape[-1]
    assert params["fw1r"].shape[0] == flat_cols, "fc1 weight / conv geometry mismatch"

    weight_keys = ("w1m", "b1", "w2m", "b2", "w3m", "b3",
                   "fw1r", "fb1", "fw2r", "fb2")
    weight_bytes = sum(int(params[k].size) * params[k].dtype.itemsize
                       for k in weight_keys)
    scratch_bytes = 4 * (r1 * LANE + r2 * 16 * LANE + r2 * LANE + r3 * 9 * LANE)

    bt, vmem_est = _choose_bt(B, r1 * k1 * 2, weight_bytes, n_out_pad * 4,
                              flat_cols, scratch_bytes)
    nb = pl.cdiv(B, bt)
    b_pad = nb * bt
    if b_pad > B:
        col1 = jnp.pad(col1, ((0, b_pad - B), (0, 0), (0, 0)))

    kernel = functools.partial(_dqn_fused_kernel,
                               dims=(bt, ow1, oh2, ow2, oh3, ow3))

    operands = (col1, params["w1m"], params["b1"], params["w2m"], params["b2"],
                params["w3m"], params["b3"], params["fw1r"], params["fb1"],
                params["fw2r"], params["fb2"])

    flops = 2 * b_pad * (r1 * k1 * LANE
                         + r2 * (16 * LANE) * LANE
                         + r3 * (9 * LANE) * LANE
                         + flat_cols * 512
                         + 512 * n_out_pad)
    bytes_accessed = sum(int(a.size) * a.dtype.itemsize for a in operands) \
        + b_pad * n_out_pad * 4

    in_specs = [
        pl.BlockSpec((bt, r1, k1), lambda b: (b, 0, 0)),          # col1
        pl.BlockSpec(params["w1m"].shape, lambda b: (0, 0)),
        pl.BlockSpec(params["b1"].shape, lambda b: (0, 0)),
        pl.BlockSpec(params["w2m"].shape, lambda b: (0, 0)),
        pl.BlockSpec(params["b2"].shape, lambda b: (0, 0)),
        pl.BlockSpec(params["w3m"].shape, lambda b: (0, 0)),
        pl.BlockSpec(params["b3"].shape, lambda b: (0, 0)),
        pl.BlockSpec(params["fw1r"].shape, lambda b: (0, 0)),
        pl.BlockSpec(params["fb1"].shape, lambda b: (0, 0)),
        pl.BlockSpec(params["fw2r"].shape, lambda b: (0, 0)),
        pl.BlockSpec(params["fb2"].shape, lambda b: (0, 0)),
    ]

    vmem_limit = int(min(max(vmem_est + 8 * 2**20, 32 * 2**20), 48 * 2**20))

    out = pl.pallas_call(
        kernel,
        out_shape=jax.ShapeDtypeStruct((b_pad, n_out_pad), jnp.float32),
        grid_spec=pltpu.PrefetchScalarGridSpec(
            num_scalar_prefetch=0,
            grid=(nb,),
            in_specs=in_specs,
            out_specs=pl.BlockSpec((bt, n_out_pad), lambda b: (b, 0)),
            scratch_shapes=[
                pltpu.VMEM((r1, LANE), jnp.float32),          # a1 (conv1 out)
                pltpu.VMEM((r2, 16 * LANE), jnp.float32),     # conv2 im2col
                pltpu.VMEM((r2, LANE), jnp.float32),          # a2 (conv2 out)
                pltpu.VMEM((r3, 9 * LANE), jnp.float32),      # conv3 im2col
                pltpu.VMEM((bt, flat_cols), jnp.float32),     # flattened conv3
            ]),
        compiler_params=pltpu.CompilerParams(
            dimension_semantics=("parallel",),
            vmem_limit_bytes=vmem_limit),
        cost_estimate=pl.CostEstimate(flops=flops, transcendentals=0,
                                      bytes_accessed=bytes_accessed),
    )(*operands)
    return out[:B, :n_out]


# ----------------------------------------------------------------------------
# pure-JAX reference (PyTorch layouts, high precision) for a sanity check
# ----------------------------------------------------------------------------
def reference_forward(tp, x):
    x = x.astype(jnp.float32)

    def conv(h, wc, bc, s):
        y = lax.conv_general_dilated(
            h, wc, window_strides=(s, s), padding="VALID",
            dimension_numbers=("NCHW", "OIHW", "NCHW"),
            precision=lax.Precision.HIGHEST)
        return jax.nn.relu(y + bc.reshape(1, -1, 1, 1))

    h = conv(x, tp["w1"], tp["b1"], 4)
    h = conv(h, tp["w2"], tp["b2"], 2)
    h = conv(h, tp["w3"], tp["b3"], 1)
    flat = h.reshape(x.shape[0], -1)
    hid = jax.nn.relu(jnp.dot(flat, tp["fw1"].T,
                              precision=lax.Precision.HIGHEST) + tp["fb1"])
    return jnp.dot(hid, tp["fw2"].T,
                   precision=lax.Precision.HIGHEST) + tp["fb2"]


if __name__ == "__main__":
    # Smallest shapes consistent with the conv stack:
    # 36 -> conv(8,4) -> 8 -> conv(4,2) -> 3 -> conv(3,1) -> 1  => conv_out = 64.
    n_in = (4, 36, 36)
    n_out = 6
    batch = 2

    key = jax.random.PRNGKey(0)
    k_param, k_x = jax.random.split(key)
    params, torch_params = init_params(k_param, n_in, n_out)
    x = jax.random.normal(k_x, (batch,) + n_in, jnp.float32)

    q = dqn_forward(params, x, n_out=n_out)
    q = jax.block_until_ready(q)
    assert q.shape == (batch, n_out), q.shape
    assert q.dtype == jnp.float32

    # Loose check vs f32 reference (kernel matmuls run in bf16 on the MXU —
    # intentional precision choice for DQN inference).
    q_ref = reference_forward(torch_params, x)
    err = float(jnp.max(jnp.abs(q - q_ref)))
    tol = 1e-3 + 5e-2 * float(jnp.max(jnp.abs(q_ref)))
    assert err <= tol, f"mismatch vs reference: max abs err {err} (tol {tol})"

    print("KERNEL_OK")
</pallas_src>

<mosaic_0001>
module attributes {stable_mosaic.version = 11 : i64} {
  func.func @_dqn_fused_kernel(%arg0: i32, %arg1: memref<2x64x256xbf16, #tpu.memory_space<vmem>>, %arg2: memref<256x128xbf16, #tpu.memory_space<vmem>>, %arg3: memref<1x128xf32, #tpu.memory_space<vmem>>, %arg4: memref<2048x128xbf16, #tpu.memory_space<vmem>>, %arg5: memref<1x128xf32, #tpu.memory_space<vmem>>, %arg6: memref<1152x128xbf16, #tpu.memory_space<vmem>>, %arg7: memref<1x128xf32, #tpu.memory_space<vmem>>, %arg8: memref<128x512xbf16, #tpu.memory_space<vmem>>, %arg9: memref<1x512xf32, #tpu.memory_space<vmem>>, %arg10: memref<512x128xbf16, #tpu.memory_space<vmem>>, %arg11: memref<1x128xf32, #tpu.memory_space<vmem>>, %arg12: memref<2x128xf32, #tpu.memory_space<vmem>>, %arg13: memref<64x128xf32, #tpu.memory_space<vmem>>, %arg14: memref<9x2048xf32, #tpu.memory_space<vmem>>, %arg15: memref<9x128xf32, #tpu.memory_space<vmem>>, %arg16: memref<1x1152xf32, #tpu.memory_space<vmem>>, %arg17: memref<2x128xf32, #tpu.memory_space<vmem>>) attributes {dimension_semantics = [#tpu.dimension_semantics<parallel>], iteration_bounds = array<i64: 1>, scalar_prefetch = 0 : i64, scratch_operands = 5 : i64, tpu.core_type = #tpu.core_type<tc>, window_params = [{transform_indices = @transform_0, window_bounds = array<i64: 2, 64, 256>}, {pipeline_mode = #tpu.pipeline_mode<synchronous>, transform_indices = @transform_1, window_bounds = array<i64: 256, 128>}, {pipeline_mode = #tpu.pipeline_mode<synchronous>, transform_indices = @transform_2, window_bounds = array<i64: 1, 128>}, {pipeline_mode = #tpu.pipeline_mode<synchronous>, transform_indices = @transform_3, window_bounds = array<i64: 2048, 128>}, {pipeline_mode = #tpu.pipeline_mode<synchronous>, transform_indices = @transform_4, window_bounds = array<i64: 1, 128>}, {pipeline_mode = #tpu.pipeline_mode<synchronous>, transform_indices = @transform_5, window_bounds = array<i64: 1152, 128>}, {pipeline_mode = #tpu.pipeline_mode<synchronous>, transform_indices = @transform_6, window_bounds = array<i64: 1, 128>}, {pipeline_mode = #tpu.pipeline_mode<synchronous>, transform_indices = @transform_7, window_bounds = array<i64: 128, 512>}, {pipeline_mode = #tpu.pipeline_mode<synchronous>, transform_indices = @transform_8, window_bounds = array<i64: 1, 512>}, {pipeline_mode = #tpu.pipeline_mode<synchronous>, transform_indices = @transform_9, window_bounds = array<i64: 512, 128>}, {pipeline_mode = #tpu.pipeline_mode<synchronous>, transform_indices = @transform_10, window_bounds = array<i64: 1, 128>}, {transform_indices = @transform_11, window_bounds = array<i64: 2, 128>}]} {
    %c0_i32 = arith.constant 0 : i32
    %c2_i32 = arith.constant 2 : i32
    %0 = arith.addi %c0_i32, %c2_i32 : i32
    %c1_i32 = arith.constant 1 : i32
    scf.for %arg18 = %c0_i32 to %0 step %c1_i32  : i32 {
      %17 = arith.index_cast %arg18 : i32 to index
      %c0_14 = arith.constant 0 : index
      %c0_15 = arith.constant 0 : index
      %18 = vector.load %arg1[%17, %c0_14, %c0_15] : memref<2x64x256xbf16, #tpu.memory_space<vmem>>, vector<1x64x256xbf16>
      %19 = vector.shape_cast %18 : vector<1x64x256xbf16> to vector<64x256xbf16>
      %c0_16 = arith.constant 0 : index
      %c0_17 = arith.constant 0 : index
      %20 = vector.load %arg2[%c0_16, %c0_17] : memref<256x128xbf16, #tpu.memory_space<vmem>>, vector<256x128xbf16>
      %cst_18 = arith.constant dense<0.000000e+00> : vector<64x128xf32>
      %21 = tpu.matmul %19, %20, %cst_18 {dimension_numbers = #tpu.dot_dimension_numbers<[1], [0], [0], [1], [0, 0, 1, 1], [], []>} : vector<64x256xbf16>, vector<256x128xbf16>, vector<64x128xf32> -> vector<64x128xf32>
      %c0_19 = arith.constant 0 : index
      %c0_20 = arith.constant 0 : index
      %22 = vector.load %arg3[%c0_19, %c0_20] : memref<1x128xf32, #tpu.memory_space<vmem>>, vector<1x128xf32>
      %23 = vector.broadcast %22 : vector<1x128xf32> to vector<64x128xf32>
      %24 = arith.addf %21, %23 : vector<64x128xf32>
      %cst_21 = arith.constant 0.000000e+00 : f32
      %25 = vector.broadcast %cst_21 : f32 to vector<64x128xf32>
      %26 = arith.maximumf %24, %25 : vector<64x128xf32>
      %c0_22 = arith.constant 0 : index
      %c0_23 = arith.constant 0 : index
      %27 = vector.load %arg13[%c0_22, %c0_23] : memref<64x128xf32, #tpu.memory_space<vmem>>, vector<64x128xf32>
      tpu.vector_store %arg13[%c0_22, %c0_23], %26 {strides = array<i32>} : memref<64x128xf32, #tpu.memory_space<vmem>>, vector<64x128xf32>,
      %c0_24 = arith.constant 0 : index
      %c0_25 = arith.constant 0 : index
      %28 = tpu.strided_load %arg13[%c0_24, %c0_25] {strides = array<i32: 2, 1>} : memref<64x128xf32, #tpu.memory_space<vmem>>, vector<3x128xf32>
      %c1 = arith.constant 1 : index
      %c0_26 = arith.constant 0 : index
      %29 = tpu.strided_load %arg13[%c1, %c0_26] {strides = array<i32: 2, 1>} : memref<64x128xf32, #tpu.memory_space<vmem>>, vector<3x128xf32>
      %c2 = arith.constant 2 : index
      %c0_27 = arith.constant 0 : index
      %30 = tpu.strided_load %arg13[%c2, %c0_27] {strides = array<i32: 2, 1>} : memref<64x128xf32, #tpu.memory_space<vmem>>, vector<3x128xf32>
      %c3 = arith.constant 3 : index
      %c0_28 = arith.constant 0 : index
      %31 = tpu.strided_load %arg13[%c3, %c0_28] {strides = array<i32: 2, 1>} : memref<64x128xf32, #tpu.memory_space<vmem>>, vector<3x128xf32>
      %c8 = arith.constant 8 : index
      %c0_29 = arith.constant 0 : index
      %32 = tpu.strided_load %arg13[%c8, %c0_29] {strides = array<i32: 2, 1>} : memref<64x128xf32, #tpu.memory_space<vmem>>, vector<3x128xf32>
      %c9 = arith.constant 9 : index
      %c0_30 = arith.constant 0 : index
      %33 = tpu.strided_load %arg13[%c9, %c0_30] {strides = array<i32: 2, 1>} : memref<64x128xf32, #tpu.memory_space<vmem>>, vector<3x128xf32>
      %c10 = arith.constant 10 : index
      %c0_31 = arith.constant 0 : index
      %34 = tpu.strided_load %arg13[%c10, %c0_31] {strides = array<i32: 2, 1>} : memref<64x128xf32, #tpu.memory_space<vmem>>, vector<3x128xf32>
      %c11 = arith.constant 11 : index
      %c0_32 = arith.constant 0 : index
      %35 = tpu.strided_load %arg13[%c11, %c0_32] {strides = array<i32: 2, 1>} : memref<64x128xf32, #tpu.memory_space<vmem>>, vector<3x128xf32>
      %c16 = arith.constant 16 : index
      %c0_33 = arith.constant 0 : index
      %36 = tpu.strided_load %arg13[%c16, %c0_33] {strides = array<i32: 2, 1>} : memref<64x128xf32, #tpu.memory_space<vmem>>, vector<3x128xf32>
      %c17 = arith.constant 17 : index
      %c0_34 = arith.constant 0 : index
      %37 = tpu.strided_load %arg13[%c17, %c0_34] {strides = array<i32: 2, 1>} : memref<64x128xf32, #tpu.memory_space<vmem>>, vector<3x128xf32>
      %c18 = arith.constant 18 : index
      %c0_35 = arith.constant 0 : index
      %38 = tpu.strided_load %arg13[%c18, %c0_35] {strides = array<i32: 2, 1>} : memref<64x128xf32, #tpu.memory_space<vmem>>, vector<3x128xf32>
      %c19 = arith.constant 19 : index
      %c0_36 = arith.constant 0 : index
      %39 = tpu.strided_load %arg13[%c19, %c0_36] {strides = array<i32: 2, 1>} : memref<64x128xf32, #tpu.memory_space<vmem>>, vector<3x128xf32>
      %c24 = arith.constant 24 : index
      %c0_37 = arith.constant 0 : index
      %40 = tpu.strided_load %arg13[%c24, %c0_37] {strides = array<i32: 2, 1>} : memref<64x128xf32, #tpu.memory_space<vmem>>, vector<3x128xf32>
      %c25 = arith.constant 25 : index
      %c0_38 = arith.constant 0 : index
      %41 = tpu.strided_load %arg13[%c25, %c0_38] {strides = array<i32: 2, 1>} : memref<64x128xf32, #tpu.memory_space<vmem>>, vector<3x128xf32>
      %c26 = arith.constant 26 : index
      %c0_39 = arith.constant 0 : index
      %42 = tpu.strided_load %arg13[%c26, %c0_39] {strides = array<i32: 2, 1>} : memref<64x128xf32, #tpu.memory_space<vmem>>, vector<3x128xf32>
      %c27 = arith.constant 27 : index
      %c0_40 = arith.constant 0 : index
      %43 = tpu.strided_load %arg13[%c27, %c0_40] {strides = array<i32: 2, 1>} : memref<64x128xf32, #tpu.memory_space<vmem>>, vector<3x128xf32>
      %44 = tpu.concatenate %28, %29, %30, %31, %32, %33, %34, %35, %36, %37, %38, %39, %40, %41, %42, %43 in 1 : vector<3x128xf32>, vector<3x128xf32>, vector<3x128xf32>, vector<3x128xf32>, vector<3x128xf32>, vector<3x128xf32>, vector<3x128xf32>, vector<3x128xf32>, vector<3x128xf32>, vector<3x128xf32>, vector<3x128xf32>, vector<3x128xf32>, vector<3x128xf32>, vector<3x128xf32>, vector<3x128xf32>, vector<3x128xf32> -> vector<3x2048xf32>
      %c0_41 = arith.constant 0 : index
      %c0_42 = arith.constant 0 : index
      %45 = vector.load %arg14[%c0_41, %c0_42] : memref<9x2048xf32, #tpu.memory_space<vmem>>, vector<3x2048xf32>
      tpu.vector_store %arg14[%c0_41, %c0_42], %44 {strides = array<i32>} : memref<9x2048xf32, #tpu.memory_space<vmem>>, vector<3x2048xf32>,
      %c16_43 = arith.constant 16 : index
      %c0_44 = arith.constant 0 : index
      %46 = tpu.strided_load %arg13[%c16_43, %c0_44] {strides = array<i32: 2, 1>} : memref<64x128xf32, #tpu.memory_space<vmem>>, vector<3x128xf32>
      %c17_45 = arith.constant 17 : index
      %c0_46 = arith.constant 0 : index
      %47 = tpu.strided_load %arg13[%c17_45, %c0_46] {strides = array<i32: 2, 1>} : memref<64x128xf32, #tpu.memory_space<vmem>>, vector<3x128xf32>
      %c18_47 = arith.constant 18 : index
      %c0_48 = arith.constant 0 : index
      %48 = tpu.strided_load %arg13[%c18_47, %c0_48] {strides = array<i32: 2, 1>} : memref<64x128xf32, #tpu.memory_space<vmem>>, vector<3x128xf32>
      %c19_49 = arith.constant 19 : index
      %c0_50 = arith.constant 0 : index
      %49 = tpu.strided_load %arg13[%c19_49, %c0_50] {strides = array<i32: 2, 1>} : memref<64x128xf32, #tpu.memory_space<vmem>>, vector<3x128xf32>
      %c24_51 = arith.constant 24 : index
      %c0_52 = arith.constant 0 : index
      %50 = tpu.strided_load %arg13[%c24_51, %c0_52] {strides = array<i32: 2, 1>} : memref<64x128xf32, #tpu.memory_space<vmem>>, vector<3x128xf32>
      %c25_53 = arith.constant 25 : index
      %c0_54 = arith.constant 0 : index
      %51 = tpu.strided_load %arg13[%c25_53, %c0_54] {strides = array<i32: 2, 1>} : memref<64x128xf32, #tpu.memory_space<vmem>>, vector<3x128xf32>
      %c26_55 = arith.constant 26 : index
      %c0_56 = arith.constant 0 : index
      %52 = tpu.strided_load %arg13[%c26_55, %c0_56] {strides = array<i32: 2, 1>} : memref<64x128xf32, #tpu.memory_space<vmem>>, vector<3x128xf32>
      %c27_57 = arith.constant 27 : index
      %c0_58 = arith.constant 0 : index
      %53 = tpu.strided_load %arg13[%c27_57, %c0_58] {strides = array<i32: 2, 1>} : memref<64x128xf32, #tpu.memory_space<vmem>>, vector<3x128xf32>
      %c32 = arith.constant 32 : index
      %c0_59 = arith.constant 0 : index
      %54 = tpu.strided_load %arg13[%c32, %c0_59] {strides = array<i32: 2, 1>} : memref<64x128xf32, #tpu.memory_space<vmem>>, vector<3x128xf32>
      %c33 = arith.constant 33 : index
      %c0_60 = arith.constant 0 : index
      %55 = tpu.strided_load %arg13[%c33, %c0_60] {strides = array<i32: 2, 1>} : memref<64x128xf32, #tpu.memory_space<vmem>>, vector<3x128xf32>
      %c34 = arith.constant 34 : index
      %c0_61 = arith.constant 0 : index
      %56 = tpu.strided_load %arg13[%c34, %c0_61] {strides = array<i32: 2, 1>} : memref<64x128xf32, #tpu.memory_space<vmem>>, vector<3x128xf32>
      %c35 = arith.constant 35 : index
      %c0_62 = arith.constant 0 : index
      %57 = tpu.strided_load %arg13[%c35, %c0_62] {strides = array<i32: 2, 1>} : memref<64x128xf32, #tpu.memory_space<vmem>>, vector<3x128xf32>
      %c40 = arith.constant 40 : index
      %c0_63 = arith.constant 0 : index
      %58 = tpu.strided_load %arg13[%c40, %c0_63] {strides = array<i32: 2, 1>} : memref<64x128xf32, #tpu.memory_space<vmem>>, vector<3x128xf32>
      %c41 = arith.constant 41 : index
      %c0_64 = arith.constant 0 : index
      %59 = tpu.strided_load %arg13[%c41, %c0_64] {strides = array<i32: 2, 1>} : memref<64x128xf32, #tpu.memory_space<vmem>>, vector<3x128xf32>
      %c42 = arith.constant 42 : index
      %c0_65 = arith.constant 0 : index
      %60 = tpu.strided_load %arg13[%c42, %c0_65] {strides = array<i32: 2, 1>} : memref<64x128xf32, #tpu.memory_space<vmem>>, vector<3x128xf32>
      %c43 = arith.constant 43 : index
      %c0_66 = arith.constant 0 : index
      %61 = tpu.strided_load %arg13[%c43, %c0_66] {strides = array<i32: 2, 1>} : memref<64x128xf32, #tpu.memory_space<vmem>>, vector<3x128xf32>
      %62 = tpu.concatenate %46, %47, %48, %49, %50, %51, %52, %53, %54, %55, %56, %57, %58, %59, %60, %61 in 1 : vector<3x128xf32>, vector<3x128xf32>, vector<3x128xf32>, vector<3x128xf32>, vector<3x128xf32>, vector<3x128xf32>, vector<3x128xf32>, vector<3x128xf32>, vector<3x128xf32>, vector<3x128xf32>, vector<3x128xf32>, vector<3x128xf32>, vector<3x128xf32>, vector<3x128xf32>, vector<3x128xf32>, vector<3x128xf32> -> vector<3x2048xf32>
      %c3_67 = arith.constant 3 : index
      %c0_68 = arith.constant 0 : index
      %63 = vector.load %arg14[%c3_67, %c0_68] : memref<9x2048xf32, #tpu.memory_space<vmem>>, vector<3x2048xf32>
      tpu.vector_store %arg14[%c3_67, %c0_68], %62 {strides = array<i32>} : memref<9x2048xf32, #tpu.memory_space<vmem>>, vector<3x2048xf32>,
      %c32_69 = arith.constant 32 : index
      %c0_70 = arith.constant 0 : index
      %64 = tpu.strided_load %arg13[%c32_69, %c0_70] {strides = array<i32: 2, 1>} : memref<64x128xf32, #tpu.memory_space<vmem>>, vector<3x128xf32>
      %c33_71 = arith.constant 33 : index
      %c0_72 = arith.constant 0 : index
      %65 = tpu.strided_load %arg13[%c33_71, %c0_72] {strides = array<i32: 2, 1>} : memref<64x128xf32, #tpu.memory_space<vmem>>, vector<3x128xf32>
      %c34_73 = arith.constant 34 : index
      %c0_74 = arith.constant 0 : index
      %66 = tpu.strided_load %arg13[%c34_73, %c0_74] {strides = array<i32: 2, 1>} : memref<64x128xf32, #tpu.memory_space<vmem>>, vector<3x128xf32>
      %c35_75 = arith.constant 35 : index
      %c0_76 = arith.constant 0 : index
      %67 = tpu.strided_load %arg13[%c35_75, %c0_76] {strides = array<i32: 2, 1>} : memref<64x128xf32, #tpu.memory_space<vmem>>, vector<3x128xf32>
      %c40_77 = arith.constant 40 : index
      %c0_78 = arith.constant 0 : index
      %68 = tpu.strided_load %arg13[%c40_77, %c0_78] {strides = array<i32: 2, 1>} : memref<64x128xf32, #tpu.memory_space<vmem>>, vector<3x128xf32>
      %c41_79 = arith.constant 41 : index
      %c0_80 = arith.constant 0 : index
      %69 = tpu.strided_load %arg13[%c41_79, %c0_80] {strides = array<i32: 2, 1>} : memref<64x128xf32, #tpu.memory_space<vmem>>, vector<3x128xf32>
      %c42_81 = arith.constant 42 : index
      %c0_82 = arith.constant 0 : index
      %70 = tpu.strided_load %arg13[%c42_81, %c0_82] {strides = array<i32: 2, 1>} : memref<64x128xf32, #tpu.memory_space<vmem>>, vector<3x128xf32>
      %c43_83 = arith.constant 43 : index
      %c0_84 = arith.constant 0 : index
      %71 = tpu.strided_load %arg13[%c43_83, %c0_84] {strides = array<i32: 2, 1>} : memref<64x128xf32, #tpu.memory_space<vmem>>, vector<3x128xf32>
      %c48 = arith.constant 48 : index
      %c0_85 = arith.constant 0 : index
      %72 = tpu.strided_load %arg13[%c48, %c0_85] {strides = array<i32: 2, 1>} : memref<64x128xf32, #tpu.memory_space<vmem>>, vector<3x128xf32>
      %c49 = arith.constant 49 : index
      %c0_86 = arith.constant 0 : index
      %73 = tpu.strided_load %arg13[%c49, %c0_86] {strides = array<i32: 2, 1>} : memref<64x128xf32, #tpu.memory_space<vmem>>, vector<3x128xf32>
      %c50 = arith.constant 50 : index
      %c0_87 = arith.constant 0 : index
      %74 = tpu.strided_load %arg13[%c50, %c0_87] {strides = array<i32: 2, 1>} : memref<64x128xf32, #tpu.memory_space<vmem>>, vector<3x128xf32>
      %c51 = arith.constant 51 : index
      %c0_88 = arith.constant 0 : index
      %75 = tpu.strided_load %arg13[%c51, %c0_88] {strides = array<i32: 2, 1>} : memref<64x128xf32, #tpu.memory_space<vmem>>, vector<3x128xf32>
      %c56 = arith.constant 56 : index
      %c0_89 = arith.constant 0 : index
      %76 = tpu.strided_load %arg13[%c56, %c0_89] {strides = array<i32: 2, 1>} : memref<64x128xf32, #tpu.memory_space<vmem>>, vector<3x128xf32>
      %c57 = arith.constant 57 : index
      %c0_90 = arith.constant 0 : index
      %77 = tpu.strided_load %arg13[%c57, %c0_90] {strides = array<i32: 2, 1>} : memref<64x128xf32, #tpu.memory_space<vmem>>, vector<3x128xf32>
      %c58 = arith.constant 58 : index
      %c0_91 = arith.constant 0 : index
      %78 = tpu.strided_load %arg13[%c58, %c0_91] {strides = array<i32: 2, 1>} : memref<64x128xf32, #tpu.memory_space<vmem>>, vector<3x128xf32>
      %c59 = arith.constant 59 : index
      %c0_92 = arith.constant 0 : index
      %79 = tpu.strided_load %arg13[%c59, %c0_92] {strides = array<i32: 2, 1>} : memref<64x128xf32, #tpu.memory_space<vmem>>, vector<3x128xf32>
      %80 = tpu.concatenate %64, %65, %66, %67, %68, %69, %70, %71, %72, %73, %74, %75, %76, %77, %78, %79 in 1 : vector<3x128xf32>, vector<3x128xf32>, vector<3x128xf32>, vector<3x128xf32>, vector<3x128xf32>, vector<3x128xf32>, vector<3x128xf32>, vector<3x128xf32>, vector<3x128xf32>, vector<3x128xf32>, vector<3x128xf32>, vector<3x128xf32>, vector<3x128xf32>, vector<3x128xf32>, vector<3x128xf32>, vector<3x128xf32> -> vector<3x2048xf32>
      %c6 = arith.constant 6 : index
      %c0_93 = arith.constant 0 : index
      %81 = vector.load %arg14[%c6, %c0_93] : memref<9x2048xf32, #tpu.memory_space<vmem>>, vector<3x2048xf32>
      tpu.vector_store %arg14[%c6, %c0_93], %80 {strides = array<i32>} : memref<9x2048xf32, #tpu.memory_space<vmem>>, vector<3x2048xf32>,
      %c0_94 = arith.constant 0 : index
      %c0_95 = arith.constant 0 : index
      %82 = vector.load %arg14[%c0_94, %c0_95] : memref<9x2048xf32, #tpu.memory_space<vmem>>, vector<9x2048xf32>
      %83 = arith.truncf %82 : vector<9x2048xf32> to vector<9x2048xbf16>
      %c0_96 = arith.constant 0 : index
      %c0_97 = arith.constant 0 : index
      %84 = vector.load %arg4[%c0_96, %c0_97] : memref<2048x128xbf16, #tpu.memory_space<vmem>>, vector<2048x128xbf16>
      %cst_98 = arith.constant dense<0.000000e+00> : vector<9x128xf32>
      %85 = tpu.matmul %83, %84, %cst_98 {dimension_numbers = #tpu.dot_dimension_numbers<[1], [0], [0], [1], [0, 0, 1, 1], [], []>} : vector<9x2048xbf16>, vector<2048x128xbf16>, vector<9x128xf32> -> vector<9x128xf32>
      %c0_99 = arith.constant 0 : index
      %c0_100 = arith.constant 0 : index
      %86 = vector.load %arg5[%c0_99, %c0_100] : memref<1x128xf32, #tpu.memory_space<vmem>>, vector<1x128xf32>
      %87 = vector.broadcast %86 : vector<1x128xf32> to vector<9x128xf32>
      %88 = arith.addf %85, %87 : vector<9x128xf32>
      %cst_101 = arith.constant 0.000000e+00 : f32
      %89 = vector.broadcast %cst_101 : f32 to vector<9x128xf32>
      %90 = arith.maximumf %88, %89 : vector<9x128xf32>
      %c0_102 = arith.constant 0 : index
      %c0_103 = arith.constant 0 : index
      %91 = vector.load %arg15[%c0_102, %c0_103] : memref<9x128xf32, #tpu.memory_space<vmem>>, vector<9x128xf32>
      tpu.vector_store %arg15[%c0_102, %c0_103], %90 {strides = array<i32>} : memref<9x128xf32, #tpu.memory_space<vmem>>, vector<9x128xf32>,
      %c0_104 = arith.constant 0 : index
      %c0_105 = arith.constant 0 : index
      %92 = vector.load %arg15[%c0_104, %c0_105] : memref<9x128xf32, #tpu.memory_space<vmem>>, vector<1x128xf32>
      %c1_106 = arith.constant 1 : index
      %c0_107 = arith.constant 0 : index
      %93 = vector.load %arg15[%c1_106, %c0_107] : memref<9x128xf32, #tpu.memory_space<vmem>>, vector<1x128xf32>
      %c2_108 = arith.constant 2 : index
      %c0_109 = arith.constant 0 : index
      %94 = vector.load %arg15[%c2_108, %c0_109] : memref<9x128xf32, #tpu.memory_space<vmem>>, vector<1x128xf32>
      %c3_110 = arith.constant 3 : index
      %c0_111 = arith.constant 0 : index
      %95 = vector.load %arg15[%c3_110, %c0_111] : memref<9x128xf32, #tpu.memory_space<vmem>>, vector<1x128xf32>
      %c4 = arith.constant 4 : index
      %c0_112 = arith.constant 0 : index
      %96 = vector.load %arg15[%c4, %c0_112] : memref<9x128xf32, #tpu.memory_space<vmem>>, vector<1x128xf32>
      %c5 = arith.constant 5 : index
      %c0_113 = arith.constant 0 : index
      %97 = vector.load %arg15[%c5, %c0_113] : memref<9x128xf32, #tpu.memory_space<vmem>>, vector<1x128xf32>
      %c6_114 = arith.constant 6 : index
      %c0_115 = arith.constant 0 : index
      %98 = vector.load %arg15[%c6_114, %c0_115] : memref<9x128xf32, #tpu.memory_space<vmem>>, vector<1x128xf32>
      %c7 = arith.constant 7 : index
      %c0_116 = arith.constant 0 : index
      %99 = vector.load %arg15[%c7, %c0_116] : memref<9x128xf32, #tpu.memory_space<vmem>>, vector<1x128xf32>
      %c8_117 = arith.constant 8 : index
      %c0_118 = arith.constant 0 : index
      %100 = vector.load %arg15[%c8_117, %c0_118] : memref<9x128xf32, #tpu.memory_space<vmem>>, vector<1x128xf32>
      %101 = tpu.concatenate %92, %93, %94, %95, %96, %97, %98, %99, %100 in 1 : vector<1x128xf32>, vector<1x128xf32>, vector<1x128xf32>, vector<1x128xf32>, vector<1x128xf32>, vector<1x128xf32>, vector<1x128xf32>, vector<1x128xf32>, vector<1x128xf32> -> vector<1x1152xf32>
      %c0_119 = arith.constant 0 : index
      %c0_120 = arith.constant 0 : index
      %102 = vector.load %arg16[%c0_119, %c0_120] : memref<1x1152xf32, #tpu.memory_space<vmem>>, vector<1x1152xf32>
      tpu.vector_store %arg16[%c0_119, %c0_120], %101 {strides = array<i32>} : memref<1x1152xf32, #tpu.memory_space<vmem>>, vector<1x1152xf32>,
      %c0_121 = arith.constant 0 : index
      %c0_122 = arith.constant 0 : index
      %103 = vector.load %arg16[%c0_121, %c0_122] : memref<1x1152xf32, #tpu.memory_space<vmem>>, vector<1x1152xf32>
      %104 = arith.truncf %103 : vector<1x1152xf32> to vector<1x1152xbf16>
      %c0_123 = arith.constant 0 : index
      %c0_124 = arith.constant 0 : index
      %105 = vector.load %arg6[%c0_123, %c0_124] : memref<1152x128xbf16, #tpu.memory_space<vmem>>, vector<1152x128xbf16>
      %cst_125 = arith.constant dense<0.000000e+00> : vector<1x128xf32>
      %106 = tpu.matmul %104, %105, %cst_125 {dimension_numbers = #tpu.dot_dimension_numbers<[1], [0], [0], [1], [0, 0, 1, 1], [], []>} : vector<1x1152xbf16>, vector<1152x128xbf16>, vector<1x128xf32> -> vector<1x128xf32>
      %c0_126 = arith.constant 0 : index
      %c0_127 = arith.constant 0 : index
      %107 = vector.load %arg7[%c0_126, %c0_127] : memref<1x128xf32, #tpu.memory_space<vmem>>, vector<1x128xf32>
      %108 = arith.addf %106, %107 : vector<1x128xf32>
      %cst_128 = arith.constant 0.000000e+00 : f32
      %109 = vector.broadcast %cst_128 : f32 to vector<1x128xf32>
      %110 = arith.maximumf %108, %109 : vector<1x128xf32>
      %111 = arith.index_cast %arg18 : i32 to index
      %c0_129 = arith.constant 0 : index
      %112 = vector.load %arg17[%111, %c0_129] : memref<2x128xf32, #tpu.memory_space<vmem>>, vector<1x128xf32>
      tpu.vector_store %arg17[%111, %c0_129], %110 {strides = array<i32>} : memref<2x128xf32, #tpu.memory_space<vmem>>, vector<1x128xf32>,
    }
    %c2_i32_0 = arith.constant 2 : i32
    %c0 = arith.constant 0 : index
    %c0_1 = arith.constant 0 : index
    %1 = vector.load %arg17[%c0, %c0_1] : memref<2x128xf32, #tpu.memory_space<vmem>>, vector<2x128xf32>
    %2 = arith.truncf %1 : vector<2x128xf32> to vector<2x128xbf16>
    %c0_2 = arith.constant 0 : index
    %c0_3 = arith.constant 0 : index
    %3 = vector.load %arg8[%c0_2, %c0_3] : memref<128x512xbf16, #tpu.memory_space<vmem>>, vector<128x512xbf16>
    %cst = arith.constant dense<0.000000e+00> : vector<2x512xf32>
    %4 = tpu.matmul %2, %3, %cst {dimension_numbers = #tpu.dot_dimension_numbers<[1], [0], [0], [1], [0, 0, 1, 1], [], []>} : vector<2x128xbf16>, vector<128x512xbf16>, vector<2x512xf32> -> vector<2x512xf32>
    %c0_4 = arith.constant 0 : index
    %c0_5 = arith.constant 0 : index
    %5 = vector.load %arg9[%c0_4, %c0_5] : memref<1x512xf32, #tpu.memory_space<vmem>>, vector<1x512xf32>
    %6 = vector.broadcast %5 : vector<1x512xf32> to vector<2x512xf32>
    %7 = arith.addf %4, %6 : vector<2x512xf32>
    %cst_6 = arith.constant 0.000000e+00 : f32
    %8 = vector.broadcast %cst_6 : f32 to vector<2x512xf32>
    %9 = arith.maximumf %7, %8 : vector<2x512xf32>
    %10 = arith.truncf %9 : vector<2x512xf32> to vector<2x512xbf16>
    %c0_7 = arith.constant 0 : index
    %c0_8 = arith.constant 0 : index
    %11 = vector.load %arg10[%c0_7, %c0_8] : memref<512x128xbf16, #tpu.memory_space<vmem>>, vector<512x128xbf16>
    %cst_9 = arith.constant dense<0.000000e+00> : vector<2x128xf32>
    %12 = tpu.matmul %10, %11, %cst_9 {dimension_numbers = #tpu.dot_dimension_numbers<[1], [0], [0], [1], [0, 0, 1, 1], [], []>} : vector<2x512xbf16>, vector<512x128xbf16>, vector<2x128xf32> -> vector<2x128xf32>
    %c0_10 = arith.constant 0 : index
    %c0_11 = arith.constant 0 : index
    %13 = vector.load %arg11[%c0_10, %c0_11] : memref<1x128xf32, #tpu.memory_space<vmem>>, vector<1x128xf32>
    %14 = vector.broadcast %13 : vector<1x128xf32> to vector<2x128xf32>
    %15 = arith.addf %12, %14 : vector<2x128xf32>
    %c0_12 = arith.constant 0 : index
    %c0_13 = arith.constant 0 : index
    %16 = vector.load %arg12[%c0_12, %c0_13] : memref<2x128xf32, #tpu.memory_space<vmem>>, vector<2x128xf32>
    tpu.vector_store %arg12[%c0_12, %c0_13], %15 {strides = array<i32>} : memref<2x128xf32, #tpu.memory_space<vmem>>, vector<2x128xf32>,
    return
  }
  func.func @transform_0(%arg0: i32) -> (i32, i32, i32) {
    %c0_i32 = arith.constant 0 : i32
    %c0_i32_0 = arith.constant 0 : i32
    %c0_i32_1 = arith.constant 0 : i32
    return %arg0, %c0_i32, %c0_i32_0 : i32, i32, i32
  }
  func.func @transform_1(%arg0: i32) -> (i32, i32) {
    %c0_i32 = arith.constant 0 : i32
    %c0_i32_0 = arith.constant 0 : i32
    %c0_i32_1 = arith.constant 0 : i32
    return %c0_i32, %c0_i32_0 : i32, i32
  }
  func.func @transform_2(%arg0: i32) -> (i32, i32) {
    %c0_i32 = arith.constant 0 : i32
    %c0_i32_0 = arith.constant 0 : i32
    %c0_i32_1 = arith.constant 0 : i32
    return %c0_i32, %c0_i32_0 : i32, i32
  }
  func.func @transform_3(%arg0: i32) -> (i32, i32) {
    %c0_i32 = arith.constant 0 : i32
    %c0_i32_0 = arith.constant 0 : i32
    %c0_i32_1 = arith.constant 0 : i32
    return %c0_i32, %c0_i32_0 : i32, i32
  }
  func.func @transform_4(%arg0: i32) -> (i32, i32) {
    %c0_i32 = arith.constant 0 : i32
    %c0_i32_0 = arith.constant 0 : i32
    %c0_i32_1 = arith.constant 0 : i32
    return %c0_i32, %c0_i32_0 : i32, i32
  }
  func.func @transform_5(%arg0: i32) -> (i32, i32) {
    %c0_i32 = arith.constant 0 : i32
    %c0_i32_0 = arith.constant 0 : i32
    %c0_i32_1 = arith.constant 0 : i32
    return %c0_i32, %c0_i32_0 : i32, i32
  }
  func.func @transform_6(%arg0: i32) -> (i32, i32) {
    %c0_i32 = arith.constant 0 : i32
    %c0_i32_0 = arith.constant 0 : i32
    %c0_i32_1 = arith.constant 0 : i32
    return %c0_i32, %c0_i32_0 : i32, i32
  }
  func.func @transform_7(%arg0: i32) -> (i32, i32) {
    %c0_i32 = arith.constant 0 : i32
    %c0_i32_0 = arith.constant 0 : i32
    %c0_i32_1 = arith.constant 0 : i32
    return %c0_i32, %c0_i32_0 : i32, i32
  }
  func.func @transform_8(%arg0: i32) -> (i32, i32) {
    %c0_i32 = arith.constant 0 : i32
    %c0_i32_0 = arith.constant 0 : i32
    %c0_i32_1 = arith.constant 0 : i32
    return %c0_i32, %c0_i32_0 : i32, i32
  }
  func.func @transform_9(%arg0: i32) -> (i32, i32) {
    %c0_i32 = arith.constant 0 : i32
    %c0_i32_0 = arith.constant 0 : i32
    %c0_i32_1 = arith.constant 0 : i32
    return %c0_i32, %c0_i32_0 : i32, i32
  }
  func.func @transform_10(%arg0: i32) -> (i32, i32) {
    %c0_i32 = arith.constant 0 : i32
    %c0_i32_0 = arith.constant 0 : i32
    %c0_i32_1 = arith.constant 0 : i32
    return %c0_i32, %c0_i32_0 : i32, i32
  }
  func.func @transform_11(%arg0: i32) -> (i32, i32) {
    %c0_i32 = arith.constant 0 : i32
    %c0_i32_0 = arith.constant 0 : i32
    return %arg0, %c0_i32 : i32, i32
  }
}

</mosaic_0001>

<llo_original>
// kernel: dqn_forward.1
$region0: #{dqn_forward.1}
  #allocation0 [shape = 'u32[]', space=smem, size = 0x4, offset = 0x4, fixed_abs, tag = 'smem constant byte address 0x4 - core index']
  #allocation1 [shape = 'u32[144,128]{1,0:T(1,128)}', space=vmem, size = 0x12000, scoped, tag = 'internal scratch']
  #allocation2 [shape = 'f32[64,128]{1,0:T(8,128)}', space=vmem, size = 0x8000, scoped, tag = 'scratch operand']
  #allocation3 [shape = 'f32[9,2048]{1,0:T(8,128)}', space=vmem, size = 0x20000, scoped, tag = 'scratch operand']
  #allocation4 [shape = 'f32[9,128]{1,0:T(8,128)}', space=vmem, size = 0x2000, scoped, tag = 'scratch operand']
  #allocation5 [shape = 'f32[1,1152]{1,0:T(1,128)}', space=vmem, size = 0x1200, scoped, tag = 'scratch operand']
  #allocation6 [shape = 'f32[2,128]{1,0:T(2,128)}', space=vmem, size = 0x400, scoped, tag = 'scratch operand']
  %s0 = inlined_call_operand.vmem [shape: bf16[2,64,256], index: 0, kind: input, shape index: {}]
  %s1 = inlined_call_operand.vmem [shape: bf16[256,128], index: 1, kind: input, shape index: {}]
  %s2 = inlined_call_operand.vmem [shape: f32[1,128], index: 2, kind: input, shape index: {}]
  %s3 = inlined_call_operand.vmem [shape: bf16[2048,128], index: 3, kind: input, shape index: {}]
  %s4 = inlined_call_operand.vmem [shape: f32[1,128], index: 4, kind: input, shape index: {}]
  %s5 = inlined_call_operand.vmem [shape: bf16[1152,128], index: 5, kind: input, shape index: {}]
  %s6 = inlined_call_operand.vmem [shape: f32[1,128], index: 6, kind: input, shape index: {}]
  %s7 = inlined_call_operand.vmem [shape: bf16[128,512], index: 7, kind: input, shape index: {}]
  %s8 = inlined_call_operand.vmem [shape: f32[1,512], index: 8, kind: input, shape index: {}]
  %s9 = inlined_call_operand.vmem [shape: bf16[512,128], index: 9, kind: input, shape index: {}]
  %s10 = inlined_call_operand.vmem [shape: f32[1,128], index: 10, kind: input, shape index: {}]
  %s11 = inlined_call_operand.hbm [shape: f32[2,128], index: 11, kind: output, shape index: {}]
  %s12 = sld [smem:[#allocation0]]
  $region61: #{dqn_forward.1} parent=0
    _
  %s14 = ssub.s32 1, %s12
  %s15 = scalar_select 0, %s14, %s12
  $region1: #{dqn_forward.1} parent=0
    #allocation7 [shape = 'u8[1024]{0}', space=vmem, size = 0x400, scoped, tag = 'output window, operand 0, single buffered']
    #allocation8 [shape = 's32[1]{0}', space=sflag, size = 0x4, scoped, tag = 'scoped memory for dqn_forward.1']
    %16 = vsyncpa [#allocation8], 0
    // Predicated region
    $region2: #{dqn_forward.1} parent=1 // pred_check
      _
    $region3: #{dqn_forward.1} parent=1 // pred_check_branch
      %18 = sbr.rel (0) target = $region5
    $region4: #{dqn_forward.1} parent=1 // pred_region
      _
    $region5: #{dqn_forward.1} parent=1 // pred_fallthru
      _
    // Predicated region
    $region6: #{dqn_forward.1} parent=1 // pred_check
      _
    $region7: #{dqn_forward.1} parent=1 // pred_check_branch
      %20 = sbr.rel (0) target = $region9
    $region8: #{dqn_forward.1} parent=1 // pred_region
      _
    $region9: #{dqn_forward.1} parent=1 // pred_fallthru
      _
    // Predicated region
    $region10: #{dqn_forward.1} parent=1 // pred_check
      _
    $region11: #{dqn_forward.1} parent=1 // pred_check_branch
      %22 = sbr.rel (0) target = $region13
    $region12: #{dqn_forward.1} parent=1 // pred_region
      _
    $region13: #{dqn_forward.1} parent=1 // pred_fallthru
      _
    // Predicated region
    $region14: #{dqn_forward.1} parent=1 // pred_check
      _
    $region15: #{dqn_forward.1} parent=1 // pred_check_branch
      %24 = sbr.rel (0) target = $region17
    $region16: #{dqn_forward.1} parent=1 // pred_region
      _
    $region17: #{dqn_forward.1} parent=1 // pred_fallthru
      _
    // Predicated region
    $region18: #{dqn_forward.1} parent=1 // pred_check
      _
    $region19: #{dqn_forward.1} parent=1 // pred_check_branch
      %26 = sbr.rel (0) target = $region21
    $region20: #{dqn_forward.1} parent=1 // pred_region
      _
    $region21: #{dqn_forward.1} parent=1 // pred_fallthru
      _
    // Predicated region
    $region22: #{dqn_forward.1} parent=1 // pred_check
      _
    $region23: #{dqn_forward.1} parent=1 // pred_check_branch
      %28 = sbr.rel (0) target = $region25
    $region24: #{dqn_forward.1} parent=1 // pred_region
      _
    $region25: #{dqn_forward.1} parent=1 // pred_fallthru
      _
    // Predicated region
    $region26: #{dqn_forward.1} parent=1 // pred_check
      _
    $region27: #{dqn_forward.1} parent=1 // pred_check_branch
      %30 = sbr.rel (0) target = $region29
    $region28: #{dqn_forward.1} parent=1 // pred_region
      _
    $region29: #{dqn_forward.1} parent=1 // pred_fallthru
      _
    // Predicated region
    $region30: #{dqn_forward.1} parent=1 // pred_check
      _
    $region31: #{dqn_forward.1} parent=1 // pred_check_branch
      %32 = sbr.rel (0) target = $region33
    $region32: #{dqn_forward.1} parent=1 // pred_region
      _
    $region33: #{dqn_forward.1} parent=1 // pred_fallthru
      _
    // Predicated region
    $region34: #{dqn_forward.1} parent=1 // pred_check
      _
    $region35: #{dqn_forward.1} parent=1 // pred_check_branch
      %34 = sbr.rel (0) target = $region37
    $region36: #{dqn_forward.1} parent=1 // pred_region
      _
    $region37: #{dqn_forward.1} parent=1 // pred_fallthru
      _
    // Predicated region
    $region38: #{dqn_forward.1} parent=1 // pred_check
      _
    $region39: #{dqn_forward.1} parent=1 // pred_check_branch
      %36 = sbr.rel (0) target = $region41
    $region40: #{dqn_forward.1} parent=1 // pred_region
      _
    $region41: #{dqn_forward.1} parent=1 // pred_fallthru
      _
    // Predicated region
    $region42: #{dqn_forward.1} parent=1 // pred_check
      _
    $region43: #{dqn_forward.1} parent=1 // pred_check_branch
      %38 = sbr.rel (0) target = $region45
    $region44: #{dqn_forward.1} parent=1 // pred_region
      _
    $region45: #{dqn_forward.1} parent=1 // pred_fallthru
      _
    loop: start=0, step=1, limit=2
    $region46: #{dqn_forward.1} parent=1 // loop_pre_header
      _
    $region47: #{dqn_forward.1} parent=1 // loop_header
      %s41 = sphi 0, %s45
      %p42 = scmp.ge.s32.totalorder %s41, 2
    $region48: #{dqn_forward.1} parent=1 // loop_header_branch
      %44 = sbr.rel (%p42) target = $region52
    $region49: #{dqn_forward.1} parent=1 // loop_body
      %s46 = smul.u32 %s41, 16
      %s47 = smul.addr %s46, 4
      %s48 = scalar_lea.vmem %s0, %s47
      %v49 = vld [vmem:[%s48] sm:$0xff]
      %v50 = vld [vmem:[%s48 + $0x8] sm:$0xff]
      %v51 = vld [vmem:[%s48 + $0x10] sm:$0xff]
      %v52 = vld [vmem:[%s48 + $0x18] sm:$0xff]
      %v53 = vld [vmem:[%s48 + $0x20] sm:$0xff]
      %v54 = vld [vmem:[%s48 + $0x28] sm:$0xff]
      %v55 = vld [vmem:[%s48 + $0x30] sm:$0xff]
      %v56 = vld [vmem:[%s48 + $0x38] sm:$0xff]
      %v57 = vld [vmem:[%s1] sm:$0xf]
      %v58 = vld [vmem:[%s1 + $0x4] sm:$0xf]
      %v59 = vld [vmem:[%s1 + $0x8] sm:$0xf]
      %v60 = vld [vmem:[%s1 + $0xc] sm:$0xf]
      %v61 = vld [vmem:[%s1 + $0x10] sm:$0xf]
      %v62 = vld [vmem:[%s1 + $0x14] sm:$0xf]
      %v63 = vld [vmem:[%s1 + $0x18] sm:$0xf]
      %v64 = vld [vmem:[%s1 + $0x1c] sm:$0xf]
      %v65 = vld [vmem:[%s1 + $0x20] sm:$0xf]
      %v66 = vld [vmem:[%s1 + $0x24] sm:$0xf]
      %v67 = vld [vmem:[%s1 + $0x28] sm:$0xf]
      %v68 = vld [vmem:[%s1 + $0x2c] sm:$0xf]
      %v69 = vld [vmem:[%s1 + $0x30] sm:$0xf]
      %v70 = vld [vmem:[%s1 + $0x34] sm:$0xf]
      %v71 = vld [vmem:[%s1 + $0x38] sm:$0xf]
      %v72 = vld [vmem:[%s1 + $0x3c] sm:$0xf]
      %v73 = vld [vmem:[%s1 + $0x40] sm:$0xf]
      %v74 = vld [vmem:[%s1 + $0x44] sm:$0xf]
      %v75 = vld [vmem:[%s1 + $0x48] sm:$0xf]
      %v76 = vld [vmem:[%s1 + $0x4c] sm:$0xf]
      %v77 = vld [vmem:[%s1 + $0x50] sm:$0xf]
      %v78 = vld [vmem:[%s1 + $0x54] sm:$0xf]
      %v79 = vld [vmem:[%s1 + $0x58] sm:$0xf]
      %v80 = vld [vmem:[%s1 + $0x5c] sm:$0xf]
      %v81 = vld [vmem:[%s1 + $0x60] sm:$0xf]
      %v82 = vld [vmem:[%s1 + $0x64] sm:$0xf]
      %v83 = vld [vmem:[%s1 + $0x68] sm:$0xf]
      %v84 = vld [vmem:[%s1 + $0x6c] sm:$0xf]
      %v85 = vld [vmem:[%s1 + $0x70] sm:$0xf]
      %v86 = vld [vmem:[%s1 + $0x74] sm:$0xf]
      %v87 = vld [vmem:[%s1 + $0x78] sm:$0xf]
      %v88 = vld [vmem:[%s1 + $0x7c] sm:$0xf]
      %v89 = vld [vmem:[%s2] sm:$0x1]
      %v91 = vlaneseq
      %v92 = vshrl.u32 %v91, 7
      %v93 = vsub.s32 0, %v92
      %v94 = vrot.slane %v89, %v93
      %v104 = vunpack.c.l.b16 %v49
      %v105 = vunpack.c.h.b16 %v49
      %v106 = vunpack.c.l.b16 %v50
      %v107 = vunpack.c.h.b16 %v50
      %v108 = vunpack.c.l.b16 %v51
      %v109 = vunpack.c.h.b16 %v51
      %v110 = vunpack.c.l.b16 %v52
      %v111 = vunpack.c.h.b16 %v52
      %v112 = vunpack.c.l.b16 %v53
      %v113 = vunpack.c.h.b16 %v53
      %v114 = vunpack.c.l.b16 %v54
      %v115 = vunpack.c.h.b16 %v54
      %v116 = vunpack.c.l.b16 %v55
      %v117 = vunpack.c.h.b16 %v55
      %v118 = vunpack.c.l.b16 %v56
      %v119 = vunpack.c.h.b16 %v56
      %v120 = vpack.c.b16 %v106, %v104
      %v121 = vpack.c.b16 %v107, %v105
      %v122 = vpack.c.b16 %v110, %v108
      %v123 = vpack.c.b16 %v111, %v109
      %v124 = vpack.c.b16 %v114, %v112
      %v125 = vpack.c.b16 %v115, %v113
      %v126 = vpack.c.b16 %v118, %v116
      %v127 = vpack.c.b16 %v119, %v117
      %v168 = vunpack.c.l.b16 %v57
      %v169 = vunpack.c.l.b16 %v58
      %v170 = vunpack.c.l.b16 %v59
      %v171 = vunpack.c.l.b16 %v60
      %v172 = vunpack.c.l.b16 %v61
      %v173 = vunpack.c.l.b16 %v62
      %v174 = vunpack.c.l.b16 %v63
      %v175 = vunpack.c.l.b16 %v64
      %v176 = vunpack.c.l.b16 %v65
      %v177 = vunpack.c.l.b16 %v66
      %v178 = vunpack.c.l.b16 %v67
      %v179 = vunpack.c.l.b16 %v68
      %v180 = vunpack.c.l.b16 %v69
      %v181 = vunpack.c.l.b16 %v70
      %v182 = vunpack.c.l.b16 %v71
      %v183 = vunpack.c.l.b16 %v72
      %v184 = vunpack.c.l.b16 %v73
      %v185 = vunpack.c.l.b16 %v74
      %v186 = vunpack.c.l.b16 %v75
      %v187 = vunpack.c.l.b16 %v76
      %v188 = vunpack.c.l.b16 %v77
      %v189 = vunpack.c.l.b16 %v78
      %v190 = vunpack.c.l.b16 %v79
      %v191 = vunpack.c.l.b16 %v80
      %v192 = vunpack.c.l.b16 %v81
      %v193 = vunpack.c.l.b16 %v82
      %v194 = vunpack.c.l.b16 %v83
      %v195 = vunpack.c.l.b16 %v84
      %v196 = vunpack.c.l.b16 %v85
      %v197 = vunpack.c.l.b16 %v86
      %v198 = vunpack.c.l.b16 %v87
      %v199 = vunpack.c.l.b16 %v88
      %v200 = vpack.c.b16 %v169, %v168
      %v201 = vpack.c.b16 %v171, %v170
      %v202 = vpack.c.b16 %v173, %v172
      %v203 = vpack.c.b16 %v175, %v174
      %v204 = vpack.c.b16 %v177, %v176
      %v205 = vpack.c.b16 %v179, %v178
      %v206 = vpack.c.b16 %v181, %v180
      %v207 = vpack.c.b16 %v183, %v182
      %v208 = vpack.c.b16 %v185, %v184
      %v209 = vpack.c.b16 %v187, %v186
      %v210 = vpack.c.b16 %v189, %v188
      %v211 = vpack.c.b16 %v191, %v190
      %v212 = vpack.c.b16 %v193, %v192
      %v213 = vpack.c.b16 %v195, %v194
      %v214 = vpack.c.b16 %v197, %v196
      %v215 = vpack.c.b16 %v199, %v198
      %232 = vmatprep.subr.bf16.mxu0 0
      %233 = vmatpush1.bf16.msra.mxu0 %v200
      %234 = vmatprep.subr.bf16.mxu0 0
      %235 = vmatpush1.bf16.msra.mxu0 %v201
      %236 = vmatprep.subr.bf16.mxu0 0
      %237 = vmatpush1.bf16.msra.mxu0 %v202
      %238 = vmatprep.subr.bf16.mxu0 0
      %239 = vmatpush1.bf16.msra.mxu0 %v203
      %240 = vmatprep.subr.bf16.mxu0 0
      %241 = vmatpush1.bf16.msra.mxu0 %v204
      %242 = vmatprep.subr.bf16.mxu0 0
      %243 = vmatpush1.bf16.msra.mxu0 %v205
      %244 = vmatprep.subr.bf16.mxu0 0
      %245 = vmatpush1.bf16.msra.mxu0 %v206
      %246 = vmatprep.subr.bf16.mxu0 0
      %247 = vmatpush1.bf16.msra.mxu0 %v207
      %248 = vmatprep.subr.bf16.mxu0 0
      %249 = vmatpush1.bf16.msra.mxu0 %v208
      %250 = vmatprep.subr.bf16.mxu0 0
      %251 = vmatpush1.bf16.msra.mxu0 %v209
      %252 = vmatprep.subr.bf16.mxu0 0
      %253 = vmatpush1.bf16.msra.mxu0 %v210
      %254 = vmatprep.subr.bf16.mxu0 0
      %255 = vmatpush1.bf16.msra.mxu0 %v211
      %256 = vmatprep.subr.bf16.mxu0 0
      %257 = vmatpush1.bf16.msra.mxu0 %v212
      %258 = vmatprep.subr.bf16.mxu0 0
      %259 = vmatpush1.bf16.msra.mxu0 %v213
      %260 = vmatprep.subr.bf16.mxu0 0
      %261 = vmatpush1.bf16.msra.mxu0 %v214
      %262 = vmatprep.subr.bf16.mxu0 0
      %263 = vmatpush1.bf16.msra.mxu0 %v215
      %264 = vmatprep.mubr.bf16.mxu0 %v121
      %265 = vmatmul.mubr.bf16.gmra.mrb[0].mxu0 %v120
      %v266 = vpop.f32.mrb[0].mxu0
      %v267 = vadd.f32 %v94, %v266
      %v268 = vpop.f32.mrb[0].mxu0
      %v269 = vpop.f32.mrb[0].mxu0
      %v270 = vadd.f32 %v94, %v269
      %v271 = vpop.f32.mrb[0].mxu0
      %272 = vmatprep.mubr.bf16.mxu0 %v123
      %273 = vmatmul.mubr.bf16.gmra.mrb[0].mxu0 %v122
      %v274 = vpop.f32.mrb[0].mxu0
      %v275 = vadd.f32 %v94, %v274
      %v276 = vpop.f32.mrb[0].mxu0
      %v277 = vpop.f32.mrb[0].mxu0
      %v278 = vadd.f32 %v94, %v277
      %v279 = vpop.f32.mrb[0].mxu0
      %280 = vmatprep.mubr.bf16.mxu0 %v125
      %281 = vmatmul.mubr.bf16.gmra.mrb[0].mxu0 %v124
      %v282 = vpop.f32.mrb[0].mxu0
      %v283 = vadd.f32 %v94, %v282
      %v284 = vpop.f32.mrb[0].mxu0
      %v285 = vpop.f32.mrb[0].mxu0
      %v286 = vadd.f32 %v94, %v285
      %v287 = vpop.f32.mrb[0].mxu0
      %288 = vmatprep.mubr.bf16.mxu0 %v127
      %289 = vmatmul.mubr.bf16.gmra.mrb[0].mxu0 %v126
      %v290 = vpop.f32.mrb[0].mxu0
      %v291 = vadd.f32 %v94, %v290
      %v292 = vpop.f32.mrb[0].mxu0
      %v293 = vpop.f32.mrb[0].mxu0
      %v294 = vadd.f32 %v94, %v293
      %v295 = vpop.f32.mrb[0].mxu0
      %296 = vdwg.mxu0
      %v297 = vmax.f32 %v267, 0.0
      %v298 = vmax.f32 %v270, 0.0
      %v299 = vmax.f32 %v275, 0.0
      %v300 = vmax.f32 %v278, 0.0
      %v301 = vmax.f32 %v283, 0.0
      %v302 = vmax.f32 %v286, 0.0
      %v303 = vmax.f32 %v291, 0.0
      %v304 = vmax.f32 %v294, 0.0
      %305 = vst [vmem:[#allocation2] sm:$0xff] %v297
      %306 = vst [vmem:[#allocation2 + $0x8] sm:$0xff] %v298
      %307 = vst [vmem:[#allocation2 + $0x10] sm:$0xff] %v299
      %308 = vst [vmem:[#allocation2 + $0x18] sm:$0xff] %v300
      %309 = vst [vmem:[#allocation2 + $0x20] sm:$0xff] %v301
      %310 = vst [vmem:[#allocation2 + $0x28] sm:$0xff] %v302
      %311 = vst [vmem:[#allocation2 + $0x30] sm:$0xff] %v303
      %312 = vst [vmem:[#allocation2 + $0x38] sm:$0xff] %v304
      %v313 = vld [vmem:[#allocation2] ss:$2 sm:$0x7]
      %s314 = scalar_lea.vmem [#allocation2], 1
      %v315 = vld [vmem:[%s314] ss:$2 sm:$0x7]
      %s316 = scalar_lea.vmem [#allocation2], 2
      %v317 = vld [vmem:[%s316] ss:$2 sm:$0x7]
      %s318 = scalar_lea.vmem [#allocation2], 3
      %v319 = vld [vmem:[%s318] ss:$2 sm:$0x7]
      %s320 = scalar_lea.vmem [#allocation2], 8
      %v321 = vld [vmem:[%s320] ss:$2 sm:$0x7]
      %s322 = scalar_lea.vmem [#allocation2], 9
      %v323 = vld [vmem:[%s322] ss:$2 sm:$0x7]
      %s324 = scalar_lea.vmem [#allocation2], 10
      %v325 = vld [vmem:[%s324] ss:$2 sm:$0x7]
      %s326 = scalar_lea.vmem [#allocation2], 11
      %v327 = vld [vmem:[%s326] ss:$2 sm:$0x7]
      %s328 = scalar_lea.vmem [#allocation2], 16
      %v329 = vld [vmem:[%s328] ss:$2 sm:$0x7]
      %s330 = scalar_lea.vmem [#allocation2], 17
      %v331 = vld [vmem:[%s330] ss:$2 sm:$0x7]
      %s332 = scalar_lea.vmem [#allocation2], 18
      %v333 = vld [vmem:[%s332] ss:$2 sm:$0x7]
      %s334 = scalar_lea.vmem [#allocation2], 19
      %v335 = vld [vmem:[%s334] ss:$2 sm:$0x7]
      %s336 = scalar_lea.vmem [#allocation2], 24
      %v337 = vld [vmem:[%s336] ss:$2 sm:$0x7]
      %s338 = scalar_lea.vmem [#allocation2], 25
      %v339 = vld [vmem:[%s338] ss:$2 sm:$0x7]
      %s340 = scalar_lea.vmem [#allocation2], 26
      %v341 = vld [vmem:[%s340] ss:$2 sm:$0x7]
      %s342 = scalar_lea.vmem [#allocation2], 27
      %v343 = vld [vmem:[%s342] ss:$2 sm:$0x7]
      %344 = vst [vmem:[#allocation3] sm:$0x7] %v313
      %345 = vst [vmem:[#allocation3 + $0x8] sm:$0x7] %v315
      %346 = vst [vmem:[#allocation3 + $0x10] sm:$0x7] %v317
      %347 = vst [vmem:[#allocation3 + $0x18] sm:$0x7] %v319
      %348 = vst [vmem:[#allocation3 + $0x20] sm:$0x7] %v321
      %349 = vst [vmem:[#allocation3 + $0x28] sm:$0x7] %v323
      %350 = vst [vmem:[#allocation3 + $0x30] sm:$0x7] %v325
      %351 = vst [vmem:[#allocation3 + $0x38] sm:$0x7] %v327
      %352 = vst [vmem:[#allocation3 + $0x40] sm:$0x7] %v329
      %353 = vst [vmem:[#allocation3 + $0x48] sm:$0x7] %v331
      %354 = vst [vmem:[#allocation3 + $0x50] sm:$0x7] %v333
      %355 = vst [vmem:[#allocation3 + $0x58] sm:$0x7] %v335
      %356 = vst [vmem:[#allocation3 + $0x60] sm:$0x7] %v337
      %357 = vst [vmem:[#allocation3 + $0x68] sm:$0x7] %v339
      %358 = vst [vmem:[#allocation3 + $0x70] sm:$0x7] %v341
      %359 = vst [vmem:[#allocation3 + $0x78] sm:$0x7] %v343
      %v360 = vld [vmem:[%s328] ss:$2 sm:$0x7]
      %v361 = vld [vmem:[%s330] ss:$2 sm:$0x7]
      %v362 = vld [vmem:[%s332] ss:$2 sm:$0x7]
      %v363 = vld [vmem:[%s334] ss:$2 sm:$0x7]
      %v364 = vld [vmem:[%s336] ss:$2 sm:$0x7]
      %v365 = vld [vmem:[%s338] ss:$2 sm:$0x7]
      %v366 = vld [vmem:[%s340] ss:$2 sm:$0x7]
      %v367 = vld [vmem:[%s342] ss:$2 sm:$0x7]
      %s368 = scalar_lea.vmem [#allocation2], 32
      %v369 = vld [vmem:[%s368] ss:$2 sm:$0x7]
      %s370 = scalar_lea.vmem [#allocation2], 33
      %v371 = vld [vmem:[%s370] ss:$2 sm:$0x7]
      %s372 = scalar_lea.vmem [#allocation2], 34
      %v373 = vld [vmem:[%s372] ss:$2 sm:$0x7]
      %s374 = scalar_lea.vmem [#allocation2], 35
      %v375 = vld [vmem:[%s374] ss:$2 sm:$0x7]
      %s376 = scalar_lea.vmem [#allocation2], 40
      %v377 = vld [vmem:[%s376] ss:$2 sm:$0x7]
      %s378 = scalar_lea.vmem [#allocation2], 41
      %v379 = vld [vmem:[%s378] ss:$2 sm:$0x7]
      %s380 = scalar_lea.vmem [#allocation2], 42
      %v381 = vld [vmem:[%s380] ss:$2 sm:$0x7]
      %s382 = scalar_lea.vmem [#allocation2], 43
      %v383 = vld [vmem:[%s382] ss:$2 sm:$0x7]
      %v400 = vrot.slane %v360, 5
      %v401 = vrot.slane %v361, 5
      %v402 = vrot.slane %v362, 5
      %v403 = vrot.slane %v363, 5
      %v404 = vrot.slane %v364, 5
      %v405 = vrot.slane %v365, 5
      %v406 = vrot.slane %v366, 5
      %v407 = vrot.slane %v367, 5
      %v408 = vrot.slane %v369, 5
      %v409 = vrot.slane %v371, 5
      %v410 = vrot.slane %v373, 5
      %v411 = vrot.slane %v375, 5
      %v412 = vrot.slane %v377, 5
      %v413 = vrot.slane %v379, 5
      %v414 = vrot.slane %v381, 5
      %v415 = vrot.slane %v383, 5
      %432 = vst [vmem:[#allocation3] sm:$0x38] %v400
      %433 = vst [vmem:[#allocation3 + $0x8] sm:$0x38] %v401
      %434 = vst [vmem:[#allocation3 + $0x10] sm:$0x38] %v402
      %435 = vst [vmem:[#allocation3 + $0x18] sm:$0x38] %v403
      %436 = vst [vmem:[#allocation3 + $0x20] sm:$0x38] %v404
      %437 = vst [vmem:[#allocation3 + $0x28] sm:$0x38] %v405
      %438 = vst [vmem:[#allocation3 + $0x30] sm:$0x38] %v406
      %439 = vst [vmem:[#allocation3 + $0x38] sm:$0x38] %v407
      %440 = vst [vmem:[#allocation3 + $0x40] sm:$0x38] %v408
      %441 = vst [vmem:[#allocation3 + $0x48] sm:$0x38] %v409
      %442 = vst [vmem:[#allocation3 + $0x50] sm:$0x38] %v410
      %443 = vst [vmem:[#allocation3 + $0x58] sm:$0x38] %v411
      %444 = vst [vmem:[#allocation3 + $0x60] sm:$0x38] %v412
      %445 = vst [vmem:[#allocation3 + $0x68] sm:$0x38] %v413
      %446 = vst [vmem:[#allocation3 + $0x70] sm:$0x38] %v414
      %447 = vst [vmem:[#allocation3 + $0x78] sm:$0x38] %v415
      %v448 = vld [vmem:[%s368] ss:$2 sm:$0x7]
      %v449 = vld [vmem:[%s370] ss:$2 sm:$0x7]
      %v450 = vld [vmem:[%s372] ss:$2 sm:$0x7]
      %v451 = vld [vmem:[%s374] ss:$2 sm:$0x7]
      %v452 = vld [vmem:[%s376] ss:$2 sm:$0x7]
      %v453 = vld [vmem:[%s378] ss:$2 sm:$0x7]
      %v454 = vld [vmem:[%s380] ss:$2 sm:$0x7]
      %v455 = vld [vmem:[%s382] ss:$2 sm:$0x7]
      %s456 = scalar_lea.vmem [#allocation2], 48
      %v457 = vld [vmem:[%s456] ss:$2 sm:$0x7]
      %s458 = scalar_lea.vmem [#allocation2], 49
      %v459 = vld [vmem:[%s458] ss:$2 sm:$0x7]
      %s460 = scalar_lea.vmem [#allocation2], 50
      %v461 = vld [vmem:[%s460] ss:$2 sm:$0x7]
      %s462 = scalar_lea.vmem [#allocation2], 51
      %v463 = vld [vmem:[%s462] ss:$2 sm:$0x7]
      %s464 = scalar_lea.vmem [#allocation2], 56
      %v465 = vld [vmem:[%s464] ss:$2 sm:$0x7]
      %s466 = scalar_lea.vmem [#allocation2], 57
      %v467 = vld [vmem:[%s466] ss:$2 sm:$0x7]
      %s468 = scalar_lea.vmem [#allocation2], 58
      %v469 = vld [vmem:[%s468] ss:$2 sm:$0x7]
      %s470 = scalar_lea.vmem [#allocation2], 59
      %v471 = vld [vmem:[%s470] ss:$2 sm:$0x7]
      %v488 = vrot.slane %v448, 2
      %v489 = vrot.slane %v449, 2
      %v490 = vrot.slane %v450, 2
      %v491 = vrot.slane %v451, 2
      %v492 = vrot.slane %v452, 2
      %v493 = vrot.slane %v453, 2
      %v494 = vrot.slane %v454, 2
      %v495 = vrot.slane %v455, 2
      %v496 = vrot.slane %v457, 2
      %v497 = vrot.slane %v459, 2
      %v498 = vrot.slane %v461, 2
      %v499 = vrot.slane %v463, 2
      %v500 = vrot.slane %v465, 2
      %v501 = vrot.slane %v467, 2
      %v502 = vrot.slane %v469, 2
      %v503 = vrot.slane %v471, 2
      %520 = vst [vmem:[#allocation3] sm:$0xc0] %v488
      %521 = vst [vmem:[#allocation3 + $0x8] sm:$0xc0] %v489
      %522 = vst [vmem:[#allocation3 + $0x10] sm:$0xc0] %v490
      %523 = vst [vmem:[#allocation3 + $0x18] sm:$0xc0] %v491
      %524 = vst [vmem:[#allocation3 + $0x20] sm:$0xc0] %v492
      %525 = vst [vmem:[#allocation3 + $0x28] sm:$0xc0] %v493
      %526 = vst [vmem:[#allocation3 + $0x30] sm:$0xc0] %v494
      %527 = vst [vmem:[#allocation3 + $0x38] sm:$0xc0] %v495
      %528 = vst [vmem:[#allocation3 + $0x40] sm:$0xc0] %v496
      %529 = vst [vmem:[#allocation3 + $0x48] sm:$0xc0] %v497
      %530 = vst [vmem:[#allocation3 + $0x50] sm:$0xc0] %v498
      %531 = vst [vmem:[#allocation3 + $0x58] sm:$0xc0] %v499
      %532 = vst [vmem:[#allocation3 + $0x60] sm:$0xc0] %v500
      %533 = vst [vmem:[#allocation3 + $0x68] sm:$0xc0] %v501
      %534 = vst [vmem:[#allocation3 + $0x70] sm:$0xc0] %v502
      %535 = vst [vmem:[#allocation3 + $0x78] sm:$0xc0] %v503
      %536 = vst [vmem:[#allocation3 + $0x80] sm:$0x1] %v488
      %537 = vst [vmem:[#allocation3 + $0x88] sm:$0x1] %v489
      %538 = vst [vmem:[#allocation3 + $0x90] sm:$0x1] %v490
      %539 = vst [vmem:[#allocation3 + $0x98] sm:$0x1] %v491
      %540 = vst [vmem:[#allocation3 + $0xa0] sm:$0x1] %v492
      %541 = vst [vmem:[#allocation3 + $0xa8] sm:$0x1] %v493
      %542 = vst [vmem:[#allocation3 + $0xb0] sm:$0x1] %v494
      %543 = vst [vmem:[#allocation3 + $0xb8] sm:$0x1] %v495
      %544 = vst [vmem:[#allocation3 + $0xc0] sm:$0x1] %v496
      %545 = vst [vmem:[#allocation3 + $0xc8] sm:$0x1] %v497
      %546 = vst [vmem:[#allocation3 + $0xd0] sm:$0x1] %v498
      %547 = vst [vmem:[#allocation3 + $0xd8] sm:$0x1] %v499
      %548 = vst [vmem:[#allocation3 + $0xe0] sm:$0x1] %v500
      %549 = vst [vmem:[#allocation3 + $0xe8] sm:$0x1] %v501
      %550 = vst [vmem:[#allocation3 + $0xf0] sm:$0x1] %v502
      %551 = vst [vmem:[#allocation3 + $0xf8] sm:$0x1] %v503
      %v552 = vld [vmem:[#allocation3] sm:$0xff]
      %v553 = vld [vmem:[#allocation3 + $0x8] sm:$0xff]
      %v554 = vld [vmem:[#allocation3 + $0x10] sm:$0xff]
      %v555 = vld [vmem:[#allocation3 + $0x18] sm:$0xff]
      %v556 = vld [vmem:[#allocation3 + $0x20] sm:$0xff]
      %v557 = vld [vmem:[#allocation3 + $0x28] sm:$0xff]
      %v558 = vld [vmem:[#allocation3 + $0x30] sm:$0xff]
      %v559 = vld [vmem:[#allocation3 + $0x38] sm:$0xff]
      %v560 = vld [vmem:[#allocation3 + $0x40] sm:$0xff]
      %v561 = vld [vmem:[#allocation3 + $0x48] sm:$0xff]
      %v562 = vld [vmem:[#allocation3 + $0x50] sm:$0xff]
      %v563 = vld [vmem:[#allocation3 + $0x58] sm:$0xff]
      %v564 = vld [vmem:[#allocation3 + $0x60] sm:$0xff]
      %v565 = vld [vmem:[#allocation3 + $0x68] sm:$0xff]
      %v566 = vld [vmem:[#allocation3 + $0x70] sm:$0xff]
      %v567 = vld [vmem:[#allocation3 + $0x78] sm:$0xff]
      %v568 = vld [vmem:[#allocation3 + $0x80] sm:$0x1]
      %v569 = vld [vmem:[#allocation3 + $0x88] sm:$0x1]
      %v570 = vld [vmem:[#allocation3 + $0x90] sm:$0x1]
      %v571 = vld [vmem:[#allocation3 + $0x98] sm:$0x1]
      %v572 = vld [vmem:[#allocation3 + $0xa0] sm:$0x1]
      %v573 = vld [vmem:[#allocation3 + $0xa8] sm:$0x1]
      %v574 = vld [vmem:[#allocation3 + $0xb0] sm:$0x1]
      %v575 = vld [vmem:[#allocation3 + $0xb8] sm:$0x1]
      %v576 = vld [vmem:[#allocation3 + $0xc0] sm:$0x1]
      %v577 = vld [vmem:[#allocation3 + $0xc8] sm:$0x1]
      %v578 = vld [vmem:[#allocation3 + $0xd0] sm:$0x1]
      %v579 = vld [vmem:[#allocation3 + $0xd8] sm:$0x1]
      %v580 = vld [vmem:[#allocation3 + $0xe0] sm:$0x1]
      %v581 = vld [vmem:[#allocation3 + $0xe8] sm:$0x1]
      %v582 = vld [vmem:[#allocation3 + $0xf0] sm:$0x1]
      %v583 = vld [vmem:[#allocation3 + $0xf8] sm:$0x1]
      %v584 = vpack.c.bf16 %v568, %v552
      %v585 = vpack.c.bf16 %v569, %v553
      %v586 = vpack.c.bf16 %v570, %v554
      %v587 = vpack.c.bf16 %v571, %v555
      %v588 = vpack.c.bf16 %v572, %v556
      %v589 = vpack.c.bf16 %v573, %v557
      %v590 = vpack.c.bf16 %v574, %v558
      %v591 = vpack.c.bf16 %v575, %v559
      %v592 = vpack.c.bf16 %v576, %v560
      %v593 = vpack.c.bf16 %v577, %v561
      %v594 = vpack.c.bf16 %v578, %v562
      %v595 = vpack.c.bf16 %v579, %v563
      %v596 = vpack.c.bf16 %v580, %v564
      %v597 = vpack.c.bf16 %v581, %v565
      %v598 = vpack.c.bf16 %v582, %v566
      %v599 = vpack.c.bf16 %v583, %v567
      %v600 = vld [vmem:[%s3] sm:$0xf]
      %v601 = vld [vmem:[%s3 + $0x4] sm:$0xf]
      %v602 = vld [vmem:[%s3 + $0x8] sm:$0xf]
      %v603 = vld [vmem:[%s3 + $0xc] sm:$0xf]
      %v604 = vld [vmem:[%s3 + $0x10] sm:$0xf]
      %v605 = vld [vmem:[%s3 + $0x14] sm:$0xf]
      %v606 = vld [vmem:[%s3 + $0x18] sm:$0xf]
      %v607 = vld [vmem:[%s3 + $0x1c] sm:$0xf]
      %v608 = vld [vmem:[%s3 + $0x20] sm:$0xf]
      %v609 = vld [vmem:[%s3 + $0x24] sm:$0xf]
      %v610 = vld [vmem:[%s3 + $0x28] sm:$0xf]
      %v611 = vld [vmem:[%s3 + $0x2c] sm:$0xf]
      %v612 = vld [vmem:[%s3 + $0x30] sm:$0xf]
      %v613 = vld [vmem:[%s3 + $0x34] sm:$0xf]
      %v614 = vld [vmem:[%s3 + $0x38] sm:$0xf]
      %v615 = vld [vmem:[%s3 + $0x3c] sm:$0xf]
      %v616 = vld [vmem:[%s3 + $0x40] sm:$0xf]
      %v617 = vld [vmem:[%s3 + $0x44] sm:$0xf]
      %v618 = vld [vmem:[%s3 + $0x48] sm:$0xf]
      %v619 = vld [vmem:[%s3 + $0x4c] sm:$0xf]
      %v620 = vld [vmem:[%s3 + $0x50] sm:$0xf]
      %v621 = vld [vmem:[%s3 + $0x54] sm:$0xf]
      %v622 = vld [vmem:[%s3 + $0x58] sm:$0xf]
      %v623 = vld [vmem:[%s3 + $0x5c] sm:$0xf]
      %v624 = vld [vmem:[%s3 + $0x60] sm:$0xf]
      %v625 = vld [vmem:[%s3 + $0x64] sm:$0xf]
      %v626 = vld [vmem:[%s3 + $0x68] sm:$0xf]
      %v627 = vld [vmem:[%s3 + $0x6c] sm:$0xf]
      %v628 = vld [vmem:[%s3 + $0x70] sm:$0xf]
      %v629 = vld [vmem:[%s3 + $0x74] sm:$0xf]
      %v630 = vld [vmem:[%s3 + $0x78] sm:$0xf]
      %v631 = vld [vmem:[%s3 + $0x7c] sm:$0xf]
      %v632 = vld [vmem:[%s3 + $0x80] sm:$0xf]
      %v633 = vld [vmem:[%s3 + $0x84] sm:$0xf]
      %v634 = vld [vmem:[%s3 + $0x88] sm:$0xf]
      %v635 = vld [vmem:[%s3 + $0x8c] sm:$0xf]
      %v636 = vld [vmem:[%s3 + $0x90] sm:$0xf]
      %v637 = vld [vmem:[%s3 + $0x94] sm:$0xf]
      %v638 = vld [vmem:[%s3 + $0x98] sm:$0xf]
      %v639 = vld [vmem:[%s3 + $0x9c] sm:$0xf]
      %v640 = vld [vmem:[%s3 + $0xa0] sm:$0xf]
      %v641 = vld [vmem:[%s3 + $0xa4] sm:$0xf]
      %v642 = vld [vmem:[%s3 + $0xa8] sm:$0xf]
      %v643 = vld [vmem:[%s3 + $0xac] sm:$0xf]
      %v644 = vld [vmem:[%s3 + $0xb0] sm:$0xf]
      %v645 = vld [vmem:[%s3 + $0xb4] sm:$0xf]
      %v646 = vld [vmem:[%s3 + $0xb8] sm:$0xf]
      %v647 = vld [vmem:[%s3 + $0xbc] sm:$0xf]
      %v648 = vld [vmem:[%s3 + $0xc0] sm:$0xf]
      %v649 = vld [vmem:[%s3 + $0xc4] sm:$0xf]
      %v650 = vld [vmem:[%s3 + $0xc8] sm:$0xf]
      %v651 = vld [vmem:[%s3 + $0xcc] sm:$0xf]
      %v652 = vld [vmem:[%s3 + $0xd0] sm:$0xf]
      %v653 = vld [vmem:[%s3 + $0xd4] sm:$0xf]
      %v654 = vld [vmem:[%s3 + $0xd8] sm:$0xf]
      %v655 = vld [vmem:[%s3 + $0xdc] sm:$0xf]
      %v656 = vld [vmem:[%s3 + $0xe0] sm:$0xf]
      %v657 = vld [vmem:[%s3 + $0xe4] sm:$0xf]
      %v658 = vld [vmem:[%s3 + $0xe8] sm:$0xf]
      %v659 = vld [vmem:[%s3 + $0xec] sm:$0xf]
      %v660 = vld [vmem:[%s3 + $0xf0] sm:$0xf]
      %v661 = vld [vmem:[%s3 + $0xf4] sm:$0xf]
      %v662 = vld [vmem:[%s3 + $0xf8] sm:$0xf]
      %v663 = vld [vmem:[%s3 + $0xfc] sm:$0xf]
      %v664 = vld [vmem:[%s3 + $0x100] sm:$0xf]
      %v665 = vld [vmem:[%s3 + $0x104] sm:$0xf]
      %v666 = vld [vmem:[%s3 + $0x108] sm:$0xf]
      %v667 = vld [vmem:[%s3 + $0x10c] sm:$0xf]
      %v668 = vld [vmem:[%s3 + $0x110] sm:$0xf]
      %v669 = vld [vmem:[%s3 + $0x114] sm:$0xf]
      %v670 = vld [vmem:[%s3 + $0x118] sm:$0xf]
      %v671 = vld [vmem:[%s3 + $0x11c] sm:$0xf]
      %v672 = vld [vmem:[%s3 + $0x120] sm:$0xf]
      %v673 = vld [vmem:[%s3 + $0x124] sm:$0xf]
      %v674 = vld [vmem:[%s3 + $0x128] sm:$0xf]
      %v675 = vld [vmem:[%s3 + $0x12c] sm:$0xf]
      %v676 = vld [vmem:[%s3 + $0x130] sm:$0xf]
      %v677 = vld [vmem:[%s3 + $0x134] sm:$0xf]
      %v678 = vld [vmem:[%s3 + $0x138] sm:$0xf]
      %v679 = vld [vmem:[%s3 + $0x13c] sm:$0xf]
      %v680 = vld [vmem:[%s3 + $0x140] sm:$0xf]
      %v681 = vld [vmem:[%s3 + $0x144] sm:$0xf]
      %v682 = vld [vmem:[%s3 + $0x148] sm:$0xf]
      %v683 = vld [vmem:[%s3 + $0x14c] sm:$0xf]
      %v684 = vld [vmem:[%s3 + $0x150] sm:$0xf]
      %v685 = vld [vmem:[%s3 + $0x154] sm:$0xf]
      %v686 = vld [vmem:[%s3 + $0x158] sm:$0xf]
      %v687 = vld [vmem:[%s3 + $0x15c] sm:$0xf]
      %v688 = vld [vmem:[%s3 + $0x160] sm:$0xf]
      %v689 = vld [vmem:[%s3 + $0x164] sm:$0xf]
      %v690 = vld [vmem:[%s3 + $0x168] sm:$0xf]
      %v691 = vld [vmem:[%s3 + $0x16c] sm:$0xf]
      %v692 = vld [vmem:[%s3 + $0x170] sm:$0xf]
      %v693 = vld [vmem:[%s3 + $0x174] sm:$0xf]
      %v694 = vld [vmem:[%s3 + $0x178] sm:$0xf]
      %v695 = vld [vmem:[%s3 + $0x17c] sm:$0xf]
      %v696 = vld [vmem:[%s3 + $0x180] sm:$0xf]
      %v697 = vld [vmem:[%s3 + $0x184] sm:$0xf]
      %v698 = vld [vmem:[%s3 + $0x188] sm:$0xf]
      %v699 = vld [vmem:[%s3 + $0x18c] sm:$0xf]
      %v700 = vld [vmem:[%s3 + $0x190] sm:$0xf]
      %v701 = vld [vmem:[%s3 + $0x194] sm:$0xf]
      %v702 = vld [vmem:[%s3 + $0x198] sm:$0xf]
      %v703 = vld [vmem:[%s3 + $0x19c] sm:$0xf]
      %v704 = vld [vmem:[%s3 + $0x1a0] sm:$0xf]
      %v705 = vld [vmem:[%s3 + $0x1a4] sm:$0xf]
      %v706 = vld [vmem:[%s3 + $0x1a8] sm:$0xf]
      %v707 = vld [vmem:[%s3 + $0x1ac] sm:$0xf]
      %v708 = vld [vmem:[%s3 + $0x1b0] sm:$0xf]
      %v709 = vld [vmem:[%s3 + $0x1b4] sm:$0xf]
      %v710 = vld [vmem:[%s3 + $0x1b8] sm:$0xf]
      %v711 = vld [vmem:[%s3 + $0x1bc] sm:$0xf]
      %v712 = vld [vmem:[%s3 + $0x1c0] sm:$0xf]
      %v713 = vld [vmem:[%s3 + $0x1c4] sm:$0xf]
      %v714 = vld [vmem:[%s3 + $0x1c8] sm:$0xf]
      %v715 = vld [vmem:[%s3 + $0x1cc] sm:$0xf]
      %v716 = vld [vmem:[%s3 + $0x1d0] sm:$0xf]
      %v717 = vld [vmem:[%s3 + $0x1d4] sm:$0xf]
      %v718 = vld [vmem:[%s3 + $0x1d8] sm:$0xf]
      %v719 = vld [vmem:[%s3 + $0x1dc] sm:$0xf]
      %v720 = vld [vmem:[%s3 + $0x1e0] sm:$0xf]
      %v721 = vld [vmem:[%s3 + $0x1e4] sm:$0xf]
      %v722 = vld [vmem:[%s3 + $0x1e8] sm:$0xf]
      %v723 = vld [vmem:[%s3 + $0x1ec] sm:$0xf]
      %v724 = vld [vmem:[%s3 + $0x1f0] sm:$0xf]
      %v725 = vld [vmem:[%s3 + $0x1f4] sm:$0xf]
      %v726 = vld [vmem:[%s3 + $0x1f8] sm:$0xf]
      %v727 = vld [vmem:[%s3 + $0x1fc] sm:$0xf]
      %v728 = vld [vmem:[%s3 + $0x200] sm:$0xf]
      %v729 = vld [vmem:[%s3 + $0x204] sm:$0xf]
      %v730 = vld [vmem:[%s3 + $0x208] sm:$0xf]
      %v731 = vld [vmem:[%s3 + $0x20c] sm:$0xf]
      %v732 = vld [vmem:[%s3 + $0x210] sm:$0xf]
      %v733 = vld [vmem:[%s3 + $0x214] sm:$0xf]
      %v734 = vld [vmem:[%s3 + $0x218] sm:$0xf]
      %v735 = vld [vmem:[%s3 + $0x21c] sm:$0xf]
      %v736 = vld [vmem:[%s3 + $0x220] sm:$0xf]
      %v737 = vld [vmem:[%s3 + $0x224] sm:$0xf]
      %v738 = vld [vmem:[%s3 + $0x228] sm:$0xf]
      %v739 = vld [vmem:[%s3 + $0x22c] sm:$0xf]
      %v740 = vld [vmem:[%s3 + $0x230] sm:$0xf]
      %v741 = vld [vmem:[%s3 + $0x234] sm:$0xf]
      %v742 = vld [vmem:[%s3 + $0x238] sm:$0xf]
      %v743 = vld [vmem:[%s3 + $0x23c] sm:$0xf]
      %v744 = vld [vmem:[%s3 + $0x240] sm:$0xf]
      %v745 = vld [vmem:[%s3 + $0x244] sm:$0xf]
      %v746 = vld [vmem:[%s3 + $0x248] sm:$0xf]
      %v747 = vld [vmem:[%s3 + $0x24c] sm:$0xf]
      %v748 = vld [vmem:[%s3 + $0x250] sm:$0xf]
      %v749 = vld [vmem:[%s3 + $0x254] sm:$0xf]
      %v750 = vld [vmem:[%s3 + $0x258] sm:$0xf]
      %v751 = vld [vmem:[%s3 + $0x25c] sm:$0xf]
      %v752 = vld [vmem:[%s3 + $0x260] sm:$0xf]
      %v753 = vld [vmem:[%s3 + $0x264] sm:$0xf]
      %v754 = vld [vmem:[%s3 + $0x268] sm:$0xf]
      %v755 = vld [vmem:[%s3 + $0x26c] sm:$0xf]
      %v756 = vld [vmem:[%s3 + $0x270] sm:$0xf]
      %v757 = vld [vmem:[%s3 + $0x274] sm:$0xf]
      %v758 = vld [vmem:[%s3 + $0x278] sm:$0xf]
      %v759 = vld [vmem:[%s3 + $0x27c] sm:$0xf]
      %v760 = vld [vmem:[%s3 + $0x280] sm:$0xf]
      %v761 = vld [vmem:[%s3 + $0x284] sm:$0xf]
      %v762 = vld [vmem:[%s3 + $0x288] sm:$0xf]
      %v763 = vld [vmem:[%s3 + $0x28c] sm:$0xf]
      %v764 = vld [vmem:[%s3 + $0x290] sm:$0xf]
      %v765 = vld [vmem:[%s3 + $0x294] sm:$0xf]
      %v766 = vld [vmem:[%s3 + $0x298] sm:$0xf]
      %v767 = vld [vmem:[%s3 + $0x29c] sm:$0xf]
      %v768 = vld [vmem:[%s3 + $0x2a0] sm:$0xf]
      %v769 = vld [vmem:[%s3 + $0x2a4] sm:$0xf]
      %v770 = vld [vmem:[%s3 + $0x2a8] sm:$0xf]
      %v771 = vld [vmem:[%s3 + $0x2ac] sm:$0xf]
      %v772 = vld [vmem:[%s3 + $0x2b0] sm:$0xf]
      %v773 = vld [vmem:[%s3 + $0x2b4] sm:$0xf]
      %v774 = vld [vmem:[%s3 + $0x2b8] sm:$0xf]
      %v775 = vld [vmem:[%s3 + $0x2bc] sm:$0xf]
      %v776 = vld [vmem:[%s3 + $0x2c0] sm:$0xf]
      %v777 = vld [vmem:[%s3 + $0x2c4] sm:$0xf]
      %v778 = vld [vmem:[%s3 + $0x2c8] sm:$0xf]
      %v779 = vld [vmem:[%s3 + $0x2cc] sm:$0xf]
      %v780 = vld [vmem:[%s3 + $0x2d0] sm:$0xf]
      %v781 = vld [vmem:[%s3 + $0x2d4] sm:$0xf]
      %v782 = vld [vmem:[%s3 + $0x2d8] sm:$0xf]
      %v783 = vld [vmem:[%s3 + $0x2dc] sm:$0xf]
      %v784 = vld [vmem:[%s3 + $0x2e0] sm:$0xf]
      %v785 = vld [vmem:[%s3 + $0x2e4] sm:$0xf]
      %v786 = vld [vmem:[%s3 + $0x2e8] sm:$0xf]
      %v787 = vld [vmem:[%s3 + $0x2ec] sm:$0xf]
      %v788 = vld [vmem:[%s3 + $0x2f0] sm:$0xf]
      %v789 = vld [vmem:[%s3 + $0x2f4] sm:$0xf]
      %v790 = vld [vmem:[%s3 + $0x2f8] sm:$0xf]
      %v791 = vld [vmem:[%s3 + $0x2fc] sm:$0xf]
      %v792 = vld [vmem:[%s3 + $0x300] sm:$0xf]
      %v793 = vld [vmem:[%s3 + $0x304] sm:$0xf]
      %v794 = vld [vmem:[%s3 + $0x308] sm:$0xf]
      %v795 = vld [vmem:[%s3 + $0x30c] sm:$0xf]
      %v796 = vld [vmem:[%s3 + $0x310] sm:$0xf]
      %v797 = vld [vmem:[%s3 + $0x314] sm:$0xf]
      %v798 = vld [vmem:[%s3 + $0x318] sm:$0xf]
      %v799 = vld [vmem:[%s3 + $0x31c] sm:$0xf]
      %v800 = vld [vmem:[%s3 + $0x320] sm:$0xf]
      %v801 = vld [vmem:[%s3 + $0x324] sm:$0xf]
      %v802 = vld [vmem:[%s3 + $0x328] sm:$0xf]
      %v803 = vld [vmem:[%s3 + $0x32c] sm:$0xf]
      %v804 = vld [vmem:[%s3 + $0x330] sm:$0xf]
      %v805 = vld [vmem:[%s3 + $0x334] sm:$0xf]
      %v806 = vld [vmem:[%s3 + $0x338] sm:$0xf]
      %v807 = vld [vmem:[%s3 + $0x33c] sm:$0xf]
      %v808 = vld [vmem:[%s3 + $0x340] sm:$0xf]
      %v809 = vld [vmem:[%s3 + $0x344] sm:$0xf]
      %v810 = vld [vmem:[%s3 + $0x348] sm:$0xf]
      %v811 = vld [vmem:[%s3 + $0x34c] sm:$0xf]
      %v812 = vld [vmem:[%s3 + $0x350] sm:$0xf]
      %v813 = vld [vmem:[%s3 + $0x354] sm:$0xf]
      %v814 = vld [vmem:[%s3 + $0x358] sm:$0xf]
      %v815 = vld [vmem:[%s3 + $0x35c] sm:$0xf]
      %v816 = vld [vmem:[%s3 + $0x360] sm:$0xf]
      %v817 = vld [vmem:[%s3 + $0x364] sm:$0xf]
      %v818 = vld [vmem:[%s3 + $0x368] sm:$0xf]
      %v819 = vld [vmem:[%s3 + $0x36c] sm:$0xf]
      %v820 = vld [vmem:[%s3 + $0x370] sm:$0xf]
      %v821 = vld [vmem:[%s3 + $0x374] sm:$0xf]
      %v822 = vld [vmem:[%s3 + $0x378] sm:$0xf]
      %v823 = vld [vmem:[%s3 + $0x37c] sm:$0xf]
      %v824 = vld [vmem:[%s3 + $0x380] sm:$0xf]
      %v825 = vld [vmem:[%s3 + $0x384] sm:$0xf]
      %v826 = vld [vmem:[%s3 + $0x388] sm:$0xf]
      %v827 = vld [vmem:[%s3 + $0x38c] sm:$0xf]
      %v828 = vld [vmem:[%s3 + $0x390] sm:$0xf]
      %v829 = vld [vmem:[%s3 + $0x394] sm:$0xf]
      %v830 = vld [vmem:[%s3 + $0x398] sm:$0xf]
      %v831 = vld [vmem:[%s3 + $0x39c] sm:$0xf]
      %v832 = vld [vmem:[%s3 + $0x3a0] sm:$0xf]
      %v833 = vld [vmem:[%s3 + $0x3a4] sm:$0xf]
      %v834 = vld [vmem:[%s3 + $0x3a8] sm:$0xf]
      %v835 = vld [vmem:[%s3 + $0x3ac] sm:$0xf]
      %v836 = vld [vmem:[%s3 + $0x3b0] sm:$0xf]
      %v837 = vld [vmem:[%s3 + $0x3b4] sm:$0xf]
      %v838 = vld [vmem:[%s3 + $0x3b8] sm:$0xf]
      %v839 = vld [vmem:[%s3 + $0x3bc] sm:$0xf]
      %v840 = vld [vmem:[%s3 + $0x3c0] sm:$0xf]
      %v841 = vld [vmem:[%s3 + $0x3c4] sm:$0xf]
      %v842 = vld [vmem:[%s3 + $0x3c8] sm:$0xf]
      %v843 = vld [vmem:[%s3 + $0x3cc] sm:$0xf]
      %v844 = vld [vmem:[%s3 + $0x3d0] sm:$0xf]
      %v845 = vld [vmem:[%s3 + $0x3d4] sm:$0xf]
      %v846 = vld [vmem:[%s3 + $0x3d8] sm:$0xf]
      %v847 = vld [vmem:[%s3 + $0x3dc] sm:$0xf]
      %v848 = vld [vmem:[%s3 + $0x3e0] sm:$0xf]
      %v849 = vld [vmem:[%s3 + $0x3e4] sm:$0xf]
      %v850 = vld [vmem:[%s3 + $0x3e8] sm:$0xf]
      %v851 = vld [vmem:[%s3 + $0x3ec] sm:$0xf]
      %v852 = vld [vmem:[%s3 + $0x3f0] sm:$0xf]
      %v853 = vld [vmem:[%s3 + $0x3f4] sm:$0xf]
      %v854 = vld [vmem:[%s3 + $0x3f8] sm:$0xf]
      %v855 = vld [vmem:[%s3 + $0x3fc] sm:$0xf]
      %v856 = vld [vmem:[%s4] sm:$0x1]
      %v858 = vlaneseq
      %v859 = vshrl.u32 %v858, 7
      %v860 = vsub.s32 0, %v859
      %v861 = vrot.slane %v856, %v860
      %v1119 = vunpack.c.l.b16 %v600
      %v1120 = vunpack.c.l.b16 %v601
      %v1121 = vunpack.c.l.b16 %v602
      %v1122 = vunpack.c.l.b16 %v603
      %v1123 = vunpack.c.l.b16 %v604
      %v1124 = vunpack.c.l.b16 %v605
      %v1125 = vunpack.c.l.b16 %v606
      %v1126 = vunpack.c.l.b16 %v607
      %v1127 = vunpack.c.l.b16 %v608
      %v1128 = vunpack.c.l.b16 %v609
      %v1129 = vunpack.c.l.b16 %v610
      %v1130 = vunpack.c.l.b16 %v611
      %v1131 = vunpack.c.l.b16 %v612
      %v1132 = vunpack.c.l.b16 %v613
      %v1133 = vunpack.c.l.b16 %v614
      %v1134 = vunpack.c.l.b16 %v615
      %v1135 = vunpack.c.l.b16 %v616
      %v1136 = vunpack.c.l.b16 %v617
      %v1137 = vunpack.c.l.b16 %v618
      %v1138 = vunpack.c.l.b16 %v619
      %v1139 = vunpack.c.l.b16 %v620
      %v1140 = vunpack.c.l.b16 %v621
      %v1141 = vunpack.c.l.b16 %v622
      %v1142 = vunpack.c.l.b16 %v623
      %v1143 = vunpack.c.l.b16 %v624
      %v1144 = vunpack.c.l.b16 %v625
      %v1145 = vunpack.c.l.b16 %v626
      %v1146 = vunpack.c.l.b16 %v627
      %v1147 = vunpack.c.l.b16 %v628
      %v1148 = vunpack.c.l.b16 %v629
      %v1149 = vunpack.c.l.b16 %v630
      %v1150 = vunpack.c.l.b16 %v631
      %v1151 = vunpack.c.l.b16 %v632
      %v1152 = vunpack.c.l.b16 %v633
      %v1153 = vunpack.c.l.b16 %v634
      %v1154 = vunpack.c.l.b16 %v635
      %v1155 = vunpack.c.l.b16 %v636
      %v1156 = vunpack.c.l.b16 %v637
      %v1157 = vunpack.c.l.b16 %v638
      %v1158 = vunpack.c.l.b16 %v639
      %v1159 = vunpack.c.l.b16 %v640
      %v1160 = vunpack.c.l.b16 %v641
      %v1161 = vunpack.c.l.b16 %v642
      %v1162 = vunpack.c.l.b16 %v643
      %v1163 = vunpack.c.l.b16 %v644
      %v1164 = vunpack.c.l.b16 %v645
      %v1165 = vunpack.c.l.b16 %v646
      %v1166 = vunpack.c.l.b16 %v647
      %v1167 = vunpack.c.l.b16 %v648
      %v1168 = vunpack.c.l.b16 %v649
      %v1169 = vunpack.c.l.b16 %v650
      %v1170 = vunpack.c.l.b16 %v651
      %v1171 = vunpack.c.l.b16 %v652
      %v1172 = vunpack.c.l.b16 %v653
      %v1173 = vunpack.c.l.b16 %v654
      %v1174 = vunpack.c.l.b16 %v655
      %v1175 = vunpack.c.l.b16 %v656
      %v1176 = vunpack.c.l.b16 %v657
      %v1177 = vunpack.c.l.b16 %v658
      %v1178 = vunpack.c.l.b16 %v659
      %v1179 = vunpack.c.l.b16 %v660
      %v1180 = vunpack.c.l.b16 %v661
      %v1181 = vunpack.c.l.b16 %v662
      %v1182 = vunpack.c.l.b16 %v663
      %v1183 = vunpack.c.l.b16 %v664
      %v1184 = vunpack.c.l.b16 %v665
      %v1185 = vunpack.c.l.b16 %v666
      %v1186 = vunpack.c.l.b16 %v667
      %v1187 = vunpack.c.l.b16 %v668
      %v1188 = vunpack.c.l.b16 %v669
      %v1189 = vunpack.c.l.b16 %v670
      %v1190 = vunpack.c.l.b16 %v671
      %v1191 = vunpack.c.l.b16 %v672
      %v1192 = vunpack.c.l.b16 %v673
      %v1193 = vunpack.c.l.b16 %v674
      %v1194 = vunpack.c.l.b16 %v675
      %v1195 = vunpack.c.l.b16 %v676
      %v1196 = vunpack.c.l.b16 %v677
      %v1197 = vunpack.c.l.b16 %v678
      %v1198 = vunpack.c.l.b16 %v679
      %v1199 = vunpack.c.l.b16 %v680
      %v1200 = vunpack.c.l.b16 %v681
      %v1201 = vunpack.c.l.b16 %v682
      %v1202 = vunpack.c.l.b16 %v683
      %v1203 = vunpack.c.l.b16 %v684
      %v1204 = vunpack.c.l.b16 %v685
      %v1205 = vunpack.c.l.b16 %v686
      %v1206 = vunpack.c.l.b16 %v687
      %v1207 = vunpack.c.l.b16 %v688
      %v1208 = vunpack.c.l.b16 %v689
      %v1209 = vunpack.c.l.b16 %v690
      %v1210 = vunpack.c.l.b16 %v691
      %v1211 = vunpack.c.l.b16 %v692
      %v1212 = vunpack.c.l.b16 %v693
      %v1213 = vunpack.c.l.b16 %v694
      %v1214 = vunpack.c.l.b16 %v695
      %v1215 = vunpack.c.l.b16 %v696
      %v1216 = vunpack.c.l.b16 %v697
      %v1217 = vunpack.c.l.b16 %v698
      %v1218 = vunpack.c.l.b16 %v699
      %v1219 = vunpack.c.l.b16 %v700
      %v1220 = vunpack.c.l.b16 %v701
      %v1221 = vunpack.c.l.b16 %v702
      %v1222 = vunpack.c.l.b16 %v703
      %v1223 = vunpack.c.l.b16 %v704
      %v1224 = vunpack.c.l.b16 %v705
      %v1225 = vunpack.c.l.b16 %v706
      %v1226 = vunpack.c.l.b16 %v707
      %v1227 = vunpack.c.l.b16 %v708
      %v1228 = vunpack.c.l.b16 %v709
      %v1229 = vunpack.c.l.b16 %v710
      %v1230 = vunpack.c.l.b16 %v711
      %v1231 = vunpack.c.l.b16 %v712
      %v1232 = vunpack.c.l.b16 %v713
      %v1233 = vunpack.c.l.b16 %v714
      %v1234 = vunpack.c.l.b16 %v715
      %v1235 = vunpack.c.l.b16 %v716
      %v1236 = vunpack.c.l.b16 %v717
      %v1237 = vunpack.c.l.b16 %v718
      %v1238 = vunpack.c.l.b16 %v719
      %v1239 = vunpack.c.l.b16 %v720
      %v1240 = vunpack.c.l.b16 %v721
      %v1241 = vunpack.c.l.b16 %v722
      %v1242 = vunpack.c.l.b16 %v723
      %v1243 = vunpack.c.l.b16 %v724
      %v1244 = vunpack.c.l.b16 %v725
      %v1245 = vunpack.c.l.b16 %v726
      %v1246 = vunpack.c.l.b16 %v727
      %v1247 = vunpack.c.l.b16 %v728
      %v1248 = vunpack.c.l.b16 %v729
      %v1249 = vunpack.c.l.b16 %v730
      %v1250 = vunpack.c.l.b16 %v731
      %v1251 = vunpack.c.l.b16 %v732
      %v1252 = vunpack.c.l.b16 %v733
      %v1253 = vunpack.c.l.b16 %v734
      %v1254 = vunpack.c.l.b16 %v735
      %v1255 = vunpack.c.l.b16 %v736
      %v1256 = vunpack.c.l.b16 %v737
      %v1257 = vunpack.c.l.b16 %v738
      %v1258 = vunpack.c.l.b16 %v739
      %v1259 = vunpack.c.l.b16 %v740
      %v1260 = vunpack.c.l.b16 %v741
      %v1261 = vunpack.c.l.b16 %v742
      %v1262 = vunpack.c.l.b16 %v743
      %v1263 = vunpack.c.l.b16 %v744
      %v1264 = vunpack.c.l.b16 %v745
      %v1265 = vunpack.c.l.b16 %v746
      %v1266 = vunpack.c.l.b16 %v747
      %v1267 = vunpack.c.l.b16 %v748
      %v1268 = vunpack.c.l.b16 %v749
      %v1269 = vunpack.c.l.b16 %v750
      %v1270 = vunpack.c.l.b16 %v751
      %v1271 = vunpack.c.l.b16 %v752
      %v1272 = vunpack.c.l.b16 %v753
      %v1273 = vunpack.c.l.b16 %v754
      %v1274 = vunpack.c.l.b16 %v755
      %v1275 = vunpack.c.l.b16 %v756
      %v1276 = vunpack.c.l.b16 %v757
      %v1277 = vunpack.c.l.b16 %v758
      %v1278 = vunpack.c.l.b16 %v759
      %v1279 = vunpack.c.l.b16 %v760
      %v1280 = vunpack.c.l.b16 %v761
      %v1281 = vunpack.c.l.b16 %v762
      %v1282 = vunpack.c.l.b16 %v763
      %v1283 = vunpack.c.l.b16 %v764
      %v1284 = vunpack.c.l.b16 %v765
      %v1285 = vunpack.c.l.b16 %v766
      %v1286 = vunpack.c.l.b16 %v767
      %v1287 = vunpack.c.l.b16 %v768
      %v1288 = vunpack.c.l.b16 %v769
      %v1289 = vunpack.c.l.b16 %v770
      %v1290 = vunpack.c.l.b16 %v771
      %v1291 = vunpack.c.l.b16 %v772
      %v1292 = vunpack.c.l.b16 %v773
      %v1293 = vunpack.c.l.b16 %v774
      %v1294 = vunpack.c.l.b16 %v775
      %v1295 = vunpack.c.l.b16 %v776
      %v1296 = vunpack.c.l.b16 %v777
      %v1297 = vunpack.c.l.b16 %v778
      %v1298 = vunpack.c.l.b16 %v779
      %v1299 = vunpack.c.l.b16 %v780
      %v1300 = vunpack.c.l.b16 %v781
      %v1301 = vunpack.c.l.b16 %v782
      %v1302 = vunpack.c.l.b16 %v783
      %v1303 = vunpack.c.l.b16 %v784
      %v1304 = vunpack.c.l.b16 %v785
      %v1305 = vunpack.c.l.b16 %v786
      %v1306 = vunpack.c.l.b16 %v787
      %v1307 = vunpack.c.l.b16 %v788
      %v1308 = vunpack.c.l.b16 %v789
      %v1309 = vunpack.c.l.b16 %v790
      %v1310 = vunpack.c.l.b16 %v791
      %v1311 = vunpack.c.l.b16 %v792
      %v1312 = vunpack.c.l.b16 %v793
      %v1313 = vunpack.c.l.b16 %v794
      %v1314 = vunpack.c.l.b16 %v795
      %v1315 = vunpack.c.l.b16 %v796
      %v1316 = vunpack.c.l.b16 %v797
      %v1317 = vunpack.c.l.b16 %v798
      %v1318 = vunpack.c.l.b16 %v799
      %v1319 = vunpack.c.l.b16 %v800
      %v1320 = vunpack.c.l.b16 %v801
      %v1321 = vunpack.c.l.b16 %v802
      %v1322 = vunpack.c.l.b16 %v803
      %v1323 = vunpack.c.l.b16 %v804
      %v1324 = vunpack.c.l.b16 %v805
      %v1325 = vunpack.c.l.b16 %v806
      %v1326 = vunpack.c.l.b16 %v807
      %v1327 = vunpack.c.l.b16 %v808
      %v1328 = vunpack.c.l.b16 %v809
      %v1329 = vunpack.c.l.b16 %v810
      %v1330 = vunpack.c.l.b16 %v811
      %v1331 = vunpack.c.l.b16 %v812
      %v1332 = vunpack.c.l.b16 %v813
      %v1333 = vunpack.c.l.b16 %v814
      %v1334 = vunpack.c.l.b16 %v815
      %v1335 = vunpack.c.l.b16 %v816
      %v1336 = vunpack.c.l.b16 %v817
      %v1337 = vunpack.c.l.b16 %v818
      %v1338 = vunpack.c.l.b16 %v819
      %v1339 = vunpack.c.l.b16 %v820
      %v1340 = vunpack.c.l.b16 %v821
      %v1341 = vunpack.c.l.b16 %v822
      %v1342 = vunpack.c.l.b16 %v823
      %v1343 = vunpack.c.l.b16 %v824
      %v1344 = vunpack.c.l.b16 %v825
      %v1345 = vunpack.c.l.b16 %v826
      %v1346 = vunpack.c.l.b16 %v827
      %v1347 = vunpack.c.l.b16 %v828
      %v1348 = vunpack.c.l.b16 %v829
      %v1349 = vunpack.c.l.b16 %v830
      %v1350 = vunpack.c.l.b16 %v831
      %v1351 = vunpack.c.l.b16 %v832
      %v1352 = vunpack.c.l.b16 %v833
      %v1353 = vunpack.c.l.b16 %v834
      %v1354 = vunpack.c.l.b16 %v835
      %v1355 = vunpack.c.l.b16 %v836
      %v1356 = vunpack.c.l.b16 %v837
      %v1357 = vunpack.c.l.b16 %v838
      %v1358 = vunpack.c.l.b16 %v839
      %v1359 = vunpack.c.l.b16 %v840
      %v1360 = vunpack.c.l.b16 %v841
      %v1361 = vunpack.c.l.b16 %v842
      %v1362 = vunpack.c.l.b16 %v843
      %v1363 = vunpack.c.l.b16 %v844
      %v1364 = vunpack.c.l.b16 %v845
      %v1365 = vunpack.c.l.b16 %v846
      %v1366 = vunpack.c.l.b16 %v847
      %v1367 = vunpack.c.l.b16 %v848
      %v1368 = vunpack.c.l.b16 %v849
      %v1369 = vunpack.c.l.b16 %v850
      %v1370 = vunpack.c.l.b16 %v851
      %v1371 = vunpack.c.l.b16 %v852
      %v1372 = vunpack.c.l.b16 %v853
      %v1373 = vunpack.c.l.b16 %v854
      %v1374 = vunpack.c.l.b16 %v855
      %v1375 = vpack.c.b16 %v1120, %v1119
      %v1376 = vpack.c.b16 %v1122, %v1121
      %v1377 = vpack.c.b16 %v1124, %v1123
      %v1378 = vpack.c.b16 %v1126, %v1125
      %v1379 = vpack.c.b16 %v1128, %v1127
      %v1380 = vpack.c.b16 %v1130, %v1129
      %v1381 = vpack.c.b16 %v1132, %v1131
      %v1382 = vpack.c.b16 %v1134, %v1133
      %v1383 = vpack.c.b16 %v1136, %v1135
      %v1384 = vpack.c.b16 %v1138, %v1137
      %v1385 = vpack.c.b16 %v1140, %v1139
      %v1386 = vpack.c.b16 %v1142, %v1141
      %v1387 = vpack.c.b16 %v1144, %v1143
      %v1388 = vpack.c.b16 %v1146, %v1145
      %v1389 = vpack.c.b16 %v1148, %v1147
      %v1390 = vpack.c.b16 %v1150, %v1149
      %v1391 = vpack.c.b16 %v1152, %v1151
      %v1392 = vpack.c.b16 %v1154, %v1153
      %v1393 = vpack.c.b16 %v1156, %v1155
      %v1394 = vpack.c.b16 %v1158, %v1157
      %v1395 = vpack.c.b16 %v1160, %v1159
      %v1396 = vpack.c.b16 %v1162, %v1161
      %v1397 = vpack.c.b16 %v1164, %v1163
      %v1398 = vpack.c.b16 %v1166, %v1165
      %v1399 = vpack.c.b16 %v1168, %v1167
      %v1400 = vpack.c.b16 %v1170, %v1169
      %v1401 = vpack.c.b16 %v1172, %v1171
      %v1402 = vpack.c.b16 %v1174, %v1173
      %v1403 = vpack.c.b16 %v1176, %v1175
      %v1404 = vpack.c.b16 %v1178, %v1177
      %v1405 = vpack.c.b16 %v1180, %v1179
      %v1406 = vpack.c.b16 %v1182, %v1181
      %v1407 = vpack.c.b16 %v1184, %v1183
      %v1408 = vpack.c.b16 %v1186, %v1185
      %v1409 = vpack.c.b16 %v1188, %v1187
      %v1410 = vpack.c.b16 %v1190, %v1189
      %v1411 = vpack.c.b16 %v1192, %v1191
      %v1412 = vpack.c.b16 %v1194, %v1193
      %v1413 = vpack.c.b16 %v1196, %v1195
      %v1414 = vpack.c.b16 %v1198, %v1197
      %v1415 = vpack.c.b16 %v1200, %v1199
      %v1416 = vpack.c.b16 %v1202, %v1201
      %v1417 = vpack.c.b16 %v1204, %v1203
      %v1418 = vpack.c.b16 %v1206, %v1205
      %v1419 = vpack.c.b16 %v1208, %v1207
      %v1420 = vpack.c.b16 %v1210, %v1209
      %v1421 = vpack.c.b16 %v1212, %v1211
      %v1422 = vpack.c.b16 %v1214, %v1213
      %v1423 = vpack.c.b16 %v1216, %v1215
      %v1424 = vpack.c.b16 %v1218, %v1217
      %v1425 = vpack.c.b16 %v1220, %v1219
      %v1426 = vpack.c.b16 %v1222, %v1221
      %v1427 = vpack.c.b16 %v1224, %v1223
      %v1428 = vpack.c.b16 %v1226, %v1225
      %v1429 = vpack.c.b16 %v1228, %v1227
      %v1430 = vpack.c.b16 %v1230, %v1229
      %v1431 = vpack.c.b16 %v1232, %v1231
      %v1432 = vpack.c.b16 %v1234, %v1233
      %v1433 = vpack.c.b16 %v1236, %v1235
      %v1434 = vpack.c.b16 %v1238, %v1237
      %v1435 = vpack.c.b16 %v1240, %v1239
      %v1436 = vpack.c.b16 %v1242, %v1241
      %v1437 = vpack.c.b16 %v1244, %v1243
      %v1438 = vpack.c.b16 %v1246, %v1245
      %v1439 = vpack.c.b16 %v1248, %v1247
      %v1440 = vpack.c.b16 %v1250, %v1249
      %v1441 = vpack.c.b16 %v1252, %v1251
      %v1442 = vpack.c.b16 %v1254, %v1253
      %v1443 = vpack.c.b16 %v1256, %v1255
      %v1444 = vpack.c.b16 %v1258, %v1257
      %v1445 = vpack.c.b16 %v1260, %v1259
      %v1446 = vpack.c.b16 %v1262, %v1261
      %v1447 = vpack.c.b16 %v1264, %v1263
      %v1448 = vpack.c.b16 %v1266, %v1265
      %v1449 = vpack.c.b16 %v1268, %v1267
      %v1450 = vpack.c.b16 %v1270, %v1269
      %v1451 = vpack.c.b16 %v1272, %v1271
      %v1452 = vpack.c.b16 %v1274, %v1273
      %v1453 = vpack.c.b16 %v1276, %v1275
      %v1454 = vpack.c.b16 %v1278, %v1277
      %v1455 = vpack.c.b16 %v1280, %v1279
      %v1456 = vpack.c.b16 %v1282, %v1281
      %v1457 = vpack.c.b16 %v1284, %v1283
      %v1458 = vpack.c.b16 %v1286, %v1285
      %v1459 = vpack.c.b16 %v1288, %v1287
      %v1460 = vpack.c.b16 %v1290, %v1289
      %v1461 = vpack.c.b16 %v1292, %v1291
      %v1462 = vpack.c.b16 %v1294, %v1293
      %v1463 = vpack.c.b16 %v1296, %v1295
      %v1464 = vpack.c.b16 %v1298, %v1297
      %v1465 = vpack.c.b16 %v1300, %v1299
      %v1466 = vpack.c.b16 %v1302, %v1301
      %v1467 = vpack.c.b16 %v1304, %v1303
      %v1468 = vpack.c.b16 %v1306, %v1305
      %v1469 = vpack.c.b16 %v1308, %v1307
      %v1470 = vpack.c.b16 %v1310, %v1309
      %v1471 = vpack.c.b16 %v1312, %v1311
      %v1472 = vpack.c.b16 %v1314, %v1313
      %v1473 = vpack.c.b16 %v1316, %v1315
      %v1474 = vpack.c.b16 %v1318, %v1317
      %v1475 = vpack.c.b16 %v1320, %v1319
      %v1476 = vpack.c.b16 %v1322, %v1321
      %v1477 = vpack.c.b16 %v1324, %v1323
      %v1478 = vpack.c.b16 %v1326, %v1325
      %v1479 = vpack.c.b16 %v1328, %v1327
      %v1480 = vpack.c.b16 %v1330, %v1329
      %v1481 = vpack.c.b16 %v1332, %v1331
      %v1482 = vpack.c.b16 %v1334, %v1333
      %v1483 = vpack.c.b16 %v1336, %v1335
      %v1484 = vpack.c.b16 %v1338, %v1337
      %v1485 = vpack.c.b16 %v1340, %v1339
      %v1486 = vpack.c.b16 %v1342, %v1341
      %v1487 = vpack.c.b16 %v1344, %v1343
      %v1488 = vpack.c.b16 %v1346, %v1345
      %v1489 = vpack.c.b16 %v1348, %v1347
      %v1490 = vpack.c.b16 %v1350, %v1349
      %v1491 = vpack.c.b16 %v1352, %v1351
      %v1492 = vpack.c.b16 %v1354, %v1353
      %v1493 = vpack.c.b16 %v1356, %v1355
      %v1494 = vpack.c.b16 %v1358, %v1357
      %v1495 = vpack.c.b16 %v1360, %v1359
      %v1496 = vpack.c.b16 %v1362, %v1361
      %v1497 = vpack.c.b16 %v1364, %v1363
      %v1498 = vpack.c.b16 %v1366, %v1365
      %v1499 = vpack.c.b16 %v1368, %v1367
      %v1500 = vpack.c.b16 %v1370, %v1369
      %v1501 = vpack.c.b16 %v1372, %v1371
      %v1502 = vpack.c.b16 %v1374, %v1373
      %1631 = vmatprep.subr.bf16.mxu0 0
      %1632 = vmatpush1.bf16.msra.mxu0 %v1375
      %1633 = vmatprep.subr.bf16.mxu0 0
      %1634 = vmatpush1.bf16.msra.mxu0 %v1376
      %1635 = vmatprep.subr.bf16.mxu0 0
      %1636 = vmatpush1.bf16.msra.mxu0 %v1377
      %1637 = vmatprep.subr.bf16.mxu0 0
      %1638 = vmatpush1.bf16.msra.mxu0 %v1378
      %1639 = vmatprep.subr.bf16.mxu0 0
      %1640 = vmatpush1.bf16.msra.mxu0 %v1379
      %1641 = vmatprep.subr.bf16.mxu0 0
      %1642 = vmatpush1.bf16.msra.mxu0 %v1380
      %1643 = vmatprep.subr.bf16.mxu0 0
      %1644 = vmatpush1.bf16.msra.mxu0 %v1381
      %1645 = vmatprep.subr.bf16.mxu0 0
      %1646 = vmatpush1.bf16.msra.mxu0 %v1382
      %1647 = vmatprep.subr.bf16.mxu0 0
      %1648 = vmatpush1.bf16.msra.mxu0 %v1383
      %1649 = vmatprep.subr.bf16.mxu0 0
      %1650 = vmatpush1.bf16.msra.mxu0 %v1384
      %1651 = vmatprep.subr.bf16.mxu0 0
      %1652 = vmatpush1.bf16.msra.mxu0 %v1385
      %1653 = vmatprep.subr.bf16.mxu0 0
      %1654 = vmatpush1.bf16.msra.mxu0 %v1386
      %1655 = vmatprep.subr.bf16.mxu0 0
      %1656 = vmatpush1.bf16.msra.mxu0 %v1387
      %1657 = vmatprep.subr.bf16.mxu0 0
      %1658 = vmatpush1.bf16.msra.mxu0 %v1388
      %1659 = vmatprep.subr.bf16.mxu0 0
      %1660 = vmatpush1.bf16.msra.mxu0 %v1389
      %1661 = vmatprep.subr.bf16.mxu0 0
      %1662 = vmatpush1.bf16.msra.mxu0 %v1390
      %1663 = vmatprep.mubr.bf16.mxu0 %v585
      %1664 = vmatmul.mubr.bf16.gmra.mrb[0].mxu0 %v584
      %v1665 = vpop.f32.mrb[0].mxu0
      %v1666 = vadd.f32 %v861, %v1665
      %v1667 = vpop.f32.mrb[0].mxu0
      %v1668 = vpop.f32.mrb[0].mxu0
      %v1669 = vadd.f32 %v861, %v1668
      %v1670 = vpop.f32.mrb[0].mxu0
      %1671 = vdwg.mxu0
      %1672 = vmatprep.subr.bf16.mxu0 0
      %1673 = vmatpush1.bf16.msra.mxu0 %v1391
      %1674 = vmatprep.subr.bf16.mxu0 0
      %1675 = vmatpush1.bf16.msra.mxu0 %v1392
      %1676 = vmatprep.subr.bf16.mxu0 0
      %1677 = vmatpush1.bf16.msra.mxu0 %v1393
      %1678 = vmatprep.subr.bf16.mxu0 0
      %1679 = vmatpush1.bf16.msra.mxu0 %v1394
      %1680 = vmatprep.subr.bf16.mxu0 0
      %1681 = vmatpush1.bf16.msra.mxu0 %v1395
      %1682 = vmatprep.subr.bf16.mxu0 0
      %1683 = vmatpush1.bf16.msra.mxu0 %v1396
      %1684 = vmatprep.subr.bf16.mxu0 0
      %1685 = vmatpush1.bf16.msra.mxu0 %v1397
      %1686 = vmatprep.subr.bf16.mxu0 0
      %1687 = vmatpush1.bf16.msra.mxu0 %v1398
      %1688 = vmatprep.subr.bf16.mxu0 0
      %1689 = vmatpush1.bf16.msra.mxu0 %v1399
      %1690 = vmatprep.subr.bf16.mxu0 0
      %1691 = vmatpush1.bf16.msra.mxu0 %v1400
      %1692 = vmatprep.subr.bf16.mxu0 0
      %1693 = vmatpush1.bf16.msra.mxu0 %v1401
      %1694 = vmatprep.subr.bf16.mxu0 0
      %1695 = vmatpush1.bf16.msra.mxu0 %v1402
      %1696 = vmatprep.subr.bf16.mxu0 0
      %1697 = vmatpush1.bf16.msra.mxu0 %v1403
      %1698 = vmatprep.subr.bf16.mxu0 0
      %1699 = vmatpush1.bf16.msra.mxu0 %v1404
      %1700 = vmatprep.subr.bf16.mxu0 0
      %1701 = vmatpush1.bf16.msra.mxu0 %v1405
      %1702 = vmatprep.subr.bf16.mxu0 0
      %1703 = vmatpush1.bf16.msra.mxu0 %v1406
      %1704 = vmatprep.mubr.bf16.mxu0 %v587
      %1705 = vmatmul.mubr.bf16.gmra.mrb[0].mxu0 %v586
      %v1706 = vpop.f32.mrb[0].mxu0
      %v1707 = vadd.f32 %v1666, %v1706
      %v1708 = vpop.f32.mrb[0].mxu0
      %v1709 = vpop.f32.mrb[0].mxu0
      %v1710 = vadd.f32 %v1669, %v1709
      %v1711 = vpop.f32.mrb[0].mxu0
      %1712 = vdwg.mxu0
      %1713 = vmatprep.subr.bf16.mxu0 0
      %1714 = vmatpush1.bf16.msra.mxu0 %v1407
      %1715 = vmatprep.subr.bf16.mxu0 0
      %1716 = vmatpush1.bf16.msra.mxu0 %v1408
      %1717 = vmatprep.subr.bf16.mxu0 0
      %1718 = vmatpush1.bf16.msra.mxu0 %v1409
      %1719 = vmatprep.subr.bf16.mxu0 0
      %1720 = vmatpush1.bf16.msra.mxu0 %v1410
      %1721 = vmatprep.subr.bf16.mxu0 0
      %1722 = vmatpush1.bf16.msra.mxu0 %v1411
      %1723 = vmatprep.subr.bf16.mxu0 0
      %1724 = vmatpush1.bf16.msra.mxu0 %v1412
      %1725 = vmatprep.subr.bf16.mxu0 0
      %1726 = vmatpush1.bf16.msra.mxu0 %v1413
      %1727 = vmatprep.subr.bf16.mxu0 0
      %1728 = vmatpush1.bf16.msra.mxu0 %v1414
      %1729 = vmatprep.subr.bf16.mxu0 0
      %1730 = vmatpush1.bf16.msra.mxu0 %v1415
      %1731 = vmatprep.subr.bf16.mxu0 0
      %1732 = vmatpush1.bf16.msra.mxu0 %v1416
      %1733 = vmatprep.subr.bf16.mxu0 0
      %1734 = vmatpush1.bf16.msra.mxu0 %v1417
      %1735 = vmatprep.subr.bf16.mxu0 0
      %1736 = vmatpush1.bf16.msra.mxu0 %v1418
      %1737 = vmatprep.subr.bf16.mxu0 0
      %1738 = vmatpush1.bf16.msra.mxu0 %v1419
      %1739 = vmatprep.subr.bf16.mxu0 0
      %1740 = vmatpush1.bf16.msra.mxu0 %v1420
      %1741 = vmatprep.subr.bf16.mxu0 0
      %1742 = vmatpush1.bf16.msra.mxu0 %v1421
      %1743 = vmatprep.subr.bf16.mxu0 0
      %1744 = vmatpush1.bf16.msra.mxu0 %v1422
      %1745 = vmatprep.mubr.bf16.mxu0 %v589
      %1746 = vmatmul.mubr.bf16.gmra.mrb[0].mxu0 %v588
      %v1747 = vpop.f32.mrb[0].mxu0
      %v1748 = vadd.f32 %v1707, %v1747
      %v1749 = vpop.f32.mrb[0].mxu0
      %v1750 = vpop.f32.mrb[0].mxu0
      %v1751 = vadd.f32 %v1710, %v1750
      %v1752 = vpop.f32.mrb[0].mxu0
      %1753 = vdwg.mxu0
      %1754 = vmatprep.subr.bf16.mxu0 0
      %1755 = vmatpush1.bf16.msra.mxu0 %v1423
      %1756 = vmatprep.subr.bf16.mxu0 0
      %1757 = vmatpush1.bf16.msra.mxu0 %v1424
      %1758 = vmatprep.subr.bf16.mxu0 0
      %1759 = vmatpush1.bf16.msra.mxu0 %v1425
      %1760 = vmatprep.subr.bf16.mxu0 0
      %1761 = vmatpush1.bf16.msra.mxu0 %v1426
      %1762 = vmatprep.subr.bf16.mxu0 0
      %1763 = vmatpush1.bf16.msra.mxu0 %v1427
      %1764 = vmatprep.subr.bf16.mxu0 0
      %1765 = vmatpush1.bf16.msra.mxu0 %v1428
      %1766 = vmatprep.subr.bf16.mxu0 0
      %1767 = vmatpush1.bf16.msra.mxu0 %v1429
      %1768 = vmatprep.subr.bf16.mxu0 0
      %1769 = vmatpush1.bf16.msra.mxu0 %v1430
      %1770 = vmatprep.subr.bf16.mxu0 0
      %1771 = vmatpush1.bf16.msra.mxu0 %v1431
      %1772 = vmatprep.subr.bf16.mxu0 0
      %1773 = vmatpush1.bf16.msra.mxu0 %v1432
      %1774 = vmatprep.subr.bf16.mxu0 0
      %1775 = vmatpush1.bf16.msra.mxu0 %v1433
      %1776 = vmatprep.subr.bf16.mxu0 0
      %1777 = vmatpush1.bf16.msra.mxu0 %v1434
      %1778 = vmatprep.subr.bf16.mxu0 0
      %1779 = vmatpush1.bf16.msra.mxu0 %v1435
      %1780 = vmatprep.subr.bf16.mxu0 0
      %1781 = vmatpush1.bf16.msra.mxu0 %v1436
      %1782 = vmatprep.subr.bf16.mxu0 0
      %1783 = vmatpush1.bf16.msra.mxu0 %v1437
      %1784 = vmatprep.subr.bf16.mxu0 0
      %1785 = vmatpush1.bf16.msra.mxu0 %v1438
      %1786 = vmatprep.mubr.bf16.mxu0 %v591
      %1787 = vmatmul.mubr.bf16.gmra.mrb[0].mxu0 %v590
      %v1788 = vpop.f32.mrb[0].mxu0
      %v1789 = vadd.f32 %v1748, %v1788
      %v1790 = vpop.f32.mrb[0].mxu0
      %v1791 = vpop.f32.mrb[0].mxu0
      %v1792 = vadd.f32 %v1751, %v1791
      %v1793 = vpop.f32.mrb[0].mxu0
      %1794 = vdwg.mxu0
      %1795 = vmatprep.subr.bf16.mxu0 0
      %1796 = vmatpush1.bf16.msra.mxu0 %v1439
      %1797 = vmatprep.subr.bf16.mxu0 0
      %1798 = vmatpush1.bf16.msra.mxu0 %v1440
      %1799 = vmatprep.subr.bf16.mxu0 0
      %1800 = vmatpush1.bf16.msra.mxu0 %v1441
      %1801 = vmatprep.subr.bf16.mxu0 0
      %1802 = vmatpush1.bf16.msra.mxu0 %v1442
      %1803 = vmatprep.subr.bf16.mxu0 0
      %1804 = vmatpush1.bf16.msra.mxu0 %v1443
      %1805 = vmatprep.subr.bf16.mxu0 0
      %1806 = vmatpush1.bf16.msra.mxu0 %v1444
      %1807 = vmatprep.subr.bf16.mxu0 0
      %1808 = vmatpush1.bf16.msra.mxu0 %v1445
      %1809 = vmatprep.subr.bf16.mxu0 0
      %1810 = vmatpush1.bf16.msra.mxu0 %v1446
      %1811 = vmatprep.subr.bf16.mxu0 0
      %1812 = vmatpush1.bf16.msra.mxu0 %v1447
      %1813 = vmatprep.subr.bf16.mxu0 0
      %1814 = vmatpush1.bf16.msra.mxu0 %v1448
      %1815 = vmatprep.subr.bf16.mxu0 0
      %1816 = vmatpush1.bf16.msra.mxu0 %v1449
      %1817 = vmatprep.subr.bf16.mxu0 0
      %1818 = vmatpush1.bf16.msra.mxu0 %v1450
      %1819 = vmatprep.subr.bf16.mxu0 0
      %1820 = vmatpush1.bf16.msra.mxu0 %v1451
      %1821 = vmatprep.subr.bf16.mxu0 0
      %1822 = vmatpush1.bf16.msra.mxu0 %v1452
      %1823 = vmatprep.subr.bf16.mxu0 0
      %1824 = vmatpush1.bf16.msra.mxu0 %v1453
      %1825 = vmatprep.subr.bf16.mxu0 0
      %1826 = vmatpush1.bf16.msra.mxu0 %v1454
      %1827 = vmatprep.mubr.bf16.mxu0 %v593
      %1828 = vmatmul.mubr.bf16.gmra.mrb[0].mxu0 %v592
      %v1829 = vpop.f32.mrb[0].mxu0
      %v1830 = vadd.f32 %v1789, %v1829
      %v1831 = vpop.f32.mrb[0].mxu0
      %v1832 = vpop.f32.mrb[0].mxu0
      %v1833 = vadd.f32 %v1792, %v1832
      %v1834 = vpop.f32.mrb[0].mxu0
      %1835 = vdwg.mxu0
      %1836 = vmatprep.subr.bf16.mxu0 0
      %1837 = vmatpush1.bf16.msra.mxu0 %v1455
      %1838 = vmatprep.subr.bf16.mxu0 0
      %1839 = vmatpush1.bf16.msra.mxu0 %v1456
      %1840 = vmatprep.subr.bf16.mxu0 0
      %1841 = vmatpush1.bf16.msra.mxu0 %v1457
      %1842 = vmatprep.subr.bf16.mxu0 0
      %1843 = vmatpush1.bf16.msra.mxu0 %v1458
      %1844 = vmatprep.subr.bf16.mxu0 0
      %1845 = vmatpush1.bf16.msra.mxu0 %v1459
      %1846 = vmatprep.subr.bf16.mxu0 0
      %1847 = vmatpush1.bf16.msra.mxu0 %v1460
      %1848 = vmatprep.subr.bf16.mxu0 0
      %1849 = vmatpush1.bf16.msra.mxu0 %v1461
      %1850 = vmatprep.subr.bf16.mxu0 0
      %1851 = vmatpush1.bf16.msra.mxu0 %v1462
      %1852 = vmatprep.subr.bf16.mxu0 0
      %1853 = vmatpush1.bf16.msra.mxu0 %v1463
      %1854 = vmatprep.subr.bf16.mxu0 0
      %1855 = vmatpush1.bf16.msra.mxu0 %v1464
      %1856 = vmatprep.subr.bf16.mxu0 0
      %1857 = vmatpush1.bf16.msra.mxu0 %v1465
      %1858 = vmatprep.subr.bf16.mxu0 0
      %1859 = vmatpush1.bf16.msra.mxu0 %v1466
      %1860 = vmatprep.subr.bf16.mxu0 0
      %1861 = vmatpush1.bf16.msra.mxu0 %v1467
      %1862 = vmatprep.subr.bf16.mxu0 0
      %1863 = vmatpush1.bf16.msra.mxu0 %v1468
      %1864 = vmatprep.subr.bf16.mxu0 0
      %1865 = vmatpush1.bf16.msra.mxu0 %v1469
      %1866 = vmatprep.subr.bf16.mxu0 0
      %1867 = vmatpush1.bf16.msra.mxu0 %v1470
      %1868 = vmatprep.mubr.bf16.mxu0 %v595
      %1869 = vmatmul.mubr.bf16.gmra.mrb[0].mxu0 %v594
      %v1870 = vpop.f32.mrb[0].mxu0
      %v1871 = vadd.f32 %v1830, %v1870
      %v1872 = vpop.f32.mrb[0].mxu0
      %v1873 = vpop.f32.mrb[0].mxu0
      %v1874 = vadd.f32 %v1833, %v1873
      %v1875 = vpop.f32.mrb[0].mxu0
      %1876 = vdwg.mxu0
      %1877 = vmatprep.subr.bf16.mxu0 0
      %1878 = vmatpush1.bf16.msra.mxu0 %v1471
      %1879 = vmatprep.subr.bf16.mxu0 0
      %1880 = vmatpush1.bf16.msra.mxu0 %v1472
      %1881 = vmatprep.subr.bf16.mxu0 0
      %1882 = vmatpush1.bf16.msra.mxu0 %v1473
      %1883 = vmatprep.subr.bf16.mxu0 0
      %1884 = vmatpush1.bf16.msra.mxu0 %v1474
      %1885 = vmatprep.subr.bf16.mxu0 0
      %1886 = vmatpush1.bf16.msra.mxu0 %v1475
      %1887 = vmatprep.subr.bf16.mxu0 0
      %1888 = vmatpush1.bf16.msra.mxu0 %v1476
      %1889 = vmatprep.subr.bf16.mxu0 0
      %1890 = vmatpush1.bf16.msra.mxu0 %v1477
      %1891 = vmatprep.subr.bf16.mxu0 0
      %1892 = vmatpush1.bf16.msra.mxu0 %v1478
      %1893 = vmatprep.subr.bf16.mxu0 0
      %1894 = vmatpush1.bf16.msra.mxu0 %v1479
      %1895 = vmatprep.subr.bf16.mxu0 0
      %1896 = vmatpush1.bf16.msra.mxu0 %v1480
      %1897 = vmatprep.subr.bf16.mxu0 0
      %1898 = vmatpush1.bf16.msra.mxu0 %v1481
      %1899 = vmatprep.subr.bf16.mxu0 0
      %1900 = vmatpush1.bf16.msra.mxu0 %v1482
      %1901 = vmatprep.subr.bf16.mxu0 0
      %1902 = vmatpush1.bf16.msra.mxu0 %v1483
      %1903 = vmatprep.subr.bf16.mxu0 0
      %1904 = vmatpush1.bf16.msra.mxu0 %v1484
      %1905 = vmatprep.subr.bf16.mxu0 0
      %1906 = vmatpush1.bf16.msra.mxu0 %v1485
      %1907 = vmatprep.subr.bf16.mxu0 0
      %1908 = vmatpush1.bf16.msra.mxu0 %v1486
      %1909 = vmatprep.mubr.bf16.mxu0 %v597
      %1910 = vmatmul.mubr.bf16.gmra.mrb[0].mxu0 %v596
      %v1911 = vpop.f32.mrb[0].mxu0
      %v1912 = vadd.f32 %v1871, %v1911
      %v1913 = vpop.f32.mrb[0].mxu0
      %v1914 = vpop.f32.mrb[0].mxu0
      %v1915 = vadd.f32 %v1874, %v1914
      %v1916 = vpop.f32.mrb[0].mxu0
      %1917 = vdwg.mxu0
      %1918 = vmatprep.subr.bf16.mxu0 0
      %1919 = vmatpush1.bf16.msra.mxu0 %v1487
      %1920 = vmatprep.subr.bf16.mxu0 0
      %1921 = vmatpush1.bf16.msra.mxu0 %v1488
      %1922 = vmatprep.subr.bf16.mxu0 0
      %1923 = vmatpush1.bf16.msra.mxu0 %v1489
      %1924 = vmatprep.subr.bf16.mxu0 0
      %1925 = vmatpush1.bf16.msra.mxu0 %v1490
      %1926 = vmatprep.subr.bf16.mxu0 0
      %1927 = vmatpush1.bf16.msra.mxu0 %v1491
      %1928 = vmatprep.subr.bf16.mxu0 0
      %1929 = vmatpush1.bf16.msra.mxu0 %v1492
      %1930 = vmatprep.subr.bf16.mxu0 0
      %1931 = vmatpush1.bf16.msra.mxu0 %v1493
      %1932 = vmatprep.subr.bf16.mxu0 0
      %1933 = vmatpush1.bf16.msra.mxu0 %v1494
      %1934 = vmatprep.subr.bf16.mxu0 0
      %1935 = vmatpush1.bf16.msra.mxu0 %v1495
      %1936 = vmatprep.subr.bf16.mxu0 0
      %1937 = vmatpush1.bf16.msra.mxu0 %v1496
      %1938 = vmatprep.subr.bf16.mxu0 0
      %1939 = vmatpush1.bf16.msra.mxu0 %v1497
      %1940 = vmatprep.subr.bf16.mxu0 0
      %1941 = vmatpush1.bf16.msra.mxu0 %v1498
      %1942 = vmatprep.subr.bf16.mxu0 0
      %1943 = vmatpush1.bf16.msra.mxu0 %v1499
      %1944 = vmatprep.subr.bf16.mxu0 0
      %1945 = vmatpush1.bf16.msra.mxu0 %v1500
      %1946 = vmatprep.subr.bf16.mxu0 0
      %1947 = vmatpush1.bf16.msra.mxu0 %v1501
      %1948 = vmatprep.subr.bf16.mxu0 0
      %1949 = vmatpush1.bf16.msra.mxu0 %v1502
      %1950 = vmatprep.mubr.bf16.mxu0 %v599
      %1951 = vmatmul.mubr.bf16.gmra.mrb[0].mxu0 %v598
      %v1952 = vpop.f32.mrb[0].mxu0
      %v1953 = vadd.f32 %v1912, %v1952
      %v1954 = vpop.f32.mrb[0].mxu0
      %v1955 = vpop.f32.mrb[0].mxu0
      %v1956 = vadd.f32 %v1915, %v1955
      %v1957 = vpop.f32.mrb[0].mxu0
      %1958 = vdwg.mxu0
      %v1959 = vmax.f32 %v1953, 0.0
      %v1960 = vmax.f32 %v1956, 0.0
      %1961 = vst [vmem:[#allocation4] sm:$0xff] %v1959
      %1962 = vst [vmem:[#allocation4 + $0x8] sm:$0x1] %v1960
      %v1963 = vld [vmem:[#allocation4] sm:$0x1]
      %v1964 = vld [vmem:[#allocation4 + $0x1] sm:$0x1]
      %v1965 = vld [vmem:[#allocation4 + $0x2] sm:$0x1]
      %v1966 = vld [vmem:[#allocation4 + $0x3] sm:$0x1]
      %v1967 = vld [vmem:[#allocation4 + $0x4] sm:$0x1]
      %v1968 = vld [vmem:[#allocation4 + $0x5] sm:$0x1]
      %v1969 = vld [vmem:[#allocation4 + $0x6] sm:$0x1]
      %v1970 = vld [vmem:[#allocation4 + $0x7] sm:$0x1]
      %v1971 = vld [vmem:[#allocation4 + $0x8] sm:$0x1]
      %v1981 = vcombine.low %v1963, %v1964
      %v1982 = vcombine.low %v1965, %v1966
      %v1983 = vcombine.low %v1967, %v1968
      %v1984 = vcombine.low %v1969, %v1970
      %v1986 = vunpack.c.l.s4 1966171168
      %v1987 = vunpack.c.0.s8 %v1986
      %v1988 = vlaneseq
      %v1989 = vshrl.u32 %v1988, 7
      %v1990 = vsub.s32 %v1987, %v1989
      %v1991 = vrot.slane %v1981, %v1990
      %v1993 = vunpack.c.l.s4 1966171168
      %v1994 = vunpack.c.0.s8 %v1993
      %v1995 = vlaneseq
      %v1996 = vshrl.u32 %v1995, 7
      %v1997 = vsub.s32 %v1994, %v1996
      %v1998 = vrot.slane %v1982, %v1997
      %v2000 = vunpack.c.l.s4 1966171168
      %v2001 = vunpack.c.0.s8 %v2000
      %v2002 = vlaneseq
      %v2003 = vshrl.u32 %v2002, 7
      %v2004 = vsub.s32 %v2001, %v2003
      %v2005 = vrot.slane %v1983, %v2004
      %v2007 = vunpack.c.l.s4 1966171168
      %v2008 = vunpack.c.0.s8 %v2007
      %v2009 = vlaneseq
      %v2010 = vshrl.u32 %v2009, 7
      %v2011 = vsub.s32 %v2008, %v2010
      %v2012 = vrot.slane %v1984, %v2011
      %v2013 = vcombine.low %v1991, %v1998
      %v2014 = vcombine.low %v2005, %v2012
      %v2016 = vunpack.c.l.s4 1966171168
      %v2017 = vunpack.c.0.s8 %v2016
      %v2018 = vlaneseq
      %v2019 = vshrl.u32 %v2018, 7
      %v2020 = vsub.s32 %v2017, %v2019
      %v2021 = vrot.slane %v2013, %v2020
      %v2023 = vunpack.c.l.s4 1966171168
      %v2024 = vunpack.c.0.s8 %v2023
      %v2025 = vlaneseq
      %v2026 = vshrl.u32 %v2025, 7
      %v2027 = vsub.s32 %v2024, %v2026
      %v2028 = vrot.slane %v2014, %v2027
      %v2029 = vcombine.low %v2021, %v2028
      %v2031 = vunpack.c.l.s4 1966171168
      %v2032 = vunpack.c.0.s8 %v2031
      %v2033 = vlaneseq
      %v2034 = vshrl.u32 %v2033, 7
      %v2035 = vsub.s32 %v2032, %v2034
      %v2036 = vrot.slane %v1971, %v2035
      %v2038 = vunpack.c.l.s4 1966171168
      %v2039 = vunpack.c.0.s8 %v2038
      %v2040 = vlaneseq
      %v2041 = vshrl.u32 %v2040, 7
      %v2042 = vsub.s32 %v2039, %v2041
      %v2043 = vrot.slane %v2036, %v2042
      %2046 = vst [vmem:[#allocation5] sm:$0xff] %v2029
      %v2047 = vlaneseq
      %vm2048 = vcmp.ge.s32.totalorder %v2047, 0
      %vm2049 = vcmp.lt.s32.totalorder %v2047, 128
      %vm2050 = vmand %vm2048, %vm2049
      %2051 = vst.msk [vmem:[#allocation5 + $0x8] sm:$0x1] %vm2050, %v2043
      %v2052 = vld [vmem:[#allocation5] sm:$0xff]
      %v2053 = vld [vmem:[#allocation5 + $0x8] sm:$0x1]
      %v2056 = vlaneseq
      %v2057 = vshrl.u32 %v2056, 7
      %v2058 = vsub.s32 0, %v2057
      %v2059 = vrot.slane %v2052, %v2058
      %v2060 = vlaneseq
      %v2061 = vshrl.u32 %v2060, 7
      %v2062 = vsub.s32 1, %v2061
      %v2063 = vrot.slane %v2052, %v2062
      %v2064 = vlaneseq
      %v2065 = vshrl.u32 %v2064, 7
      %v2066 = vsub.s32 2, %v2065
      %v2067 = vrot.slane %v2052, %v2066
      %v2068 = vlaneseq
      %v2069 = vshrl.u32 %v2068, 7
      %v2070 = vsub.s32 3, %v2069
      %v2071 = vrot.slane %v2052, %v2070
      %v2072 = vlaneseq
      %v2073 = vshrl.u32 %v2072, 7
      %v2074 = vsub.s32 4, %v2073
      %v2075 = vrot.slane %v2052, %v2074
      %v2076 = vlaneseq
      %v2077 = vshrl.u32 %v2076, 7
      %v2078 = vsub.s32 5, %v2077
      %v2079 = vrot.slane %v2052, %v2078
      %v2080 = vlaneseq
      %v2081 = vshrl.u32 %v2080, 7
      %v2082 = vsub.s32 6, %v2081
      %v2083 = vrot.slane %v2052, %v2082
      %v2084 = vlaneseq
      %v2085 = vshrl.u32 %v2084, 7
      %v2086 = vsub.s32 7, %v2085
      %v2087 = vrot.slane %v2052, %v2086
      %v2088 = vlaneseq
      %v2089 = vshrl.u32 %v2088, 7
      %v2090 = vsub.s32 0, %v2089
      %v2091 = vrot.slane %v2053, %v2090
      %v2101 = vpack.c.bf16 %v2059, %v2059
      %v2102 = vpack.c.bf16 %v2063, %v2063
      %v2103 = vpack.c.bf16 %v2067, %v2067
      %v2104 = vpack.c.bf16 %v2071, %v2071
      %v2105 = vpack.c.bf16 %v2075, %v2075
      %v2106 = vpack.c.bf16 %v2079, %v2079
      %v2107 = vpack.c.bf16 %v2083, %v2083
      %v2108 = vpack.c.bf16 %v2087, %v2087
      %v2109 = vpack.c.bf16 %v2091, %v2091
      %v2110 = vld [vmem:[%s5] sm:$0xf]
      %v2111 = vld [vmem:[%s5 + $0x4] sm:$0xf]
      %v2112 = vld [vmem:[%s5 + $0x8] sm:$0xf]
      %v2113 = vld [vmem:[%s5 + $0xc] sm:$0xf]
      %v2114 = vld [vmem:[%s5 + $0x10] sm:$0xf]
      %v2115 = vld [vmem:[%s5 + $0x14] sm:$0xf]
      %v2116 = vld [vmem:[%s5 + $0x18] sm:$0xf]
      %v2117 = vld [vmem:[%s5 + $0x1c] sm:$0xf]
      %v2118 = vld [vmem:[%s5 + $0x20] sm:$0xf]
      %v2119 = vld [vmem:[%s5 + $0x24] sm:$0xf]
      %v2120 = vld [vmem:[%s5 + $0x28] sm:$0xf]
      %v2121 = vld [vmem:[%s5 + $0x2c] sm:$0xf]
      %v2122 = vld [vmem:[%s5 + $0x30] sm:$0xf]
      %v2123 = vld [vmem:[%s5 + $0x34] sm:$0xf]
      %v2124 = vld [vmem:[%s5 + $0x38] sm:$0xf]
      %v2125 = vld [vmem:[%s5 + $0x3c] sm:$0xf]
      %v2126 = vld [vmem:[%s5 + $0x40] sm:$0xf]
      %v2127 = vld [vmem:[%s5 + $0x44] sm:$0xf]
      %v2128 = vld [vmem:[%s5 + $0x48] sm:$0xf]
      %v2129 = vld [vmem:[%s5 + $0x4c] sm:$0xf]
      %v2130 = vld [vmem:[%s5 + $0x50] sm:$0xf]
      %v2131 = vld [vmem:[%s5 + $0x54] sm:$0xf]
      %v2132 = vld [vmem:[%s5 + $0x58] sm:$0xf]
      %v2133 = vld [vmem:[%s5 + $0x5c] sm:$0xf]
      %v2134 = vld [vmem:[%s5 + $0x60] sm:$0xf]
      %v2135 = vld [vmem:[%s5 + $0x64] sm:$0xf]
      %v2136 = vld [vmem:[%s5 + $0x68] sm:$0xf]
      %v2137 = vld [vmem:[%s5 + $0x6c] sm:$0xf]
      %v2138 = vld [vmem:[%s5 + $0x70] sm:$0xf]
      %v2139 = vld [vmem:[%s5 + $0x74] sm:$0xf]
      %v2140 = vld [vmem:[%s5 + $0x78] sm:$0xf]
      %v2141 = vld [vmem:[%s5 + $0x7c] sm:$0xf]
      %v2142 = vld [vmem:[%s5 + $0x80] sm:$0xf]
      %v2143 = vld [vmem:[%s5 + $0x84] sm:$0xf]
      %v2144 = vld [vmem:[%s5 + $0x88] sm:$0xf]
      %v2145 = vld [vmem:[%s5 + $0x8c] sm:$0xf]
      %v2146 = vld [vmem:[%s5 + $0x90] sm:$0xf]
      %v2147 = vld [vmem:[%s5 + $0x94] sm:$0xf]
      %v2148 = vld [vmem:[%s5 + $0x98] sm:$0xf]
      %v2149 = vld [vmem:[%s5 + $0x9c] sm:$0xf]
      %v2150 = vld [vmem:[%s5 + $0xa0] sm:$0xf]
      %v2151 = vld [vmem:[%s5 + $0xa4] sm:$0xf]
      %v2152 = vld [vmem:[%s5 + $0xa8] sm:$0xf]
      %v2153 = vld [vmem:[%s5 + $0xac] sm:$0xf]
      %v2154 = vld [vmem:[%s5 + $0xb0] sm:$0xf]
      %v2155 = vld [vmem:[%s5 + $0xb4] sm:$0xf]
      %v2156 = vld [vmem:[%s5 + $0xb8] sm:$0xf]
      %v2157 = vld [vmem:[%s5 + $0xbc] sm:$0xf]
      %v2158 = vld [vmem:[%s5 + $0xc0] sm:$0xf]
      %v2159 = vld [vmem:[%s5 + $0xc4] sm:$0xf]
      %v2160 = vld [vmem:[%s5 + $0xc8] sm:$0xf]
      %v2161 = vld [vmem:[%s5 + $0xcc] sm:$0xf]
      %v2162 = vld [vmem:[%s5 + $0xd0] sm:$0xf]
      %v2163 = vld [vmem:[%s5 + $0xd4] sm:$0xf]
      %v2164 = vld [vmem:[%s5 + $0xd8] sm:$0xf]
      %v2165 = vld [vmem:[%s5 + $0xdc] sm:$0xf]
      %v2166 = vld [vmem:[%s5 + $0xe0] sm:$0xf]
      %v2167 = vld [vmem:[%s5 + $0xe4] sm:$0xf]
      %v2168 = vld [vmem:[%s5 + $0xe8] sm:$0xf]
      %v2169 = vld [vmem:[%s5 + $0xec] sm:$0xf]
      %v2170 = vld [vmem:[%s5 + $0xf0] sm:$0xf]
      %v2171 = vld [vmem:[%s5 + $0xf4] sm:$0xf]
      %v2172 = vld [vmem:[%s5 + $0xf8] sm:$0xf]
      %v2173 = vld [vmem:[%s5 + $0xfc] sm:$0xf]
      %v2174 = vld [vmem:[%s5 + $0x100] sm:$0xf]
      %v2175 = vld [vmem:[%s5 + $0x104] sm:$0xf]
      %v2176 = vld [vmem:[%s5 + $0x108] sm:$0xf]
      %v2177 = vld [vmem:[%s5 + $0x10c] sm:$0xf]
      %v2178 = vld [vmem:[%s5 + $0x110] sm:$0xf]
      %v2179 = vld [vmem:[%s5 + $0x114] sm:$0xf]
      %v2180 = vld [vmem:[%s5 + $0x118] sm:$0xf]
      %v2181 = vld [vmem:[%s5 + $0x11c] sm:$0xf]
      %v2182 = vld [vmem:[%s5 + $0x120] sm:$0xf]
      %v2183 = vld [vmem:[%s5 + $0x124] sm:$0xf]
      %v2184 = vld [vmem:[%s5 + $0x128] sm:$0xf]
      %v2185 = vld [vmem:[%s5 + $0x12c] sm:$0xf]
      %v2186 = vld [vmem:[%s5 + $0x130] sm:$0xf]
      %v2187 = vld [vmem:[%s5 + $0x134] sm:$0xf]
      %v2188 = vld [vmem:[%s5 + $0x138] sm:$0xf]
      %v2189 = vld [vmem:[%s5 + $0x13c] sm:$0xf]
      %v2190 = vld [vmem:[%s5 + $0x140] sm:$0xf]
      %v2191 = vld [vmem:[%s5 + $0x144] sm:$0xf]
      %v2192 = vld [vmem:[%s5 + $0x148] sm:$0xf]
      %v2193 = vld [vmem:[%s5 + $0x14c] sm:$0xf]
      %v2194 = vld [vmem:[%s5 + $0x150] sm:$0xf]
      %v2195 = vld [vmem:[%s5 + $0x154] sm:$0xf]
      %v2196 = vld [vmem:[%s5 + $0x158] sm:$0xf]
      %v2197 = vld [vmem:[%s5 + $0x15c] sm:$0xf]
      %v2198 = vld [vmem:[%s5 + $0x160] sm:$0xf]
      %v2199 = vld [vmem:[%s5 + $0x164] sm:$0xf]
      %v2200 = vld [vmem:[%s5 + $0x168] sm:$0xf]
      %v2201 = vld [vmem:[%s5 + $0x16c] sm:$0xf]
      %v2202 = vld [vmem:[%s5 + $0x170] sm:$0xf]
      %v2203 = vld [vmem:[%s5 + $0x174] sm:$0xf]
      %v2204 = vld [vmem:[%s5 + $0x178] sm:$0xf]
      %v2205 = vld [vmem:[%s5 + $0x17c] sm:$0xf]
      %v2206 = vld [vmem:[%s5 + $0x180] sm:$0xf]
      %v2207 = vld [vmem:[%s5 + $0x184] sm:$0xf]
      %v2208 = vld [vmem:[%s5 + $0x188] sm:$0xf]
      %v2209 = vld [vmem:[%s5 + $0x18c] sm:$0xf]
      %v2210 = vld [vmem:[%s5 + $0x190] sm:$0xf]
      %v2211 = vld [vmem:[%s5 + $0x194] sm:$0xf]
      %v2212 = vld [vmem:[%s5 + $0x198] sm:$0xf]
      %v2213 = vld [vmem:[%s5 + $0x19c] sm:$0xf]
      %v2214 = vld [vmem:[%s5 + $0x1a0] sm:$0xf]
      %v2215 = vld [vmem:[%s5 + $0x1a4] sm:$0xf]
      %v2216 = vld [vmem:[%s5 + $0x1a8] sm:$0xf]
      %v2217 = vld [vmem:[%s5 + $0x1ac] sm:$0xf]
      %v2218 = vld [vmem:[%s5 + $0x1b0] sm:$0xf]
      %v2219 = vld [vmem:[%s5 + $0x1b4] sm:$0xf]
      %v2220 = vld [vmem:[%s5 + $0x1b8] sm:$0xf]
      %v2221 = vld [vmem:[%s5 + $0x1bc] sm:$0xf]
      %v2222 = vld [vmem:[%s5 + $0x1c0] sm:$0xf]
      %v2223 = vld [vmem:[%s5 + $0x1c4] sm:$0xf]
      %v2224 = vld [vmem:[%s5 + $0x1c8] sm:$0xf]
      %v2225 = vld [vmem:[%s5 + $0x1cc] sm:$0xf]
      %v2226 = vld [vmem:[%s5 + $0x1d0] sm:$0xf]
      %v2227 = vld [vmem:[%s5 + $0x1d4] sm:$0xf]
      %v2228 = vld [vmem:[%s5 + $0x1d8] sm:$0xf]
      %v2229 = vld [vmem:[%s5 + $0x1dc] sm:$0xf]
      %v2230 = vld [vmem:[%s5 + $0x1e0] sm:$0xf]
      %v2231 = vld [vmem:[%s5 + $0x1e4] sm:$0xf]
      %v2232 = vld [vmem:[%s5 + $0x1e8] sm:$0xf]
      %v2233 = vld [vmem:[%s5 + $0x1ec] sm:$0xf]
      %v2234 = vld [vmem:[%s5 + $0x1f0] sm:$0xf]
      %v2235 = vld [vmem:[%s5 + $0x1f4] sm:$0xf]
      %v2236 = vld [vmem:[%s5 + $0x1f8] sm:$0xf]
      %v2237 = vld [vmem:[%s5 + $0x1fc] sm:$0xf]
      %v2238 = vld [vmem:[%s5 + $0x200] sm:$0xf]
      %v2239 = vld [vmem:[%s5 + $0x204] sm:$0xf]
      %v2240 = vld [vmem:[%s5 + $0x208] sm:$0xf]
      %v2241 = vld [vmem:[%s5 + $0x20c] sm:$0xf]
      %v2242 = vld [vmem:[%s5 + $0x210] sm:$0xf]
      %v2243 = vld [vmem:[%s5 + $0x214] sm:$0xf]
      %v2244 = vld [vmem:[%s5 + $0x218] sm:$0xf]
      %v2245 = vld [vmem:[%s5 + $0x21c] sm:$0xf]
      %v2246 = vld [vmem:[%s5 + $0x220] sm:$0xf]
      %v2247 = vld [vmem:[%s5 + $0x224] sm:$0xf]
      %v2248 = vld [vmem:[%s5 + $0x228] sm:$0xf]
      %v2249 = vld [vmem:[%s5 + $0x22c] sm:$0xf]
      %v2250 = vld [vmem:[%s5 + $0x230] sm:$0xf]
      %v2251 = vld [vmem:[%s5 + $0x234] sm:$0xf]
      %v2252 = vld [vmem:[%s5 + $0x238] sm:$0xf]
      %v2253 = vld [vmem:[%s5 + $0x23c] sm:$0xf]
      %v2254 = vld [vmem:[%s6] sm:$0x1]
      %v2399 = vunpack.c.l.b16 %v2110
      %v2400 = vunpack.c.l.b16 %v2111
      %v2401 = vunpack.c.l.b16 %v2112
      %v2402 = vunpack.c.l.b16 %v2113
      %v2403 = vunpack.c.l.b16 %v2114
      %v2404 = vunpack.c.l.b16 %v2115
      %v2405 = vunpack.c.l.b16 %v2116
      %v2406 = vunpack.c.l.b16 %v2117
      %v2407 = vunpack.c.l.b16 %v2118
      %v2408 = vunpack.c.l.b16 %v2119
      %v2409 = vunpack.c.l.b16 %v2120
      %v2410 = vunpack.c.l.b16 %v2121
      %v2411 = vunpack.c.l.b16 %v2122
      %v2412 = vunpack.c.l.b16 %v2123
      %v2413 = vunpack.c.l.b16 %v2124
      %v2414 = vunpack.c.l.b16 %v2125
      %v2415 = vunpack.c.l.b16 %v2126
      %v2416 = vunpack.c.l.b16 %v2127
      %v2417 = vunpack.c.l.b16 %v2128
      %v2418 = vunpack.c.l.b16 %v2129
      %v2419 = vunpack.c.l.b16 %v2130
      %v2420 = vunpack.c.l.b16 %v2131
      %v2421 = vunpack.c.l.b16 %v2132
      %v2422 = vunpack.c.l.b16 %v2133
      %v2423 = vunpack.c.l.b16 %v2134
      %v2424 = vunpack.c.l.b16 %v2135
      %v2425 = vunpack.c.l.b16 %v2136
      %v2426 = vunpack.c.l.b16 %v2137
      %v2427 = vunpack.c.l.b16 %v2138
      %v2428 = vunpack.c.l.b16 %v2139
      %v2429 = vunpack.c.l.b16 %v2140
      %v2430 = vunpack.c.l.b16 %v2141
      %v2431 = vunpack.c.l.b16 %v2142
      %v2432 = vunpack.c.l.b16 %v2143
      %v2433 = vunpack.c.l.b16 %v2144
      %v2434 = vunpack.c.l.b16 %v2145
      %v2435 = vunpack.c.l.b16 %v2146
      %v2436 = vunpack.c.l.b16 %v2147
      %v2437 = vunpack.c.l.b16 %v2148
      %v2438 = vunpack.c.l.b16 %v2149
      %v2439 = vunpack.c.l.b16 %v2150
      %v2440 = vunpack.c.l.b16 %v2151
      %v2441 = vunpack.c.l.b16 %v2152
      %v2442 = vunpack.c.l.b16 %v2153
      %v2443 = vunpack.c.l.b16 %v2154
      %v2444 = vunpack.c.l.b16 %v2155
      %v2445 = vunpack.c.l.b16 %v2156
      %v2446 = vunpack.c.l.b16 %v2157
      %v2447 = vunpack.c.l.b16 %v2158
      %v2448 = vunpack.c.l.b16 %v2159
      %v2449 = vunpack.c.l.b16 %v2160
      %v2450 = vunpack.c.l.b16 %v2161
      %v2451 = vunpack.c.l.b16 %v2162
      %v2452 = vunpack.c.l.b16 %v2163
      %v2453 = vunpack.c.l.b16 %v2164
      %v2454 = vunpack.c.l.b16 %v2165
      %v2455 = vunpack.c.l.b16 %v2166
      %v2456 = vunpack.c.l.b16 %v2167
      %v2457 = vunpack.c.l.b16 %v2168
      %v2458 = vunpack.c.l.b16 %v2169
      %v2459 = vunpack.c.l.b16 %v2170
      %v2460 = vunpack.c.l.b16 %v2171
      %v2461 = vunpack.c.l.b16 %v2172
      %v2462 = vunpack.c.l.b16 %v2173
      %v2463 = vunpack.c.l.b16 %v2174
      %v2464 = vunpack.c.l.b16 %v2175
      %v2465 = vunpack.c.l.b16 %v2176
      %v2466 = vunpack.c.l.b16 %v2177
      %v2467 = vunpack.c.l.b16 %v2178
      %v2468 = vunpack.c.l.b16 %v2179
      %v2469 = vunpack.c.l.b16 %v2180
      %v2470 = vunpack.c.l.b16 %v2181
      %v2471 = vunpack.c.l.b16 %v2182
      %v2472 = vunpack.c.l.b16 %v2183
      %v2473 = vunpack.c.l.b16 %v2184
      %v2474 = vunpack.c.l.b16 %v2185
      %v2475 = vunpack.c.l.b16 %v2186
      %v2476 = vunpack.c.l.b16 %v2187
      %v2477 = vunpack.c.l.b16 %v2188
      %v2478 = vunpack.c.l.b16 %v2189
      %v2479 = vunpack.c.l.b16 %v2190
      %v2480 = vunpack.c.l.b16 %v2191
      %v2481 = vunpack.c.l.b16 %v2192
      %v2482 = vunpack.c.l.b16 %v2193
      %v2483 = vunpack.c.l.b16 %v2194
      %v2484 = vunpack.c.l.b16 %v2195
      %v2485 = vunpack.c.l.b16 %v2196
      %v2486 = vunpack.c.l.b16 %v2197
      %v2487 = vunpack.c.l.b16 %v2198
      %v2488 = vunpack.c.l.b16 %v2199
      %v2489 = vunpack.c.l.b16 %v2200
      %v2490 = vunpack.c.l.b16 %v2201
      %v2491 = vunpack.c.l.b16 %v2202
      %v2492 = vunpack.c.l.b16 %v2203
      %v2493 = vunpack.c.l.b16 %v2204
      %v2494 = vunpack.c.l.b16 %v2205
      %v2495 = vunpack.c.l.b16 %v2206
      %v2496 = vunpack.c.l.b16 %v2207
      %v2497 = vunpack.c.l.b16 %v2208
      %v2498 = vunpack.c.l.b16 %v2209
      %v2499 = vunpack.c.l.b16 %v2210
      %v2500 = vunpack.c.l.b16 %v2211
      %v2501 = vunpack.c.l.b16 %v2212
      %v2502 = vunpack.c.l.b16 %v2213
      %v2503 = vunpack.c.l.b16 %v2214
      %v2504 = vunpack.c.l.b16 %v2215
      %v2505 = vunpack.c.l.b16 %v2216
      %v2506 = vunpack.c.l.b16 %v2217
      %v2507 = vunpack.c.l.b16 %v2218
      %v2508 = vunpack.c.l.b16 %v2219
      %v2509 = vunpack.c.l.b16 %v2220
      %v2510 = vunpack.c.l.b16 %v2221
      %v2511 = vunpack.c.l.b16 %v2222
      %v2512 = vunpack.c.l.b16 %v2223
      %v2513 = vunpack.c.l.b16 %v2224
      %v2514 = vunpack.c.l.b16 %v2225
      %v2515 = vunpack.c.l.b16 %v2226
      %v2516 = vunpack.c.l.b16 %v2227
      %v2517 = vunpack.c.l.b16 %v2228
      %v2518 = vunpack.c.l.b16 %v2229
      %v2519 = vunpack.c.l.b16 %v2230
      %v2520 = vunpack.c.l.b16 %v2231
      %v2521 = vunpack.c.l.b16 %v2232
      %v2522 = vunpack.c.l.b16 %v2233
      %v2523 = vunpack.c.l.b16 %v2234
      %v2524 = vunpack.c.l.b16 %v2235
      %v2525 = vunpack.c.l.b16 %v2236
      %v2526 = vunpack.c.l.b16 %v2237
      %v2527 = vunpack.c.l.b16 %v2238
      %v2528 = vunpack.c.l.b16 %v2239
      %v2529 = vunpack.c.l.b16 %v2240
      %v2530 = vunpack.c.l.b16 %v2241
      %v2531 = vunpack.c.l.b16 %v2242
      %v2532 = vunpack.c.l.b16 %v2243
      %v2533 = vunpack.c.l.b16 %v2244
      %v2534 = vunpack.c.l.b16 %v2245
      %v2535 = vunpack.c.l.b16 %v2246
      %v2536 = vunpack.c.l.b16 %v2247
      %v2537 = vunpack.c.l.b16 %v2248
      %v2538 = vunpack.c.l.b16 %v2249
      %v2539 = vunpack.c.l.b16 %v2250
      %v2540 = vunpack.c.l.b16 %v2251
      %v2541 = vunpack.c.l.b16 %v2252
      %v2542 = vunpack.c.l.b16 %v2253
      %v2543 = vpack.c.b16 %v2400, %v2399
      %v2544 = vpack.c.b16 %v2402, %v2401
      %v2545 = vpack.c.b16 %v2404, %v2403
      %v2546 = vpack.c.b16 %v2406, %v2405
      %v2547 = vpack.c.b16 %v2408, %v2407
      %v2548 = vpack.c.b16 %v2410, %v2409
      %v2549 = vpack.c.b16 %v2412, %v2411
      %v2550 = vpack.c.b16 %v2414, %v2413
      %v2551 = vpack.c.b16 %v2416, %v2415
      %v2552 = vpack.c.b16 %v2418, %v2417
      %v2553 = vpack.c.b16 %v2420, %v2419
      %v2554 = vpack.c.b16 %v2422, %v2421
      %v2555 = vpack.c.b16 %v2424, %v2423
      %v2556 = vpack.c.b16 %v2426, %v2425
      %v2557 = vpack.c.b16 %v2428, %v2427
      %v2558 = vpack.c.b16 %v2430, %v2429
      %v2559 = vpack.c.b16 %v2432, %v2431
      %v2560 = vpack.c.b16 %v2434, %v2433
      %v2561 = vpack.c.b16 %v2436, %v2435
      %v2562 = vpack.c.b16 %v2438, %v2437
      %v2563 = vpack.c.b16 %v2440, %v2439
      %v2564 = vpack.c.b16 %v2442, %v2441
      %v2565 = vpack.c.b16 %v2444, %v2443
      %v2566 = vpack.c.b16 %v2446, %v2445
      %v2567 = vpack.c.b16 %v2448, %v2447
      %v2568 = vpack.c.b16 %v2450, %v2449
      %v2569 = vpack.c.b16 %v2452, %v2451
      %v2570 = vpack.c.b16 %v2454, %v2453
      %v2571 = vpack.c.b16 %v2456, %v2455
      %v2572 = vpack.c.b16 %v2458, %v2457
      %v2573 = vpack.c.b16 %v2460, %v2459
      %v2574 = vpack.c.b16 %v2462, %v2461
      %v2575 = vpack.c.b16 %v2464, %v2463
      %v2576 = vpack.c.b16 %v2466, %v2465
      %v2577 = vpack.c.b16 %v2468, %v2467
      %v2578 = vpack.c.b16 %v2470, %v2469
      %v2579 = vpack.c.b16 %v2472, %v2471
      %v2580 = vpack.c.b16 %v2474, %v2473
      %v2581 = vpack.c.b16 %v2476, %v2475
      %v2582 = vpack.c.b16 %v2478, %v2477
      %v2583 = vpack.c.b16 %v2480, %v2479
      %v2584 = vpack.c.b16 %v2482, %v2481
      %v2585 = vpack.c.b16 %v2484, %v2483
      %v2586 = vpack.c.b16 %v2486, %v2485
      %v2587 = vpack.c.b16 %v2488, %v2487
      %v2588 = vpack.c.b16 %v2490, %v2489
      %v2589 = vpack.c.b16 %v2492, %v2491
      %v2590 = vpack.c.b16 %v2494, %v2493
      %v2591 = vpack.c.b16 %v2496, %v2495
      %v2592 = vpack.c.b16 %v2498, %v2497
      %v2593 = vpack.c.b16 %v2500, %v2499
      %v2594 = vpack.c.b16 %v2502, %v2501
      %v2595 = vpack.c.b16 %v2504, %v2503
      %v2596 = vpack.c.b16 %v2506, %v2505
      %v2597 = vpack.c.b16 %v2508, %v2507
      %v2598 = vpack.c.b16 %v2510, %v2509
      %v2599 = vpack.c.b16 %v2512, %v2511
      %v2600 = vpack.c.b16 %v2514, %v2513
      %v2601 = vpack.c.b16 %v2516, %v2515
      %v2602 = vpack.c.b16 %v2518, %v2517
      %v2603 = vpack.c.b16 %v2520, %v2519
      %v2604 = vpack.c.b16 %v2522, %v2521
      %v2605 = vpack.c.b16 %v2524, %v2523
      %v2606 = vpack.c.b16 %v2526, %v2525
      %v2607 = vpack.c.b16 %v2528, %v2527
      %v2608 = vpack.c.b16 %v2530, %v2529
      %v2609 = vpack.c.b16 %v2532, %v2531
      %v2610 = vpack.c.b16 %v2534, %v2533
      %v2611 = vpack.c.b16 %v2536, %v2535
      %v2612 = vpack.c.b16 %v2538, %v2537
      %v2613 = vpack.c.b16 %v2540, %v2539
      %v2614 = vpack.c.b16 %v2542, %v2541
      %2687 = vmatprep.subr.bf16.mxu0 0
      %2688 = vmatpush1.bf16.msra.mxu0 %v2543
      %2689 = vmatprep.subr.bf16.mxu0 0
      %2690 = vmatpush1.bf16.msra.mxu0 %v2544
      %2691 = vmatprep.subr.bf16.mxu0 0
      %2692 = vmatpush1.bf16.msra.mxu0 %v2545
      %2693 = vmatprep.subr.bf16.mxu0 0
      %2694 = vmatpush1.bf16.msra.mxu0 %v2546
      %2695 = vmatprep.subr.bf16.mxu0 0
      %2696 = vmatpush1.bf16.msra.mxu0 %v2547
      %2697 = vmatprep.subr.bf16.mxu0 0
      %2698 = vmatpush1.bf16.msra.mxu0 %v2548
      %2699 = vmatprep.subr.bf16.mxu0 0
      %2700 = vmatpush1.bf16.msra.mxu0 %v2549
      %2701 = vmatprep.subr.bf16.mxu0 0
      %2702 = vmatpush1.bf16.msra.mxu0 %v2550
      %2703 = vmatprep.subr.bf16.mxu0 0
      %2704 = vmatpush1.bf16.msra.mxu0 %v2551
      %2705 = vmatprep.subr.bf16.mxu0 0
      %2706 = vmatpush1.bf16.msra.mxu0 %v2552
      %2707 = vmatprep.subr.bf16.mxu0 0
      %2708 = vmatpush1.bf16.msra.mxu0 %v2553
      %2709 = vmatprep.subr.bf16.mxu0 0
      %2710 = vmatpush1.bf16.msra.mxu0 %v2554
      %2711 = vmatprep.subr.bf16.mxu0 0
      %2712 = vmatpush1.bf16.msra.mxu0 %v2555
      %2713 = vmatprep.subr.bf16.mxu0 0
      %2714 = vmatpush1.bf16.msra.mxu0 %v2556
      %2715 = vmatprep.subr.bf16.mxu0 0
      %2716 = vmatpush1.bf16.msra.mxu0 %v2557
      %2717 = vmatprep.subr.bf16.mxu0 0
      %2718 = vmatpush1.bf16.msra.mxu0 %v2558
      %2719 = vmatprep.mubr.bf16.mxu0 %v2102
      %2720 = vmatmul.mubr.bf16.gmra.mrb[0].mxu0 %v2101
      %v2721 = vpop.f32.mrb[0].mxu0
      %v2722 = vadd.f32 %v2254, %v2721
      %v2723 = vpop.f32.mrb[0].mxu0
      %v2724 = vpop.f32.mrb[0].mxu0
      %v2725 = vpop.f32.mrb[0].mxu0
      %2726 = vdwg.mxu0
      %2727 = vmatprep.subr.bf16.mxu0 0
      %2728 = vmatpush1.bf16.msra.mxu0 %v2559
      %2729 = vmatprep.subr.bf16.mxu0 0
      %2730 = vmatpush1.bf16.msra.mxu0 %v2560
      %2731 = vmatprep.subr.bf16.mxu0 0
      %2732 = vmatpush1.bf16.msra.mxu0 %v2561
      %2733 = vmatprep.subr.bf16.mxu0 0
      %2734 = vmatpush1.bf16.msra.mxu0 %v2562
      %2735 = vmatprep.subr.bf16.mxu0 0
      %2736 = vmatpush1.bf16.msra.mxu0 %v2563
      %2737 = vmatprep.subr.bf16.mxu0 0
      %2738 = vmatpush1.bf16.msra.mxu0 %v2564
      %2739 = vmatprep.subr.bf16.mxu0 0
      %2740 = vmatpush1.bf16.msra.mxu0 %v2565
      %2741 = vmatprep.subr.bf16.mxu0 0
      %2742 = vmatpush1.bf16.msra.mxu0 %v2566
      %2743 = vmatprep.subr.bf16.mxu0 0
      %2744 = vmatpush1.bf16.msra.mxu0 %v2567
      %2745 = vmatprep.subr.bf16.mxu0 0
      %2746 = vmatpush1.bf16.msra.mxu0 %v2568
      %2747 = vmatprep.subr.bf16.mxu0 0
      %2748 = vmatpush1.bf16.msra.mxu0 %v2569
      %2749 = vmatprep.subr.bf16.mxu0 0
      %2750 = vmatpush1.bf16.msra.mxu0 %v2570
      %2751 = vmatprep.subr.bf16.mxu0 0
      %2752 = vmatpush1.bf16.msra.mxu0 %v2571
      %2753 = vmatprep.subr.bf16.mxu0 0
      %2754 = vmatpush1.bf16.msra.mxu0 %v2572
      %2755 = vmatprep.subr.bf16.mxu0 0
      %2756 = vmatpush1.bf16.msra.mxu0 %v2573
      %2757 = vmatprep.subr.bf16.mxu0 0
      %2758 = vmatpush1.bf16.msra.mxu0 %v2574
      %2759 = vmatprep.mubr.bf16.mxu0 %v2104
      %2760 = vmatmul.mubr.bf16.gmra.mrb[0].mxu0 %v2103
      %v2761 = vpop.f32.mrb[0].mxu0
      %v2762 = vadd.f32 %v2722, %v2761
      %v2763 = vpop.f32.mrb[0].mxu0
      %v2764 = vpop.f32.mrb[0].mxu0
      %v2765 = vpop.f32.mrb[0].mxu0
      %2766 = vdwg.mxu0
      %2767 = vmatprep.subr.bf16.mxu0 0
      %2768 = vmatpush1.bf16.msra.mxu0 %v2575
      %2769 = vmatprep.subr.bf16.mxu0 0
      %2770 = vmatpush1.bf16.msra.mxu0 %v2576
      %2771 = vmatprep.subr.bf16.mxu0 0
      %2772 = vmatpush1.bf16.msra.mxu0 %v2577
      %2773 = vmatprep.subr.bf16.mxu0 0
      %2774 = vmatpush1.bf16.msra.mxu0 %v2578
      %2775 = vmatprep.subr.bf16.mxu0 0
      %2776 = vmatpush1.bf16.msra.mxu0 %v2579
      %2777 = vmatprep.subr.bf16.mxu0 0
      %2778 = vmatpush1.bf16.msra.mxu0 %v2580
      %2779 = vmatprep.subr.bf16.mxu0 0
      %2780 = vmatpush1.bf16.msra.mxu0 %v2581
      %2781 = vmatprep.subr.bf16.mxu0 0
      %2782 = vmatpush1.bf16.msra.mxu0 %v2582
      %2783 = vmatprep.subr.bf16.mxu0 0
      %2784 = vmatpush1.bf16.msra.mxu0 %v2583
      %2785 = vmatprep.subr.bf16.mxu0 0
      %2786 = vmatpush1.bf16.msra.mxu0 %v2584
      %2787 = vmatprep.subr.bf16.mxu0 0
      %2788 = vmatpush1.bf16.msra.mxu0 %v2585
      %2789 = vmatprep.subr.bf16.mxu0 0
      %2790 = vmatpush1.bf16.msra.mxu0 %v2586
      %2791 = vmatprep.subr.bf16.mxu0 0
      %2792 = vmatpush1.bf16.msra.mxu0 %v2587
      %2793 = vmatprep.subr.bf16.mxu0 0
      %2794 = vmatpush1.bf16.msra.mxu0 %v2588
      %2795 = vmatprep.subr.bf16.mxu0 0
      %2796 = vmatpush1.bf16.msra.mxu0 %v2589
      %2797 = vmatprep.subr.bf16.mxu0 0
      %2798 = vmatpush1.bf16.msra.mxu0 %v2590
      %2799 = vmatprep.mubr.bf16.mxu0 %v2106
      %2800 = vmatmul.mubr.bf16.gmra.mrb[0].mxu0 %v2105
      %v2801 = vpop.f32.mrb[0].mxu0
      %v2802 = vadd.f32 %v2762, %v2801
      %v2803 = vpop.f32.mrb[0].mxu0
      %v2804 = vpop.f32.mrb[0].mxu0
      %v2805 = vpop.f32.mrb[0].mxu0
      %2806 = vdwg.mxu0
      %2807 = vmatprep.subr.bf16.mxu0 0
      %2808 = vmatpush1.bf16.msra.mxu0 %v2591
      %2809 = vmatprep.subr.bf16.mxu0 0
      %2810 = vmatpush1.bf16.msra.mxu0 %v2592
      %2811 = vmatprep.subr.bf16.mxu0 0
      %2812 = vmatpush1.bf16.msra.mxu0 %v2593
      %2813 = vmatprep.subr.bf16.mxu0 0
      %2814 = vmatpush1.bf16.msra.mxu0 %v2594
      %2815 = vmatprep.subr.bf16.mxu0 0
      %2816 = vmatpush1.bf16.msra.mxu0 %v2595
      %2817 = vmatprep.subr.bf16.mxu0 0
      %2818 = vmatpush1.bf16.msra.mxu0 %v2596
      %2819 = vmatprep.subr.bf16.mxu0 0
      %2820 = vmatpush1.bf16.msra.mxu0 %v2597
      %2821 = vmatprep.subr.bf16.mxu0 0
      %2822 = vmatpush1.bf16.msra.mxu0 %v2598
      %2823 = vmatprep.subr.bf16.mxu0 0
      %2824 = vmatpush1.bf16.msra.mxu0 %v2599
      %2825 = vmatprep.subr.bf16.mxu0 0
      %2826 = vmatpush1.bf16.msra.mxu0 %v2600
      %2827 = vmatprep.subr.bf16.mxu0 0
      %2828 = vmatpush1.bf16.msra.mxu0 %v2601
      %2829 = vmatprep.subr.bf16.mxu0 0
      %2830 = vmatpush1.bf16.msra.mxu0 %v2602
      %2831 = vmatprep.subr.bf16.mxu0 0
      %2832 = vmatpush1.bf16.msra.mxu0 %v2603
      %2833 = vmatprep.subr.bf16.mxu0 0
      %2834 = vmatpush1.bf16.msra.mxu0 %v2604
      %2835 = vmatprep.subr.bf16.mxu0 0
      %2836 = vmatpush1.bf16.msra.mxu0 %v2605
      %2837 = vmatprep.subr.bf16.mxu0 0
      %2838 = vmatpush1.bf16.msra.mxu0 %v2606
      %2839 = vmatprep.mubr.bf16.mxu0 %v2108
      %2840 = vmatmul.mubr.bf16.gmra.mrb[0].mxu0 %v2107
      %v2841 = vpop.f32.mrb[0].mxu0
      %v2842 = vadd.f32 %v2802, %v2841
      %v2843 = vpop.f32.mrb[0].mxu0
      %v2844 = vpop.f32.mrb[0].mxu0
      %v2845 = vpop.f32.mrb[0].mxu0
      %2846 = vdwg.mxu0
      %2847 = vmatprep.subr.bf16.mxu0 0
      %2848 = vmatpush1.bf16.msra.mxu0 %v2607
      %2849 = vmatprep.subr.bf16.mxu0 0
      %2850 = vmatpush1.bf16.msra.mxu0 %v2608
      %2851 = vmatprep.subr.bf16.mxu0 0
      %2852 = vmatpush1.bf16.msra.mxu0 %v2609
      %2853 = vmatprep.subr.bf16.mxu0 0
      %2854 = vmatpush1.bf16.msra.mxu0 %v2610
      %2855 = vmatprep.subr.bf16.mxu0 0
      %2856 = vmatpush1.bf16.msra.mxu0 %v2611
      %2857 = vmatprep.subr.bf16.mxu0 0
      %2858 = vmatpush1.bf16.msra.mxu0 %v2612
      %2859 = vmatprep.subr.bf16.mxu0 0
      %2860 = vmatpush1.bf16.msra.mxu0 %v2613
      %2861 = vmatprep.subr.bf16.mxu0 0
      %2862 = vmatpush1.bf16.msra.mxu0 %v2614
      %2863 = vmatprep.subr.bf16.mxu0 0
      %2864 = vmatpush1.bf16.msra.mxu0 0
      %2865 = vmatprep.subr.bf16.mxu0 0
      %2866 = vmatpush1.bf16.msra.mxu0 0
      %2867 = vmatprep.subr.bf16.mxu0 0
      %2868 = vmatpush1.bf16.msra.mxu0 0
      %2869 = vmatprep.subr.bf16.mxu0 0
      %2870 = vmatpush1.bf16.msra.mxu0 0
      %2871 = vmatprep.subr.bf16.mxu0 0
      %2872 = vmatpush1.bf16.msra.mxu0 0
      %2873 = vmatprep.subr.bf16.mxu0 0
      %2874 = vmatpush1.bf16.msra.mxu0 0
      %2875 = vmatprep.subr.bf16.mxu0 0
      %2876 = vmatpush1.bf16.msra.mxu0 0
      %2877 = vmatprep.subr.bf16.mxu0 0
      %2878 = vmatpush1.bf16.msra.mxu0 0
      %2879 = vmatprep.mubr.bf16.mxu0 0
      %2880 = vmatmul.mubr.bf16.gmra.mrb[0].mxu0 %v2109
      %v2881 = vpop.f32.mrb[0].mxu0
      %v2882 = vadd.f32 %v2842, %v2881
      %v2883 = vpop.f32.mrb[0].mxu0
      %v2884 = vpop.f32.mrb[0].mxu0
      %v2885 = vpop.f32.mrb[0].mxu0
      %2886 = vdwg.mxu0
      %v2887 = vmax.f32 %v2882, 0.0
      %s2888 = scalar_lea.vmem [#allocation6], %s41
      %2889 = vst [vmem:[%s2888] sm:$0x1] %v2887
    $region50: #{dqn_forward.1} parent=1 // loop_footer
      %s45 = sadd.s32 1, %s41
    $region51: #{dqn_forward.1} parent=1 // loop_footer_branch
      %40 = sbr.rel target = $region47
    $region52: #{dqn_forward.1} parent=1 // loop_exit
      _
    %v2890 = vld [vmem:[#allocation6] sm:$0x3]
    %v2891 = vpack.c.bf16 %v2890, %v2890
    %v2892 = vld [vmem:[%s7] sm:$0xff]
    %v2893 = vld [vmem:[%s7 + $0x8] sm:$0xff]
    %v2894 = vld [vmem:[%s7 + $0x10] sm:$0xff]
    %v2895 = vld [vmem:[%s7 + $0x18] sm:$0xff]
    %v2896 = vld [vmem:[%s7 + $0x20] sm:$0xff]
    %v2897 = vld [vmem:[%s7 + $0x28] sm:$0xff]
    %v2898 = vld [vmem:[%s7 + $0x30] sm:$0xff]
    %v2899 = vld [vmem:[%s7 + $0x38] sm:$0xff]
    %v2900 = vld [vmem:[%s7 + $0x40] sm:$0xff]
    %v2901 = vld [vmem:[%s7 + $0x48] sm:$0xff]
    %v2902 = vld [vmem:[%s7 + $0x50] sm:$0xff]
    %v2903 = vld [vmem:[%s7 + $0x58] sm:$0xff]
    %v2904 = vld [vmem:[%s7 + $0x60] sm:$0xff]
    %v2905 = vld [vmem:[%s7 + $0x68] sm:$0xff]
    %v2906 = vld [vmem:[%s7 + $0x70] sm:$0xff]
    %v2907 = vld [vmem:[%s7 + $0x78] sm:$0xff]
    %v2908 = vld [vmem:[%s7 + $0x80] sm:$0xff]
    %v2909 = vld [vmem:[%s7 + $0x88] sm:$0xff]
    %v2910 = vld [vmem:[%s7 + $0x90] sm:$0xff]
    %v2911 = vld [vmem:[%s7 + $0x98] sm:$0xff]
    %v2912 = vld [vmem:[%s7 + $0xa0] sm:$0xff]
    %v2913 = vld [vmem:[%s7 + $0xa8] sm:$0xff]
    %v2914 = vld [vmem:[%s7 + $0xb0] sm:$0xff]
    %v2915 = vld [vmem:[%s7 + $0xb8] sm:$0xff]
    %v2916 = vld [vmem:[%s7 + $0xc0] sm:$0xff]
    %v2917 = vld [vmem:[%s7 + $0xc8] sm:$0xff]
    %v2918 = vld [vmem:[%s7 + $0xd0] sm:$0xff]
    %v2919 = vld [vmem:[%s7 + $0xd8] sm:$0xff]
    %v2920 = vld [vmem:[%s7 + $0xe0] sm:$0xff]
    %v2921 = vld [vmem:[%s7 + $0xe8] sm:$0xff]
    %v2922 = vld [vmem:[%s7 + $0xf0] sm:$0xff]
    %v2923 = vld [vmem:[%s7 + $0xf8] sm:$0xff]
    %v2924 = vld [vmem:[%s8] sm:$0xf]
    %v2926 = vlaneseq
    %v2927 = vshrl.u32 %v2926, 7
    %v2928 = vsub.s32 0, %v2927
    %v2929 = vrot.slane %v2924, %v2928
    %v2930 = vlaneseq
    %v2931 = vshrl.u32 %v2930, 7
    %v2932 = vsub.s32 1, %v2931
    %v2933 = vrot.slane %v2924, %v2932
    %v2934 = vlaneseq
    %v2935 = vshrl.u32 %v2934, 7
    %v2936 = vsub.s32 2, %v2935
    %v2937 = vrot.slane %v2924, %v2936
    %v2938 = vlaneseq
    %v2939 = vshrl.u32 %v2938, 7
    %v2940 = vsub.s32 3, %v2939
    %v2941 = vrot.slane %v2924, %v2940
    %v2978 = vunpack.c.l.b16 %v2892
    %v2979 = vunpack.c.h.b16 %v2892
    %v2980 = vunpack.c.l.b16 %v2893
    %v2981 = vunpack.c.h.b16 %v2893
    %v2982 = vunpack.c.l.b16 %v2894
    %v2983 = vunpack.c.h.b16 %v2894
    %v2984 = vunpack.c.l.b16 %v2895
    %v2985 = vunpack.c.h.b16 %v2895
    %v2986 = vunpack.c.l.b16 %v2896
    %v2987 = vunpack.c.h.b16 %v2896
    %v2988 = vunpack.c.l.b16 %v2897
    %v2989 = vunpack.c.h.b16 %v2897
    %v2990 = vunpack.c.l.b16 %v2898
    %v2991 = vunpack.c.h.b16 %v2898
    %v2992 = vunpack.c.l.b16 %v2899
    %v2993 = vunpack.c.h.b16 %v2899
    %v2994 = vunpack.c.l.b16 %v2900
    %v2995 = vunpack.c.h.b16 %v2900
    %v2996 = vunpack.c.l.b16 %v2901
    %v2997 = vunpack.c.h.b16 %v2901
    %v2998 = vunpack.c.l.b16 %v2902
    %v2999 = vunpack.c.h.b16 %v2902
    %v3000 = vunpack.c.l.b16 %v2903
    %v3001 = vunpack.c.h.b16 %v2903
    %v3002 = vunpack.c.l.b16 %v2904
    %v3003 = vunpack.c.h.b16 %v2904
    %v3004 = vunpack.c.l.b16 %v2905
    %v3005 = vunpack.c.h.b16 %v2905
    %v3006 = vunpack.c.l.b16 %v2906
    %v3007 = vunpack.c.h.b16 %v2906
    %v3008 = vunpack.c.l.b16 %v2907
    %v3009 = vunpack.c.h.b16 %v2907
    %v3010 = vunpack.c.l.b16 %v2908
    %v3011 = vunpack.c.h.b16 %v2908
    %v3012 = vunpack.c.l.b16 %v2909
    %v3013 = vunpack.c.h.b16 %v2909
    %v3014 = vunpack.c.l.b16 %v2910
    %v3015 = vunpack.c.h.b16 %v2910
    %v3016 = vunpack.c.l.b16 %v2911
    %v3017 = vunpack.c.h.b16 %v2911
    %v3018 = vunpack.c.l.b16 %v2912
    %v3019 = vunpack.c.h.b16 %v2912
    %v3020 = vunpack.c.l.b16 %v2913
    %v3021 = vunpack.c.h.b16 %v2913
    %v3022 = vunpack.c.l.b16 %v2914
    %v3023 = vunpack.c.h.b16 %v2914
    %v3024 = vunpack.c.l.b16 %v2915
    %v3025 = vunpack.c.h.b16 %v2915
    %v3026 = vunpack.c.l.b16 %v2916
    %v3027 = vunpack.c.h.b16 %v2916
    %v3028 = vunpack.c.l.b16 %v2917
    %v3029 = vunpack.c.h.b16 %v2917
    %v3030 = vunpack.c.l.b16 %v2918
    %v3031 = vunpack.c.h.b16 %v2918
    %v3032 = vunpack.c.l.b16 %v2919
    %v3033 = vunpack.c.h.b16 %v2919
    %v3034 = vunpack.c.l.b16 %v2920
    %v3035 = vunpack.c.h.b16 %v2920
    %v3036 = vunpack.c.l.b16 %v2921
    %v3037 = vunpack.c.h.b16 %v2921
    %v3038 = vunpack.c.l.b16 %v2922
    %v3039 = vunpack.c.h.b16 %v2922
    %v3040 = vunpack.c.l.b16 %v2923
    %v3041 = vunpack.c.h.b16 %v2923
    %v3042 = vpack.c.b16 %v2982, %v2978
    %v3043 = vpack.c.b16 %v2983, %v2979
    %v3044 = vpack.c.b16 %v2984, %v2980
    %v3045 = vpack.c.b16 %v2985, %v2981
    %v3046 = vpack.c.b16 %v2990, %v2986
    %v3047 = vpack.c.b16 %v2991, %v2987
    %v3048 = vpack.c.b16 %v2992, %v2988
    %v3049 = vpack.c.b16 %v2993, %v2989
    %v3050 = vpack.c.b16 %v2998, %v2994
    %v3051 = vpack.c.b16 %v2999, %v2995
    %v3052 = vpack.c.b16 %v3000, %v2996
    %v3053 = vpack.c.b16 %v3001, %v2997
    %v3054 = vpack.c.b16 %v3006, %v3002
    %v3055 = vpack.c.b16 %v3007, %v3003
    %v3056 = vpack.c.b16 %v3008, %v3004
    %v3057 = vpack.c.b16 %v3009, %v3005
    %v3058 = vpack.c.b16 %v3014, %v3010
    %v3059 = vpack.c.b16 %v3015, %v3011
    %v3060 = vpack.c.b16 %v3016, %v3012
    %v3061 = vpack.c.b16 %v3017, %v3013
    %v3062 = vpack.c.b16 %v3022, %v3018
    %v3063 = vpack.c.b16 %v3023, %v3019
    %v3064 = vpack.c.b16 %v3024, %v3020
    %v3065 = vpack.c.b16 %v3025, %v3021
    %v3066 = vpack.c.b16 %v3030, %v3026
    %v3067 = vpack.c.b16 %v3031, %v3027
    %v3068 = vpack.c.b16 %v3032, %v3028
    %v3069 = vpack.c.b16 %v3033, %v3029
    %v3070 = vpack.c.b16 %v3038, %v3034
    %v3071 = vpack.c.b16 %v3039, %v3035
    %v3072 = vpack.c.b16 %v3040, %v3036
    %v3073 = vpack.c.b16 %v3041, %v3037
    %3106 = vmatprep.subr.bf16.mxu0 %v3043
    %3107 = vmatpush1.bf16.msra.mxu0 %v3042
    %3108 = vmatprep.subr.bf16.mxu0 %v3047
    %3109 = vmatpush1.bf16.msra.mxu0 %v3046
    %3110 = vmatprep.subr.bf16.mxu0 %v3051
    %3111 = vmatpush1.bf16.msra.mxu0 %v3050
    %3112 = vmatprep.subr.bf16.mxu0 %v3055
    %3113 = vmatpush1.bf16.msra.mxu0 %v3054
    %3114 = vmatprep.subr.bf16.mxu0 %v3059
    %3115 = vmatpush1.bf16.msra.mxu0 %v3058
    %3116 = vmatprep.subr.bf16.mxu0 %v3063
    %3117 = vmatpush1.bf16.msra.mxu0 %v3062
    %3118 = vmatprep.subr.bf16.mxu0 %v3067
    %3119 = vmatpush1.bf16.msra.mxu0 %v3066
    %3120 = vmatprep.subr.bf16.mxu0 %v3071
    %3121 = vmatpush1.bf16.msra.mxu0 %v3070
    %3122 = vmatprep.subr.bf16.mxu0 0
    %3123 = vmatpush1.bf16.msra.mxu0 0
    %3124 = vmatprep.subr.bf16.mxu0 0
    %3125 = vmatpush1.bf16.msra.mxu0 0
    %3126 = vmatprep.subr.bf16.mxu0 0
    %3127 = vmatpush1.bf16.msra.mxu0 0
    %3128 = vmatprep.subr.bf16.mxu0 0
    %3129 = vmatpush1.bf16.msra.mxu0 0
    %3130 = vmatprep.subr.bf16.mxu0 0
    %3131 = vmatpush1.bf16.msra.mxu0 0
    %3132 = vmatprep.subr.bf16.mxu0 0
    %3133 = vmatpush1.bf16.msra.mxu0 0
    %3134 = vmatprep.subr.bf16.mxu0 0
    %3135 = vmatpush1.bf16.msra.mxu0 0
    %3136 = vmatprep.subr.bf16.mxu0 0
    %3137 = vmatpush1.bf16.msra.mxu0 0
    %3138 = vmatprep.mubr.bf16.mxu0 0
    %3139 = vmatmul.mubr.bf16.gmra.mrb[0].mxu0 %v2891
    %v3140 = vpop.f32.mrb[0].mxu0
    %v3141 = vadd.f32 %v2929, %v3140
    %v3142 = vpop.f32.mrb[0].mxu0
    %v3143 = vadd.f32 %v2933, %v3142
    %v3144 = vpop.f32.mrb[0].mxu0
    %v3145 = vpop.f32.mrb[0].mxu0
    %3146 = vdwg.mxu0
    %3147 = vmatprep.subr.bf16.mxu0 %v3045
    %3148 = vmatpush1.bf16.msra.mxu0 %v3044
    %3149 = vmatprep.subr.bf16.mxu0 %v3049
    %3150 = vmatpush1.bf16.msra.mxu0 %v3048
    %3151 = vmatprep.subr.bf16.mxu0 %v3053
    %3152 = vmatpush1.bf16.msra.mxu0 %v3052
    %3153 = vmatprep.subr.bf16.mxu0 %v3057
    %3154 = vmatpush1.bf16.msra.mxu0 %v3056
    %3155 = vmatprep.subr.bf16.mxu0 %v3061
    %3156 = vmatpush1.bf16.msra.mxu0 %v3060
    %3157 = vmatprep.subr.bf16.mxu0 %v3065
    %3158 = vmatpush1.bf16.msra.mxu0 %v3064
    %3159 = vmatprep.subr.bf16.mxu0 %v3069
    %3160 = vmatpush1.bf16.msra.mxu0 %v3068
    %3161 = vmatprep.subr.bf16.mxu0 %v3073
    %3162 = vmatpush1.bf16.msra.mxu0 %v3072
    %3163 = vmatprep.subr.bf16.mxu0 0
    %3164 = vmatpush1.bf16.msra.mxu0 0
    %3165 = vmatprep.subr.bf16.mxu0 0
    %3166 = vmatpush1.bf16.msra.mxu0 0
    %3167 = vmatprep.subr.bf16.mxu0 0
    %3168 = vmatpush1.bf16.msra.mxu0 0
    %3169 = vmatprep.subr.bf16.mxu0 0
    %3170 = vmatpush1.bf16.msra.mxu0 0
    %3171 = vmatprep.subr.bf16.mxu0 0
    %3172 = vmatpush1.bf16.msra.mxu0 0
    %3173 = vmatprep.subr.bf16.mxu0 0
    %3174 = vmatpush1.bf16.msra.mxu0 0
    %3175 = vmatprep.subr.bf16.mxu0 0
    %3176 = vmatpush1.bf16.msra.mxu0 0
    %3177 = vmatprep.subr.bf16.mxu0 0
    %3178 = vmatpush1.bf16.msra.mxu0 0
    %3179 = vmatprep.mubr.bf16.mxu0 0
    %3180 = vmatmul.mubr.bf16.gmra.mrb[0].mxu0 %v2891
    %v3181 = vpop.f32.mrb[0].mxu0
    %v3182 = vadd.f32 %v2937, %v3181
    %v3183 = vpop.f32.mrb[0].mxu0
    %v3184 = vadd.f32 %v2941, %v3183
    %v3185 = vpop.f32.mrb[0].mxu0
    %v3186 = vpop.f32.mrb[0].mxu0
    %3187 = vdwg.mxu0
    %v3188 = vmax.f32 %v3141, 0.0
    %v3189 = vmax.f32 %v3143, 0.0
    %v3190 = vmax.f32 %v3182, 0.0
    %v3191 = vmax.f32 %v3184, 0.0
    %v3192 = vpack.c.bf16 %v3188, %v3188
    %v3193 = vpack.c.bf16 %v3189, %v3189
    %v3194 = vpack.c.bf16 %v3190, %v3190
    %v3195 = vpack.c.bf16 %v3191, %v3191
    %v3196 = vld [vmem:[%s9] sm:$0xf]
    %v3197 = vld [vmem:[%s9 + $0x4] sm:$0xf]
    %v3198 = vld [vmem:[%s9 + $0x8] sm:$0xf]
    %v3199 = vld [vmem:[%s9 + $0xc] sm:$0xf]
    %v3200 = vld [vmem:[%s9 + $0x10] sm:$0xf]
    %v3201 = vld [vmem:[%s9 + $0x14] sm:$0xf]
    %v3202 = vld [vmem:[%s9 + $0x18] sm:$0xf]
    %v3203 = vld [vmem:[%s9 + $0x1c] sm:$0xf]
    %v3204 = vld [vmem:[%s9 + $0x20] sm:$0xf]
    %v3205 = vld [vmem:[%s9 + $0x24] sm:$0xf]
    %v3206 = vld [vmem:[%s9 + $0x28] sm:$0xf]
    %v3207 = vld [vmem:[%s9 + $0x2c] sm:$0xf]
    %v3208 = vld [vmem:[%s9 + $0x30] sm:$0xf]
    %v3209 = vld [vmem:[%s9 + $0x34] sm:$0xf]
    %v3210 = vld [vmem:[%s9 + $0x38] sm:$0xf]
    %v3211 = vld [vmem:[%s9 + $0x3c] sm:$0xf]
    %v3212 = vld [vmem:[%s9 + $0x40] sm:$0xf]
    %v3213 = vld [vmem:[%s9 + $0x44] sm:$0xf]
    %v3214 = vld [vmem:[%s9 + $0x48] sm:$0xf]
    %v3215 = vld [vmem:[%s9 + $0x4c] sm:$0xf]
    %v3216 = vld [vmem:[%s9 + $0x50] sm:$0xf]
    %v3217 = vld [vmem:[%s9 + $0x54] sm:$0xf]
    %v3218 = vld [vmem:[%s9 + $0x58] sm:$0xf]
    %v3219 = vld [vmem:[%s9 + $0x5c] sm:$0xf]
    %v3220 = vld [vmem:[%s9 + $0x60] sm:$0xf]
    %v3221 = vld [vmem:[%s9 + $0x64] sm:$0xf]
    %v3222 = vld [vmem:[%s9 + $0x68] sm:$0xf]
    %v3223 = vld [vmem:[%s9 + $0x6c] sm:$0xf]
    %v3224 = vld [vmem:[%s9 + $0x70] sm:$0xf]
    %v3225 = vld [vmem:[%s9 + $0x74] sm:$0xf]
    %v3226 = vld [vmem:[%s9 + $0x78] sm:$0xf]
    %v3227 = vld [vmem:[%s9 + $0x7c] sm:$0xf]
    %v3228 = vld [vmem:[%s9 + $0x80] sm:$0xf]
    %v3229 = vld [vmem:[%s9 + $0x84] sm:$0xf]
    %v3230 = vld [vmem:[%s9 + $0x88] sm:$0xf]
    %v3231 = vld [vmem:[%s9 + $0x8c] sm:$0xf]
    %v3232 = vld [vmem:[%s9 + $0x90] sm:$0xf]
    %v3233 = vld [vmem:[%s9 + $0x94] sm:$0xf]
    %v3234 = vld [vmem:[%s9 + $0x98] sm:$0xf]
    %v3235 = vld [vmem:[%s9 + $0x9c] sm:$0xf]
    %v3236 = vld [vmem:[%s9 + $0xa0] sm:$0xf]
    %v3237 = vld [vmem:[%s9 + $0xa4] sm:$0xf]
    %v3238 = vld [vmem:[%s9 + $0xa8] sm:$0xf]
    %v3239 = vld [vmem:[%s9 + $0xac] sm:$0xf]
    %v3240 = vld [vmem:[%s9 + $0xb0] sm:$0xf]
    %v3241 = vld [vmem:[%s9 + $0xb4] sm:$0xf]
    %v3242 = vld [vmem:[%s9 + $0xb8] sm:$0xf]
    %v3243 = vld [vmem:[%s9 + $0xbc] sm:$0xf]
    %v3244 = vld [vmem:[%s9 + $0xc0] sm:$0xf]
    %v3245 = vld [vmem:[%s9 + $0xc4] sm:$0xf]
    %v3246 = vld [vmem:[%s9 + $0xc8] sm:$0xf]
    %v3247 = vld [vmem:[%s9 + $0xcc] sm:$0xf]
    %v3248 = vld [vmem:[%s9 + $0xd0] sm:$0xf]
    %v3249 = vld [vmem:[%s9 + $0xd4] sm:$0xf]
    %v3250 = vld [vmem:[%s9 + $0xd8] sm:$0xf]
    %v3251 = vld [vmem:[%s9 + $0xdc] sm:$0xf]
    %v3252 = vld [vmem:[%s9 + $0xe0] sm:$0xf]
    %v3253 = vld [vmem:[%s9 + $0xe4] sm:$0xf]
    %v3254 = vld [vmem:[%s9 + $0xe8] sm:$0xf]
    %v3255 = vld [vmem:[%s9 + $0xec] sm:$0xf]
    %v3256 = vld [vmem:[%s9 + $0xf0] sm:$0xf]
    %v3257 = vld [vmem:[%s9 + $0xf4] sm:$0xf]
    %v3258 = vld [vmem:[%s9 + $0xf8] sm:$0xf]
    %v3259 = vld [vmem:[%s9 + $0xfc] sm:$0xf]
    %v3260 = vld [vmem:[%s10] sm:$0x1]
    %v3262 = vlaneseq
    %v3263 = vshrl.u32 %v3262, 7
    %v3264 = vsub.s32 0, %v3263
    %v3265 = vrot.slane %v3260, %v3264
    %v3331 = vunpack.c.l.b16 %v3196
    %v3332 = vunpack.c.l.b16 %v3197
    %v3333 = vunpack.c.l.b16 %v3198
    %v3334 = vunpack.c.l.b16 %v3199
    %v3335 = vunpack.c.l.b16 %v3200
    %v3336 = vunpack.c.l.b16 %v3201
    %v3337 = vunpack.c.l.b16 %v3202
    %v3338 = vunpack.c.l.b16 %v3203
    %v3339 = vunpack.c.l.b16 %v3204
    %v3340 = vunpack.c.l.b16 %v3205
    %v3341 = vunpack.c.l.b16 %v3206
    %v3342 = vunpack.c.l.b16 %v3207
    %v3343 = vunpack.c.l.b16 %v3208
    %v3344 = vunpack.c.l.b16 %v3209
    %v3345 = vunpack.c.l.b16 %v3210
    %v3346 = vunpack.c.l.b16 %v3211
    %v3347 = vunpack.c.l.b16 %v3212
    %v3348 = vunpack.c.l.b16 %v3213
    %v3349 = vunpack.c.l.b16 %v3214
    %v3350 = vunpack.c.l.b16 %v3215
    %v3351 = vunpack.c.l.b16 %v3216
    %v3352 = vunpack.c.l.b16 %v3217
    %v3353 = vunpack.c.l.b16 %v3218
    %v3354 = vunpack.c.l.b16 %v3219
    %v3355 = vunpack.c.l.b16 %v3220
    %v3356 = vunpack.c.l.b16 %v3221
    %v3357 = vunpack.c.l.b16 %v3222
    %v3358 = vunpack.c.l.b16 %v3223
    %v3359 = vunpack.c.l.b16 %v3224
    %v3360 = vunpack.c.l.b16 %v3225
    %v3361 = vunpack.c.l.b16 %v3226
    %v3362 = vunpack.c.l.b16 %v3227
    %v3363 = vunpack.c.l.b16 %v3228
    %v3364 = vunpack.c.l.b16 %v3229
    %v3365 = vunpack.c.l.b16 %v3230
    %v3366 = vunpack.c.l.b16 %v3231
    %v3367 = vunpack.c.l.b16 %v3232
    %v3368 = vunpack.c.l.b16 %v3233
    %v3369 = vunpack.c.l.b16 %v3234
    %v3370 = vunpack.c.l.b16 %v3235
    %v3371 = vunpack.c.l.b16 %v3236
    %v3372 = vunpack.c.l.b16 %v3237
    %v3373 = vunpack.c.l.b16 %v3238
    %v3374 = vunpack.c.l.b16 %v3239
    %v3375 = vunpack.c.l.b16 %v3240
    %v3376 = vunpack.c.l.b16 %v3241
    %v3377 = vunpack.c.l.b16 %v3242
    %v3378 = vunpack.c.l.b16 %v3243
    %v3379 = vunpack.c.l.b16 %v3244
    %v3380 = vunpack.c.l.b16 %v3245
    %v3381 = vunpack.c.l.b16 %v3246
    %v3382 = vunpack.c.l.b16 %v3247
    %v3383 = vunpack.c.l.b16 %v3248
    %v3384 = vunpack.c.l.b16 %v3249
    %v3385 = vunpack.c.l.b16 %v3250
    %v3386 = vunpack.c.l.b16 %v3251
    %v3387 = vunpack.c.l.b16 %v3252
    %v3388 = vunpack.c.l.b16 %v3253
    %v3389 = vunpack.c.l.b16 %v3254
    %v3390 = vunpack.c.l.b16 %v3255
    %v3391 = vunpack.c.l.b16 %v3256
    %v3392 = vunpack.c.l.b16 %v3257
    %v3393 = vunpack.c.l.b16 %v3258
    %v3394 = vunpack.c.l.b16 %v3259
    %v3395 = vpack.c.b16 %v3332, %v3331
    %v3396 = vpack.c.b16 %v3334, %v3333
    %v3397 = vpack.c.b16 %v3336, %v3335
    %v3398 = vpack.c.b16 %v3338, %v3337
    %v3399 = vpack.c.b16 %v3340, %v3339
    %v3400 = vpack.c.b16 %v3342, %v3341
    %v3401 = vpack.c.b16 %v3344, %v3343
    %v3402 = vpack.c.b16 %v3346, %v3345
    %v3403 = vpack.c.b16 %v3348, %v3347
    %v3404 = vpack.c.b16 %v3350, %v3349
    %v3405 = vpack.c.b16 %v3352, %v3351
    %v3406 = vpack.c.b16 %v3354, %v3353
    %v3407 = vpack.c.b16 %v3356, %v3355
    %v3408 = vpack.c.b16 %v3358, %v3357
    %v3409 = vpack.c.b16 %v3360, %v3359
    %v3410 = vpack.c.b16 %v3362, %v3361
    %v3411 = vpack.c.b16 %v3364, %v3363
    %v3412 = vpack.c.b16 %v3366, %v3365
    %v3413 = vpack.c.b16 %v3368, %v3367
    %v3414 = vpack.c.b16 %v3370, %v3369
    %v3415 = vpack.c.b16 %v3372, %v3371
    %v3416 = vpack.c.b16 %v3374, %v3373
    %v3417 = vpack.c.b16 %v3376, %v3375
    %v3418 = vpack.c.b16 %v3378, %v3377
    %v3419 = vpack.c.b16 %v3380, %v3379
    %v3420 = vpack.c.b16 %v3382, %v3381
    %v3421 = vpack.c.b16 %v3384, %v3383
    %v3422 = vpack.c.b16 %v3386, %v3385
    %v3423 = vpack.c.b16 %v3388, %v3387
    %v3424 = vpack.c.b16 %v3390, %v3389
    %v3425 = vpack.c.b16 %v3392, %v3391
    %v3426 = vpack.c.b16 %v3394, %v3393
    %3459 = vmatprep.subr.bf16.mxu0 0
    %3460 = vmatpush1.bf16.msra.mxu0 %v3395
    %3461 = vmatprep.subr.bf16.mxu0 0
    %3462 = vmatpush1.bf16.msra.mxu0 %v3396
    %3463 = vmatprep.subr.bf16.mxu0 0
    %3464 = vmatpush1.bf16.msra.mxu0 %v3397
    %3465 = vmatprep.subr.bf16.mxu0 0
    %3466 = vmatpush1.bf16.msra.mxu0 %v3398
    %3467 = vmatprep.subr.bf16.mxu0 0
    %3468 = vmatpush1.bf16.msra.mxu0 %v3399
    %3469 = vmatprep.subr.bf16.mxu0 0
    %3470 = vmatpush1.bf16.msra.mxu0 %v3400
    %3471 = vmatprep.subr.bf16.mxu0 0
    %3472 = vmatpush1.bf16.msra.mxu0 %v3401
    %3473 = vmatprep.subr.bf16.mxu0 0
    %3474 = vmatpush1.bf16.msra.mxu0 %v3402
    %3475 = vmatprep.subr.bf16.mxu0 0
    %3476 = vmatpush1.bf16.msra.mxu0 %v3403
    %3477 = vmatprep.subr.bf16.mxu0 0
    %3478 = vmatpush1.bf16.msra.mxu0 %v3404
    %3479 = vmatprep.subr.bf16.mxu0 0
    %3480 = vmatpush1.bf16.msra.mxu0 %v3405
    %3481 = vmatprep.subr.bf16.mxu0 0
    %3482 = vmatpush1.bf16.msra.mxu0 %v3406
    %3483 = vmatprep.subr.bf16.mxu0 0
    %3484 = vmatpush1.bf16.msra.mxu0 %v3407
    %3485 = vmatprep.subr.bf16.mxu0 0
    %3486 = vmatpush1.bf16.msra.mxu0 %v3408
    %3487 = vmatprep.subr.bf16.mxu0 0
    %3488 = vmatpush1.bf16.msra.mxu0 %v3409
    %3489 = vmatprep.subr.bf16.mxu0 0
    %3490 = vmatpush1.bf16.msra.mxu0 %v3410
    %3491 = vmatprep.mubr.bf16.mxu0 %v3193
    %3492 = vmatmul.mubr.bf16.gmra.mrb[0].mxu0 %v3192
    %v3493 = vpop.f32.mrb[0].mxu0
    %v3494 = vadd.f32 %v3265, %v3493
    %v3495 = vpop.f32.mrb[0].mxu0
    %v3496 = vpop.f32.mrb[0].mxu0
    %v3497 = vpop.f32.mrb[0].mxu0
    %3498 = vdwg.mxu0
    %3499 = vmatprep.subr.bf16.mxu0 0
    %3500 = vmatpush1.bf16.msra.mxu0 %v3411
    %3501 = vmatprep.subr.bf16.mxu0 0
    %3502 = vmatpush1.bf16.msra.mxu0 %v3412
    %3503 = vmatprep.subr.bf16.mxu0 0
    %3504 = vmatpush1.bf16.msra.mxu0 %v3413
    %3505 = vmatprep.subr.bf16.mxu0 0
    %3506 = vmatpush1.bf16.msra.mxu0 %v3414
    %3507 = vmatprep.subr.bf16.mxu0 0
    %3508 = vmatpush1.bf16.msra.mxu0 %v3415
    %3509 = vmatprep.subr.bf16.mxu0 0
    %3510 = vmatpush1.bf16.msra.mxu0 %v3416
    %3511 = vmatprep.subr.bf16.mxu0 0
    %3512 = vmatpush1.bf16.msra.mxu0 %v3417
    %3513 = vmatprep.subr.bf16.mxu0 0
    %3514 = vmatpush1.bf16.msra.mxu0 %v3418
    %3515 = vmatprep.subr.bf16.mxu0 0
    %3516 = vmatpush1.bf16.msra.mxu0 %v3419
    %3517 = vmatprep.subr.bf16.mxu0 0
    %3518 = vmatpush1.bf16.msra.mxu0 %v3420
    %3519 = vmatprep.subr.bf16.mxu0 0
    %3520 = vmatpush1.bf16.msra.mxu0 %v3421
    %3521 = vmatprep.subr.bf16.mxu0 0
    %3522 = vmatpush1.bf16.msra.mxu0 %v3422
    %3523 = vmatprep.subr.bf16.mxu0 0
    %3524 = vmatpush1.bf16.msra.mxu0 %v3423
    %3525 = vmatprep.subr.bf16.mxu0 0
    %3526 = vmatpush1.bf16.msra.mxu0 %v3424
    %3527 = vmatprep.subr.bf16.mxu0 0
    %3528 = vmatpush1.bf16.msra.mxu0 %v3425
    %3529 = vmatprep.subr.bf16.mxu0 0
    %3530 = vmatpush1.bf16.msra.mxu0 %v3426
    %3531 = vmatprep.mubr.bf16.mxu0 %v3195
    %3532 = vmatmul.mubr.bf16.gmra.mrb[0].mxu0 %v3194
    %v3533 = vpop.f32.mrb[0].mxu0
    %v3534 = vadd.f32 %v3494, %v3533
    %v3535 = vpop.f32.mrb[0].mxu0
    %v3536 = vpop.f32.mrb[0].mxu0
    %v3537 = vpop.f32.mrb[0].mxu0
    %3538 = vdwg.mxu0
    %3539 = vst [vmem:[#allocation7] sm:$0x3] %v3534
    // Predicated region
    $region53: #{dqn_forward.1} parent=1 // pred_check
      _
    $region54: #{dqn_forward.1} parent=1 // pred_check_branch
      %3541 = sbr.rel (0) target = $region56
    $region55: #{dqn_forward.1} parent=1 // pred_region
      %s3543 = ssub.s32 32, 32
      %3544 = vsyncadd [#allocation8], %s3543
      %s3546 = sshll.u32 [#allocation7], 4
      %s3547 = int_to_ptr.vmem [resolvable:$true] %s3546
      %3549 = dma.vmem_to_hbm [thread:$0]  %s3547, 32, %s11, [#allocation8]
    $region56: #{dqn_forward.1} parent=1 // pred_fallthru
      _
    // Predicated region
    $region57: #{dqn_forward.1} parent=1 // pred_check
      _
    $region58: #{dqn_forward.1} parent=1 // pred_check_branch
      %3551 = sbr.rel (0) target = $region60
    $region59: #{dqn_forward.1} parent=1 // pred_region
      %3552 = dma.done [#allocation8], 32
    $region60: #{dqn_forward.1} parent=1 // pred_fallthru
      _
    %3553 = vsyncpa [#allocation8], 1

</llo_original>
